<compile_context>
chip_gen: v7x
topology: tpu7x:2x2x1
jax: 0.10.0
libtpu: 0.0.40
codegen_flags: <defaults>
</compile_context>

<pallas_src>
import functools

import jax
import jax.numpy as jnp
from jax.experimental import pallas as pl
from jax.experimental.pallas import tpu as pltpu

_EPS = 1e-5


# ----------------------------------------------------------------------------
# Pallas helpers
# ----------------------------------------------------------------------------

def _cparams():
    # Budgeted against v7x's 64 MiB physical VMEM; also raises the 16/32 MiB
    # scoped defaults on v5e/v6e.  Every grid step is independent, so the
    # spatial axis can shard across v7x's two TensorCores.
    return pltpu.CompilerParams(
        dimension_semantics=("parallel",),
        vmem_limit_bytes=64 * 1024 * 1024,
    )


def _resident(shape):
    """BlockSpec that keeps a small parameter array fully VMEM-resident."""
    nd = len(shape)
    return pl.BlockSpec(shape, lambda *_: (0,) * nd)


def _rows_per_tile(h, w, target=2048):
    """Largest divisor k of h with k*w <= target (>= 1)."""
    k = max(1, min(h, target // max(w, 1)))
    while h % k:
        k -= 1
    return k


# ----------------------------------------------------------------------------
# Pallas kernels
# ----------------------------------------------------------------------------

def _maxout_stats_kernel(x_ref, w_ref, b_ref, m_ref, st_ref, *, cw, pool):
    """1x1-conv maxout (pool groups fused along output lanes) + partial stats."""
    x = x_ref[...].astype(jnp.bfloat16)                       # (TB, Cin)
    y = jnp.dot(x, w_ref[...], preferred_element_type=jnp.float32) + b_ref[...]
    m = y[:, :cw]
    for p in range(1, pool):                                  # maxout over pool
        m = jnp.maximum(m, y[:, p * cw:(p + 1) * cw])
    m_ref[...] = m
    st_ref[...] = jnp.concatenate(
        [jnp.sum(m, axis=0, keepdims=True),
         jnp.sum(m * m, axis=0, keepdims=True)], axis=0)[None]


def _conv_maxout_stats_kernel(x0, x1, x2, x3, x4, w_ref, b_ref, m_ref, st_ref,
                              *, wpix, cw, pool):
    """Fused 5x5 conv (in-VMEM im2col) + maxout(pool=4) + partial stats.

    x0..x4 are 5 consecutive rows of the zero-padded (H+4, W+4, C) feature map
    (one per dy); the 5 dx taps are static column slices of each row.
    """
    rows = (x0, x1, x2, x3, x4)
    taps = []
    for dy in range(5):
        for dx in range(5):
            taps.append(rows[dy][0, dx:dx + wpix, :])          # (W, C)
    xcol = jnp.concatenate(taps, axis=-1).astype(jnp.bfloat16)  # (W, 25*C)
    y = jnp.dot(xcol, w_ref[...], preferred_element_type=jnp.float32) + b_ref[...]
    m = y[:, :cw]
    for p in range(1, pool):
        m = jnp.maximum(m, y[:, p * cw:(p + 1) * cw])
    m_ref[...] = m
    st_ref[...] = jnp.concatenate(
        [jnp.sum(m, axis=0, keepdims=True),
         jnp.sum(m * m, axis=0, keepdims=True)], axis=0)[None]


def _apply_norm_kernel(m_ref, st_ref, g_ref, be_ref, o_ref):
    """InstanceNorm affine using precomputed global stats."""
    xn = (m_ref[...] - st_ref[0:1, :]) * st_ref[1:2, :]
    o_ref[...] = xn * g_ref[...] + be_ref[...]


def _apply_scse_res_kernel(m_ref, res_ref, st_ref, g_ref, be_ref,
                           cs_ref, sw_ref, sb_ref, o_ref):
    """InstanceNorm affine + cSE (precomputed channel gate) + sSE + residual."""
    xn = (m_ref[...] - st_ref[0:1, :]) * st_ref[1:2, :]
    xn = xn * g_ref[...] + be_ref[...]
    # sSE: 1x1 conv C->1 as a VPU lane reduction (avoids an N=1 MXU matmul)
    t = jnp.sum(xn * sw_ref[...], axis=-1, keepdims=True) + sb_ref[...]
    o_ref[...] = xn * (cs_ref[...] + jax.nn.sigmoid(t)) + res_ref[...]


def _apply_scse_res_head_kernel(m_ref, res_ref, st_ref, g_ref, be_ref,
                                cs_ref, sw_ref, sb_ref, hw_ref, hb_ref, o_ref):
    """Last block's apply pass with the 1x1 head conv fused in."""
    xn = (m_ref[...] - st_ref[0:1, :]) * st_ref[1:2, :]
    xn = xn * g_ref[...] + be_ref[...]
    t = jnp.sum(xn * sw_ref[...], axis=-1, keepdims=True) + sb_ref[...]
    out = xn * (cs_ref[...] + jax.nn.sigmoid(t)) + res_ref[...]
    o_ref[...] = (jnp.dot(out, hw_ref[...], preferred_element_type=jnp.float32)
                  + hb_ref[...])


# ----------------------------------------------------------------------------
# pallas_call wrappers
# ----------------------------------------------------------------------------

def maxout_stats(x, w, b, *, cw, pool, tb):
    p_rows, cin = x.shape
    nt = p_rows // tb
    kern = functools.partial(_maxout_stats_kernel, cw=cw, pool=pool)
    return pl.pallas_call(
        kern,
        grid=(nt,),
        in_specs=[pl.BlockSpec((tb, cin), lambda i: (i, 0)),
                  _resident(w.shape), _resident(b.shape)],
        out_specs=[pl.BlockSpec((tb, cw), lambda i: (i, 0)),
                   pl.BlockSpec((1, 2, cw), lambda i: (i, 0, 0))],
        out_shape=[jax.ShapeDtypeStruct((p_rows, cw), jnp.float32),
                   jax.ShapeDtypeStruct((nt, 2, cw), jnp.float32)],
        compiler_params=_cparams(),
    )(x, w, b)


def conv_maxout_stats(xp3, w, b, *, height, wpix, cw):
    wp = wpix + 4
    kern = functools.partial(_conv_maxout_stats_kernel, wpix=wpix, cw=cw, pool=4)
    in_specs = [pl.BlockSpec((1, wp, cw), (lambda r, d=dy: (r + d, 0, 0)))
                for dy in range(5)]
    in_specs += [_resident(w.shape), _resident(b.shape)]
    return pl.pallas_call(
        kern,
        grid=(height,),
        in_specs=in_specs,
        out_specs=[pl.BlockSpec((wpix, cw), lambda r: (r, 0)),
                   pl.BlockSpec((1, 2, cw), lambda r: (r, 0, 0))],
        out_shape=[jax.ShapeDtypeStruct((height * wpix, cw), jnp.float32),
                   jax.ShapeDtypeStruct((height, 2, cw), jnp.float32)],
        compiler_params=_cparams(),
    )(xp3, xp3, xp3, xp3, xp3, w, b)


def apply_norm(m, stat, gamma, beta, *, tb):
    p_rows, cw = m.shape
    return pl.pallas_call(
        _apply_norm_kernel,
        grid=(p_rows // tb,),
        in_specs=[pl.BlockSpec((tb, cw), lambda i: (i, 0)),
                  _resident(stat.shape), _resident(gamma.shape),
                  _resident(beta.shape)],
        out_specs=pl.BlockSpec((tb, cw), lambda i: (i, 0)),
        out_shape=jax.ShapeDtypeStruct((p_rows, cw), jnp.float32),
        compiler_params=_cparams(),
    )(m, stat, gamma, beta)


def apply_block(m, res, stat, gamma, beta, cs, sw, sb, *, tb):
    p_rows, cw = m.shape
    blk = pl.BlockSpec((tb, cw), lambda i: (i, 0))
    return pl.pallas_call(
        _apply_scse_res_kernel,
        grid=(p_rows // tb,),
        in_specs=[blk, blk] + [_resident(a.shape)
                               for a in (stat, gamma, beta, cs, sw, sb)],
        out_specs=pl.BlockSpec((tb, cw), lambda i: (i, 0)),
        out_shape=jax.ShapeDtypeStruct((p_rows, cw), jnp.float32),
        compiler_params=_cparams(),
    )(m, res, stat, gamma, beta, cs, sw, sb)


def apply_block_head(m, res, stat, gamma, beta, cs, sw, sb, hw, hb, *, tb):
    p_rows, cw = m.shape
    nout = hw.shape[-1]
    blk = pl.BlockSpec((tb, cw), lambda i: (i, 0))
    return pl.pallas_call(
        _apply_scse_res_head_kernel,
        grid=(p_rows // tb,),
        in_specs=[blk, blk] + [_resident(a.shape)
                               for a in (stat, gamma, beta, cs, sw, sb, hw, hb)],
        out_specs=pl.BlockSpec((tb, nout), lambda i: (i, 0)),
        out_shape=jax.ShapeDtypeStruct((p_rows, nout), jnp.float32),
        compiler_params=_cparams(),
    )(m, res, stat, gamma, beta, cs, sw, sb, hw, hb)


def _finalize_stats(st, count):
    """Per-tile partial (sum, sumsq) -> (mean, rsqrt(var + eps)) as (2, C)."""
    s = jnp.sum(st, axis=0)                                   # (2, C)
    mean = s[0] / count
    var = jnp.maximum(s[1] / count - mean * mean, 0.0)
    return jnp.stack([mean, jax.lax.rsqrt(var + _EPS)], axis=0)


# ----------------------------------------------------------------------------
# Plain-JAX glue: embedding, GRUs (sequential recurrence), layout.
# ----------------------------------------------------------------------------

def _gru_layer(xs, Wih, Whh, bih, bhh):
    """PyTorch-semantics GRU layer, xs: (T, B, in) -> (T, B, H), h0 = 0.

    The input projection is hoisted out of the scan as one batched matmul.
    """
    T, B, _ = xs.shape
    H = Whh.shape[1]
    gi_all = jnp.einsum('tbi,hi->tbh', xs, Wih) + bih          # (T, B, 3H)

    def step(h, gi_t):
        gh = h @ Whh.T + bhh
        i_r, i_z, i_n = jnp.split(gi_t, 3, axis=-1)
        h_r, h_z, h_n = jnp.split(gh, 3, axis=-1)
        r = jax.nn.sigmoid(i_r + h_r)
        z = jax.nn.sigmoid(i_z + h_z)
        n = jnp.tanh(i_n + r * h_n)
        h_new = (1.0 - z) * n + z * h
        return h_new, h_new

    h0 = jnp.zeros((B, H), jnp.float32)
    _, ys = jax.lax.scan(step, h0, gi_all)
    return ys


def run_gru(xs, layers):
    out = xs
    for (Wih, Whh, bih, bhh) in layers:
        out = _gru_layer(out, Wih, Whh, bih, bhh)
    return out


def run_bigru(xs, layers):
    # TODO(synk): GRU inter-layer dropout(0.1) is eval-mode identity.
    out = xs
    for (fwd, bwd) in layers:
        yf = _gru_layer(out, *fwd)
        yb = _gru_layer(out[::-1], *bwd)[::-1]
        out = jnp.concatenate([yf, yb], axis=-1)
    return out


# ----------------------------------------------------------------------------
# Parameters (deterministic, in-script; shapes match the PyTorch __init__)
# ----------------------------------------------------------------------------

def init_params(key, width, cwidth):
    keys = iter(jax.random.split(key, 512))

    def unif(shape, scale):
        return jax.random.uniform(next(keys), shape, jnp.float32, -scale, scale)

    params = {}

    # vgru: GRU(22, width, num_layers=2)
    vgru, in_dim = [], 22
    for _ in range(2):
        s = 1.0 / (width ** 0.5)
        vgru.append((unif((3 * width, in_dim), s), unif((3 * width, width), s),
                     unif((3 * width,), s), unif((3 * width,), s)))
        in_dim = width
    params['vgru'] = vgru

    # hgru: GRU(width, width//2, num_layers=2, bidirectional=True)
    hh, hgru, in_dim = width // 2, [], width
    for _ in range(2):
        s = 1.0 / (hh ** 0.5)
        fwd = (unif((3 * hh, in_dim), s), unif((3 * hh, hh), s),
               unif((3 * hh,), s), unif((3 * hh,), s))
        bwd = (unif((3 * hh, in_dim), s), unif((3 * hh, hh), s),
               unif((3 * hh,), s), unif((3 * hh,), s))
        hgru.append((fwd, bwd))
        in_dim = 2 * hh
    params['hgru'] = hgru

    def fuse_pool_cols(wt, bias, cout, pool):
        # PyTorch Maxout2d: conv output channel o = j*pool + p is pooled into
        # output channel j.  Fused weight column layout = [pool block p][j] so
        # the kernel maxes 4 static lane slices of one lane-dense matmul.
        cin = wt.shape[0]
        wf = wt.reshape(cin, cout, pool).transpose(0, 2, 1).reshape(cin, pool * cout)
        bf = bias.reshape(cout, pool).T.reshape(1, pool * cout)
        return wf.astype(jnp.bfloat16), bf.astype(jnp.float32)

    # first Maxout2d: Conv2d(442+width -> cwidth*3, k=1), pool=3, InstanceNorm
    cin0 = 442 + width
    w0 = unif((cwidth * 3, cin0), (6.0 / (cin0 + cwidth * 3)) ** 0.5)   # xavier
    b0 = unif((cwidth * 3,), 1.0 / (cin0 ** 0.5))
    wf0, bf0 = fuse_pool_cols(w0.T, b0, cwidth, 3)
    params['maxout0'] = (wf0, bf0,
                         jnp.ones((1, cwidth), jnp.float32),
                         jnp.zeros((1, cwidth), jnp.float32))

    # 16 ResNet blocks: Maxout2d(cwidth->cwidth, pool=4, k=5) + SCSE(cwidth, 16)
    blocks = []
    r = max(cwidth // 16, 1)
    for nblock in range(1, 17):
        fan_in, fan_out = cwidth * 25, cwidth * 4 * 25
        gain = 1.0 / (nblock ** 0.5)                           # xavier gain 1/sqrt(block)
        w = unif((cwidth * 4, cwidth, 5, 5), gain * (6.0 / (fan_in + fan_out)) ** 0.5)
        b = unif((cwidth * 4,), 1.0 / (fan_in ** 0.5))
        # row index of the fused weight = (dy*5 + dx)*cwidth + c_in
        wcol = jnp.transpose(w, (2, 3, 1, 0)).reshape(25 * cwidth, cwidth * 4)
        wf, bf = fuse_pool_cols(wcol, b, cwidth, 4)
        gamma = jnp.ones((1, cwidth), jnp.float32)
        beta = jnp.zeros((1, cwidth), jnp.float32)
        cw1 = unif((r, cwidth), 1.0 / (cwidth ** 0.5)).T       # (C, C//16), bias=False
        cw2 = unif((cwidth, r), 1.0 / (r ** 0.5)).T            # (C//16, C), bias=False
        sw = unif((1, cwidth), 1.0 / (cwidth ** 0.5))          # sSE 1x1 conv weight row
        sb = unif((1, 1), 1.0 / (cwidth ** 0.5))
        blocks.append((wf, bf, gamma, beta, cw1, cw2, sw, sb))
    params['blocks'] = blocks

    # final Conv2d(cwidth -> 2 + 3*34, k=1), zero-initialized as in the module
    nout = 2 + 3 * 34
    params['head_w'] = jnp.zeros((cwidth, nout), jnp.float32)
    params['head_b'] = jnp.zeros((1, nout), jnp.float32)
    return params


# ----------------------------------------------------------------------------
# ORACLE forward
# ----------------------------------------------------------------------------

def oracle_forward(params, x_ids, x2, *, width, cwidth):
    nseqs, nres = x_ids.shape
    H = W = nres
    P = H * W
    # TODO(synk): row tiles require nres % 8 == 0 (sublane constraint); a
    # masked remainder tile would be needed for arbitrary nres.
    assert nres % 8 == 0, "nres must be a multiple of 8"

    emb = jnp.eye(22, dtype=jnp.float32)[x_ids]                # frozen one-hot embed

    # vgru: the reference runs it on 50-residue chunks with h0 = 0 per chunk;
    # batch elements are independent, so one batched call is exactly equivalent.
    ys = run_gru(emb, params['vgru'])                          # (nseqs, nres, width)
    xx = ys[-1]                                                # (nres, width)

    h = run_bigru(xx[:, None, :], params['hgru'])[:, 0, :]     # (nres, width)

    # pairwise outer-product features + concat with x2 (channels-last, (P, C))
    pair = (h[:, None, :] * h[None, :, :]).reshape(P, width)
    x2f = jnp.transpose(x2[0], (1, 2, 0)).reshape(P, -1)
    feat = jnp.concatenate([pair, x2f], axis=-1)               # (P, 442+width)

    tb = _rows_per_tile(H, W) * W                              # row tile for 1x1/apply passes

    # TODO(synk): Dropout/Dropout2d(p=0.2) are eval-mode identity (no RNG dropout).

    # first Maxout2d (1x1 conv, pool=3) + InstanceNorm  -- stats pass + apply pass
    w0, b0, g0, be0 = params['maxout0']
    m0, st0 = maxout_stats(feat, w0, b0, cw=cwidth, pool=3, tb=tb)
    out = apply_norm(m0, _finalize_stats(st0, P), g0, be0, tb=tb)   # (P, cwidth)

    logits = None
    nblocks = len(params['blocks'])
    for bi, (wf, bf, gamma, beta, cw1, cw2, sw, sb) in enumerate(params['blocks']):
        # zero-pad (pad=2) and expose as (H+4, W+4, C) for the halo'd row blocks
        xp3 = jnp.pad(out.reshape(H, W, cwidth), ((2, 2), (2, 2), (0, 0)))
        m, st = conv_maxout_stats(xp3, wf, bf, height=H, wpix=W, cw=cwidth)
        stat = _finalize_stats(st, P)
        # cSE squeeze: the spatial mean of an instance-normalized map is exactly
        # beta, so the channel gate is data-independent and computed here.
        cs = jax.nn.sigmoid(jnp.maximum(beta @ cw1, 0.0) @ cw2)        # (1, cwidth)
        if bi + 1 < nblocks:
            out = apply_block(m, out, stat, gamma, beta, cs, sw, sb, tb=tb)
        else:
            logits = apply_block_head(m, out, stat, gamma, beta, cs, sw, sb,
                                      params['head_w'], params['head_b'], tb=tb)

    nout = logits.shape[-1]
    return jnp.transpose(logits.reshape(H, W, nout), (2, 0, 1))[None]   # (1, 104, nres, nres)


# ----------------------------------------------------------------------------

if __name__ == "__main__":
    width, cwidth = 32, 32
    nseqs, nres = 4, 16

    key = jax.random.PRNGKey(0)
    k_ids, k_x2, k_params = jax.random.split(key, 3)

    x_ids = jax.random.randint(k_ids, (nseqs, nres), 0, 22)               # token ids
    x2 = jax.random.normal(k_x2, (1, 442, nres, nres), jnp.float32)       # pairwise feats
    params = init_params(k_params, width, cwidth)

    fwd = jax.jit(functools.partial(oracle_forward, width=width, cwidth=cwidth))
    out = fwd(params, x_ids, x2)
    out = jax.block_until_ready(out)

    assert out.shape == (1, 2 + 3 * 34, nres, nres), out.shape
    assert bool(jnp.all(jnp.isfinite(out)))
    print("KERNEL_OK")
</pallas_src>

<mosaic_0001>
module attributes {stable_mosaic.version = 11 : i64} {
  func.func @_maxout_stats_kernel(%arg0: i32, %arg1: memref<256x474xf32, #tpu.memory_space<vmem>>, %arg2: memref<474x96xbf16, #tpu.memory_space<vmem>>, %arg3: memref<1x96xf32, #tpu.memory_space<vmem>>, %arg4: memref<256x32xf32, #tpu.memory_space<vmem>>, %arg5: memref<1x2x32xf32, #tpu.memory_space<vmem>>) attributes {dimension_semantics = [#tpu.dimension_semantics<parallel>], iteration_bounds = array<i64: 1>, scalar_prefetch = 0 : i64, scratch_operands = 0 : i64, tpu.core_type = #tpu.core_type<tc>, window_params = [{transform_indices = @transform_0, window_bounds = array<i64: 256, 474>}, {pipeline_mode = #tpu.pipeline_mode<synchronous>, transform_indices = @transform_1, window_bounds = array<i64: 474, 96>}, {pipeline_mode = #tpu.pipeline_mode<synchronous>, transform_indices = @transform_2, window_bounds = array<i64: 1, 96>}, {transform_indices = @transform_3, window_bounds = array<i64: 256, 32>}, {transform_indices = @transform_4, window_bounds = array<i64: 1, 2, 32>}]} {
    %c0 = arith.constant 0 : index
    %c0_0 = arith.constant 0 : index
    %0 = vector.load %arg1[%c0, %c0_0] : memref<256x474xf32, #tpu.memory_space<vmem>>, vector<256x474xf32>
    %1 = arith.truncf %0 : vector<256x474xf32> to vector<256x474xbf16>
    %c0_1 = arith.constant 0 : index
    %c0_2 = arith.constant 0 : index
    %2 = vector.load %arg2[%c0_1, %c0_2] : memref<474x96xbf16, #tpu.memory_space<vmem>>, vector<474x96xbf16>
    %cst = arith.constant dense<0.000000e+00> : vector<256x96xf32>
    %3 = tpu.matmul %1, %2, %cst {dimension_numbers = #tpu.dot_dimension_numbers<[1], [0], [0], [1], [0, 0, 1, 1], [], []>} : vector<256x474xbf16>, vector<474x96xbf16>, vector<256x96xf32> -> vector<256x96xf32>
    %c0_3 = arith.constant 0 : index
    %c0_4 = arith.constant 0 : index
    %4 = vector.load %arg3[%c0_3, %c0_4] : memref<1x96xf32, #tpu.memory_space<vmem>>, vector<1x96xf32>
    %5 = vector.broadcast %4 : vector<1x96xf32> to vector<256x96xf32>
    %6 = arith.addf %3, %5 : vector<256x96xf32>
    %7 = vector.extract_strided_slice %6 {offsets = [0, 0], sizes = [256, 32], strides = [1, 1]} : vector<256x96xf32> to vector<256x32xf32>
    %8 = vector.extract_strided_slice %6 {offsets = [0, 32], sizes = [256, 32], strides = [1, 1]} : vector<256x96xf32> to vector<256x32xf32>
    %9 = arith.maximumf %7, %8 : vector<256x32xf32>
    %10 = vector.extract_strided_slice %6 {offsets = [0, 64], sizes = [256, 32], strides = [1, 1]} : vector<256x96xf32> to vector<256x32xf32>
    %11 = arith.maximumf %9, %10 : vector<256x32xf32>
    %c0_5 = arith.constant 0 : index
    %c0_6 = arith.constant 0 : index
    %12 = vector.load %arg4[%c0_5, %c0_6] : memref<256x32xf32, #tpu.memory_space<vmem>>, vector<256x32xf32>
    tpu.vector_store %arg4[%c0_5, %c0_6], %11 {strides = array<i32>} : memref<256x32xf32, #tpu.memory_space<vmem>>, vector<256x32xf32>,
    %cst_7 = arith.constant dense<0.000000e+00> : vector<32xf32>
    %13 = vector.multi_reduction <add>, %11, %cst_7 [0] : vector<256x32xf32> to vector<32xf32>
    %14 = vector.shape_cast %13 : vector<32xf32> to vector<1x32xf32>
    %15 = arith.mulf %11, %11 : vector<256x32xf32>
    %cst_8 = arith.constant dense<0.000000e+00> : vector<32xf32>
    %16 = vector.multi_reduction <add>, %15, %cst_8 [0] : vector<256x32xf32> to vector<32xf32>
    %17 = vector.shape_cast %16 : vector<32xf32> to vector<1x32xf32>
    %18 = tpu.concatenate %14, %17 in 0 : vector<1x32xf32>, vector<1x32xf32> -> vector<2x32xf32>
    %19 = vector.shape_cast %18 : vector<2x32xf32> to vector<1x2x32xf32>
    %c0_9 = arith.constant 0 : index
    %c0_10 = arith.constant 0 : index
    %c0_11 = arith.constant 0 : index
    %20 = vector.load %arg5[%c0_9, %c0_10, %c0_11] : memref<1x2x32xf32, #tpu.memory_space<vmem>>, vector<1x2x32xf32>
    tpu.vector_store %arg5[%c0_9, %c0_10, %c0_11], %19 {strides = array<i32>} : memref<1x2x32xf32, #tpu.memory_space<vmem>>, vector<1x2x32xf32>,
    return
  }
  func.func @transform_0(%arg0: i32) -> (i32, i32) {
    %c0_i32 = arith.constant 0 : i32
    %c0_i32_0 = arith.constant 0 : i32
    return %arg0, %c0_i32 : i32, i32
  }
  func.func @transform_1(%arg0: i32) -> (i32, i32) {
    %c0_i32 = arith.constant 0 : i32
    %c0_i32_0 = arith.constant 0 : i32
    %c0_i32_1 = arith.constant 0 : i32
    return %c0_i32, %c0_i32_0 : i32, i32
  }
  func.func @transform_2(%arg0: i32) -> (i32, i32) {
    %c0_i32 = arith.constant 0 : i32
    %c0_i32_0 = arith.constant 0 : i32
    %c0_i32_1 = arith.constant 0 : i32
    return %c0_i32, %c0_i32_0 : i32, i32
  }
  func.func @transform_3(%arg0: i32) -> (i32, i32) {
    %c0_i32 = arith.constant 0 : i32
    %c0_i32_0 = arith.constant 0 : i32
    return %arg0, %c0_i32 : i32, i32
  }
  func.func @transform_4(%arg0: i32) -> (i32, i32, i32) {
    %c0_i32 = arith.constant 0 : i32
    %c0_i32_0 = arith.constant 0 : i32
    %c0_i32_1 = arith.constant 0 : i32
    return %arg0, %c0_i32, %c0_i32_0 : i32, i32, i32
  }
}

module attributes {stable_mosaic.version = 11 : i64} {
  func.func @_apply_norm_kernel(%arg0: i32, %arg1: memref<256x32xf32, #tpu.memory_space<vmem>>, %arg2: memref<2x32xf32, #tpu.memory_space<vmem>>, %arg3: memref<1x32xf32, #tpu.memory_space<vmem>>, %arg4: memref<1x32xf32, #tpu.memory_space<vmem>>, %arg5: memref<256x32xf32, #tpu.memory_space<vmem>>) attributes {dimension_semantics = [#tpu.dimension_semantics<parallel>], iteration_bounds = array<i64: 1>, scalar_prefetch = 0 : i64, scratch_operands = 0 : i64, tpu.core_type = #tpu.core_type<tc>, window_params = [{transform_indices = @transform_0, window_bounds = array<i64: 256, 32>}, {pipeline_mode = #tpu.pipeline_mode<synchronous>, transform_indices = @transform_1, window_bounds = array<i64: 2, 32>}, {pipeline_mode = #tpu.pipeline_mode<synchronous>, transform_indices = @transform_2, window_bounds = array<i64: 1, 32>}, {pipeline_mode = #tpu.pipeline_mode<synchronous>, transform_indices = @transform_3, window_bounds = array<i64: 1, 32>}, {transform_indices = @transform_4, window_bounds = array<i64: 256, 32>}]} {
    %c0 = arith.constant 0 : index
    %c0_0 = arith.constant 0 : index
    %0 = vector.load %arg1[%c0, %c0_0] : memref<256x32xf32, #tpu.memory_space<vmem>>, vector<256x32xf32>
    %c0_1 = arith.constant 0 : index
    %c0_2 = arith.constant 0 : index
    %1 = vector.load %arg2[%c0_1, %c0_2] : memref<2x32xf32, #tpu.memory_space<vmem>>, vector<1x32xf32>
    %2 = vector.broadcast %1 : vector<1x32xf32> to vector<256x32xf32>
    %3 = arith.subf %0, %2 : vector<256x32xf32>
    %c1 = arith.constant 1 : index
    %c0_3 = arith.constant 0 : index
    %4 = vector.load %arg2[%c1, %c0_3] : memref<2x32xf32, #tpu.memory_space<vmem>>, vector<1x32xf32>
    %5 = vector.broadcast %4 : vector<1x32xf32> to vector<256x32xf32>
    %6 = arith.mulf %3, %5 : vector<256x32xf32>
    %c0_4 = arith.constant 0 : index
    %c0_5 = arith.constant 0 : index
    %7 = vector.load %arg3[%c0_4, %c0_5] : memref<1x32xf32, #tpu.memory_space<vmem>>, vector<1x32xf32>
    %8 = vector.broadcast %7 : vector<1x32xf32> to vector<256x32xf32>
    %9 = arith.mulf %6, %8 : vector<256x32xf32>
    %c0_6 = arith.constant 0 : index
    %c0_7 = arith.constant 0 : index
    %10 = vector.load %arg4[%c0_6, %c0_7] : memref<1x32xf32, #tpu.memory_space<vmem>>, vector<1x32xf32>
    %11 = vector.broadcast %10 : vector<1x32xf32> to vector<256x32xf32>
    %12 = arith.addf %9, %11 : vector<256x32xf32>
    %c0_8 = arith.constant 0 : index
    %c0_9 = arith.constant 0 : index
    %13 = vector.load %arg5[%c0_8, %c0_9] : memref<256x32xf32, #tpu.memory_space<vmem>>, vector<256x32xf32>
    tpu.vector_store %arg5[%c0_8, %c0_9], %12 {strides = array<i32>} : memref<256x32xf32, #tpu.memory_space<vmem>>, vector<256x32xf32>,
    return
  }
  func.func @transform_0(%arg0: i32) -> (i32, i32) {
    %c0_i32 = arith.constant 0 : i32
    %c0_i32_0 = arith.constant 0 : i32
    return %arg0, %c0_i32 : i32, i32
  }
  func.func @transform_1(%arg0: i32) -> (i32, i32) {
    %c0_i32 = arith.constant 0 : i32
    %c0_i32_0 = arith.constant 0 : i32
    %c0_i32_1 = arith.constant 0 : i32
    return %c0_i32, %c0_i32_0 : i32, i32
  }
  func.func @transform_2(%arg0: i32) -> (i32, i32) {
    %c0_i32 = arith.constant 0 : i32
    %c0_i32_0 = arith.constant 0 : i32
    %c0_i32_1 = arith.constant 0 : i32
    return %c0_i32, %c0_i32_0 : i32, i32
  }
  func.func @transform_3(%arg0: i32) -> (i32, i32) {
    %c0_i32 = arith.constant 0 : i32
    %c0_i32_0 = arith.constant 0 : i32
    %c0_i32_1 = arith.constant 0 : i32
    return %c0_i32, %c0_i32_0 : i32, i32
  }
  func.func @transform_4(%arg0: i32) -> (i32, i32) {
    %c0_i32 = arith.constant 0 : i32
    %c0_i32_0 = arith.constant 0 : i32
    return %arg0, %c0_i32 : i32, i32
  }
}

module attributes {stable_mosaic.version = 11 : i64} {
  func.func @_conv_maxout_stats_kernel(%arg0: i32, %arg1: memref<1x20x32xf32, #tpu.memory_space<vmem>>, %arg2: memref<1x20x32xf32, #tpu.memory_space<vmem>>, %arg3: memref<1x20x32xf32, #tpu.memory_space<vmem>>, %arg4: memref<1x20x32xf32, #tpu.memory_space<vmem>>, %arg5: memref<1x20x32xf32, #tpu.memory_space<vmem>>, %arg6: memref<800x128xbf16, #tpu.memory_space<vmem>>, %arg7: memref<1x128xf32, #tpu.memory_space<vmem>>, %arg8: memref<16x32xf32, #tpu.memory_space<vmem>>, %arg9: memref<1x2x32xf32, #tpu.memory_space<vmem>>) attributes {dimension_semantics = [#tpu.dimension_semantics<parallel>], iteration_bounds = array<i64: 16>, scalar_prefetch = 0 : i64, scratch_operands = 0 : i64, tpu.core_type = #tpu.core_type<tc>, window_params = [{transform_indices = @transform_0, window_bounds = array<i64: 1, 20, 32>}, {transform_indices = @transform_1, window_bounds = array<i64: 1, 20, 32>}, {transform_indices = @transform_2, window_bounds = array<i64: 1, 20, 32>}, {transform_indices = @transform_3, window_bounds = array<i64: 1, 20, 32>}, {transform_indices = @transform_4, window_bounds = array<i64: 1, 20, 32>}, {pipeline_mode = #tpu.pipeline_mode<synchronous>, transform_indices = @transform_5, window_bounds = array<i64: 800, 128>}, {pipeline_mode = #tpu.pipeline_mode<synchronous>, transform_indices = @transform_6, window_bounds = array<i64: 1, 128>}, {transform_indices = @transform_7, window_bounds = array<i64: 16, 32>}, {transform_indices = @transform_8, window_bounds = array<i64: 1, 2, 32>}]} {
    %c0 = arith.constant 0 : index
    %c0_0 = arith.constant 0 : index
    %c0_1 = arith.constant 0 : index
    %0 = vector.load %arg1[%c0, %c0_0, %c0_1] : memref<1x20x32xf32, #tpu.memory_space<vmem>>, vector<1x16x32xf32>
    %1 = vector.shape_cast %0 : vector<1x16x32xf32> to vector<16x32xf32>
    %c0_2 = arith.constant 0 : index
    %c1 = arith.constant 1 : index
    %c0_3 = arith.constant 0 : index
    %2 = vector.load %arg1[%c0_2, %c1, %c0_3] : memref<1x20x32xf32, #tpu.memory_space<vmem>>, vector<1x16x32xf32>
    %3 = vector.shape_cast %2 : vector<1x16x32xf32> to vector<16x32xf32>
    %c0_4 = arith.constant 0 : index
    %c2 = arith.constant 2 : index
    %c0_5 = arith.constant 0 : index
    %4 = vector.load %arg1[%c0_4, %c2, %c0_5] : memref<1x20x32xf32, #tpu.memory_space<vmem>>, vector<1x16x32xf32>
    %5 = vector.shape_cast %4 : vector<1x16x32xf32> to vector<16x32xf32>
    %c0_6 = arith.constant 0 : index
    %c3 = arith.constant 3 : index
    %c0_7 = arith.constant 0 : index
    %6 = vector.load %arg1[%c0_6, %c3, %c0_7] : memref<1x20x32xf32, #tpu.memory_space<vmem>>, vector<1x16x32xf32>
    %7 = vector.shape_cast %6 : vector<1x16x32xf32> to vector<16x32xf32>
    %c0_8 = arith.constant 0 : index
    %c4 = arith.constant 4 : index
    %c0_9 = arith.constant 0 : index
    %8 = vector.load %arg1[%c0_8, %c4, %c0_9] : memref<1x20x32xf32, #tpu.memory_space<vmem>>, vector<1x16x32xf32>
    %9 = vector.shape_cast %8 : vector<1x16x32xf32> to vector<16x32xf32>
    %c0_10 = arith.constant 0 : index
    %c0_11 = arith.constant 0 : index
    %c0_12 = arith.constant 0 : index
    %10 = vector.load %arg2[%c0_10, %c0_11, %c0_12] : memref<1x20x32xf32, #tpu.memory_space<vmem>>, vector<1x16x32xf32>
    %11 = vector.shape_cast %10 : vector<1x16x32xf32> to vector<16x32xf32>
    %c0_13 = arith.constant 0 : index
    %c1_14 = arith.constant 1 : index
    %c0_15 = arith.constant 0 : index
    %12 = vector.load %arg2[%c0_13, %c1_14, %c0_15] : memref<1x20x32xf32, #tpu.memory_space<vmem>>, vector<1x16x32xf32>
    %13 = vector.shape_cast %12 : vector<1x16x32xf32> to vector<16x32xf32>
    %c0_16 = arith.constant 0 : index
    %c2_17 = arith.constant 2 : index
    %c0_18 = arith.constant 0 : index
    %14 = vector.load %arg2[%c0_16, %c2_17, %c0_18] : memref<1x20x32xf32, #tpu.memory_space<vmem>>, vector<1x16x32xf32>
    %15 = vector.shape_cast %14 : vector<1x16x32xf32> to vector<16x32xf32>
    %c0_19 = arith.constant 0 : index
    %c3_20 = arith.constant 3 : index
    %c0_21 = arith.constant 0 : index
    %16 = vector.load %arg2[%c0_19, %c3_20, %c0_21] : memref<1x20x32xf32, #tpu.memory_space<vmem>>, vector<1x16x32xf32>
    %17 = vector.shape_cast %16 : vector<1x16x32xf32> to vector<16x32xf32>
    %c0_22 = arith.constant 0 : index
    %c4_23 = arith.constant 4 : index
    %c0_24 = arith.constant 0 : index
    %18 = vector.load %arg2[%c0_22, %c4_23, %c0_24] : memref<1x20x32xf32, #tpu.memory_space<vmem>>, vector<1x16x32xf32>
    %19 = vector.shape_cast %18 : vector<1x16x32xf32> to vector<16x32xf32>
    %c0_25 = arith.constant 0 : index
    %c0_26 = arith.constant 0 : index
    %c0_27 = arith.constant 0 : index
    %20 = vector.load %arg3[%c0_25, %c0_26, %c0_27] : memref<1x20x32xf32, #tpu.memory_space<vmem>>, vector<1x16x32xf32>
    %21 = vector.shape_cast %20 : vector<1x16x32xf32> to vector<16x32xf32>
    %c0_28 = arith.constant 0 : index
    %c1_29 = arith.constant 1 : index
    %c0_30 = arith.constant 0 : index
    %22 = vector.load %arg3[%c0_28, %c1_29, %c0_30] : memref<1x20x32xf32, #tpu.memory_space<vmem>>, vector<1x16x32xf32>
    %23 = vector.shape_cast %22 : vector<1x16x32xf32> to vector<16x32xf32>
    %c0_31 = arith.constant 0 : index
    %c2_32 = arith.constant 2 : index
    %c0_33 = arith.constant 0 : index
    %24 = vector.load %arg3[%c0_31, %c2_32, %c0_33] : memref<1x20x32xf32, #tpu.memory_space<vmem>>, vector<1x16x32xf32>
    %25 = vector.shape_cast %24 : vector<1x16x32xf32> to vector<16x32xf32>
    %c0_34 = arith.constant 0 : index
    %c3_35 = arith.constant 3 : index
    %c0_36 = arith.constant 0 : index
    %26 = vector.load %arg3[%c0_34, %c3_35, %c0_36] : memref<1x20x32xf32, #tpu.memory_space<vmem>>, vector<1x16x32xf32>
    %27 = vector.shape_cast %26 : vector<1x16x32xf32> to vector<16x32xf32>
    %c0_37 = arith.constant 0 : index
    %c4_38 = arith.constant 4 : index
    %c0_39 = arith.constant 0 : index
    %28 = vector.load %arg3[%c0_37, %c4_38, %c0_39] : memref<1x20x32xf32, #tpu.memory_space<vmem>>, vector<1x16x32xf32>
    %29 = vector.shape_cast %28 : vector<1x16x32xf32> to vector<16x32xf32>
    %c0_40 = arith.constant 0 : index
    %c0_41 = arith.constant 0 : index
    %c0_42 = arith.constant 0 : index
    %30 = vector.load %arg4[%c0_40, %c0_41, %c0_42] : memref<1x20x32xf32, #tpu.memory_space<vmem>>, vector<1x16x32xf32>
    %31 = vector.shape_cast %30 : vector<1x16x32xf32> to vector<16x32xf32>
    %c0_43 = arith.constant 0 : index
    %c1_44 = arith.constant 1 : index
    %c0_45 = arith.constant 0 : index
    %32 = vector.load %arg4[%c0_43, %c1_44, %c0_45] : memref<1x20x32xf32, #tpu.memory_space<vmem>>, vector<1x16x32xf32>
    %33 = vector.shape_cast %32 : vector<1x16x32xf32> to vector<16x32xf32>
    %c0_46 = arith.constant 0 : index
    %c2_47 = arith.constant 2 : index
    %c0_48 = arith.constant 0 : index
    %34 = vector.load %arg4[%c0_46, %c2_47, %c0_48] : memref<1x20x32xf32, #tpu.memory_space<vmem>>, vector<1x16x32xf32>
    %35 = vector.shape_cast %34 : vector<1x16x32xf32> to vector<16x32xf32>
    %c0_49 = arith.constant 0 : index
    %c3_50 = arith.constant 3 : index
    %c0_51 = arith.constant 0 : index
    %36 = vector.load %arg4[%c0_49, %c3_50, %c0_51] : memref<1x20x32xf32, #tpu.memory_space<vmem>>, vector<1x16x32xf32>
    %37 = vector.shape_cast %36 : vector<1x16x32xf32> to vector<16x32xf32>
    %c0_52 = arith.constant 0 : index
    %c4_53 = arith.constant 4 : index
    %c0_54 = arith.constant 0 : index
    %38 = vector.load %arg4[%c0_52, %c4_53, %c0_54] : memref<1x20x32xf32, #tpu.memory_space<vmem>>, vector<1x16x32xf32>
    %39 = vector.shape_cast %38 : vector<1x16x32xf32> to vector<16x32xf32>
    %c0_55 = arith.constant 0 : index
    %c0_56 = arith.constant 0 : index
    %c0_57 = arith.constant 0 : index
    %40 = vector.load %arg5[%c0_55, %c0_56, %c0_57] : memref<1x20x32xf32, #tpu.memory_space<vmem>>, vector<1x16x32xf32>
    %41 = vector.shape_cast %40 : vector<1x16x32xf32> to vector<16x32xf32>
    %c0_58 = arith.constant 0 : index
    %c1_59 = arith.constant 1 : index
    %c0_60 = arith.constant 0 : index
    %42 = vector.load %arg5[%c0_58, %c1_59, %c0_60] : memref<1x20x32xf32, #tpu.memory_space<vmem>>, vector<1x16x32xf32>
    %43 = vector.shape_cast %42 : vector<1x16x32xf32> to vector<16x32xf32>
    %c0_61 = arith.constant 0 : index
    %c2_62 = arith.constant 2 : index
    %c0_63 = arith.constant 0 : index
    %44 = vector.load %arg5[%c0_61, %c2_62, %c0_63] : memref<1x20x32xf32, #tpu.memory_space<vmem>>, vector<1x16x32xf32>
    %45 = vector.shape_cast %44 : vector<1x16x32xf32> to vector<16x32xf32>
    %c0_64 = arith.constant 0 : index
    %c3_65 = arith.constant 3 : index
    %c0_66 = arith.constant 0 : index
    %46 = vector.load %arg5[%c0_64, %c3_65, %c0_66] : memref<1x20x32xf32, #tpu.memory_space<vmem>>, vector<1x16x32xf32>
    %47 = vector.shape_cast %46 : vector<1x16x32xf32> to vector<16x32xf32>
    %c0_67 = arith.constant 0 : index
    %c4_68 = arith.constant 4 : index
    %c0_69 = arith.constant 0 : index
    %48 = vector.load %arg5[%c0_67, %c4_68, %c0_69] : memref<1x20x32xf32, #tpu.memory_space<vmem>>, vector<1x16x32xf32>
    %49 = vector.shape_cast %48 : vector<1x16x32xf32> to vector<16x32xf32>
    %50 = tpu.concatenate %1, %3, %5, %7, %9, %11, %13, %15, %17, %19, %21, %23, %25, %27, %29, %31 in 1 : vector<16x32xf32>, vector<16x32xf32>, vector<16x32xf32>, vector<16x32xf32>, vector<16x32xf32>, vector<16x32xf32>, vector<16x32xf32>, vector<16x32xf32>, vector<16x32xf32>, vector<16x32xf32>, vector<16x32xf32>, vector<16x32xf32>, vector<16x32xf32>, vector<16x32xf32>, vector<16x32xf32>, vector<16x32xf32> -> vector<16x512xf32>
    %51 = tpu.concatenate %33, %35, %37, %39, %41, %43, %45, %47, %49 in 1 : vector<16x32xf32>, vector<16x32xf32>, vector<16x32xf32>, vector<16x32xf32>, vector<16x32xf32>, vector<16x32xf32>, vector<16x32xf32>, vector<16x32xf32>, vector<16x32xf32> -> vector<16x288xf32>
    %52 = tpu.concatenate %50, %51 in 1 : vector<16x512xf32>, vector<16x288xf32> -> vector<16x800xf32>
    %53 = arith.truncf %52 : vector<16x800xf32> to vector<16x800xbf16>
    %c0_70 = arith.constant 0 : index
    %c0_71 = arith.constant 0 : index
    %54 = vector.load %arg6[%c0_70, %c0_71] : memref<800x128xbf16, #tpu.memory_space<vmem>>, vector<800x128xbf16>
    %cst = arith.constant dense<0.000000e+00> : vector<16x128xf32>
    %55 = tpu.matmul %53, %54, %cst {dimension_numbers = #tpu.dot_dimension_numbers<[1], [0], [0], [1], [0, 0, 1, 1], [], []>} : vector<16x800xbf16>, vector<800x128xbf16>, vector<16x128xf32> -> vector<16x128xf32>
    %c0_72 = arith.constant 0 : index
    %c0_73 = arith.constant 0 : index
    %56 = vector.load %arg7[%c0_72, %c0_73] : memref<1x128xf32, #tpu.memory_space<vmem>>, vector<1x128xf32>
    %57 = vector.broadcast %56 : vector<1x128xf32> to vector<16x128xf32>
    %58 = arith.addf %55, %57 : vector<16x128xf32>
    %59 = vector.extract_strided_slice %58 {offsets = [0, 0], sizes = [16, 32], strides = [1, 1]} : vector<16x128xf32> to vector<16x32xf32>
    %60 = vector.extract_strided_slice %58 {offsets = [0, 32], sizes = [16, 32], strides = [1, 1]} : vector<16x128xf32> to vector<16x32xf32>
    %61 = arith.maximumf %59, %60 : vector<16x32xf32>
    %62 = vector.extract_strided_slice %58 {offsets = [0, 64], sizes = [16, 32], strides = [1, 1]} : vector<16x128xf32> to vector<16x32xf32>
    %63 = arith.maximumf %61, %62 : vector<16x32xf32>
    %64 = vector.extract_strided_slice %58 {offsets = [0, 96], sizes = [16, 32], strides = [1, 1]} : vector<16x128xf32> to vector<16x32xf32>
    %65 = arith.maximumf %63, %64 : vector<16x32xf32>
    %c0_74 = arith.constant 0 : index
    %c0_75 = arith.constant 0 : index
    %66 = vector.load %arg8[%c0_74, %c0_75] : memref<16x32xf32, #tpu.memory_space<vmem>>, vector<16x32xf32>
    tpu.vector_store %arg8[%c0_74, %c0_75], %65 {strides = array<i32>} : memref<16x32xf32, #tpu.memory_space<vmem>>, vector<16x32xf32>,
    %cst_76 = arith.constant dense<0.000000e+00> : vector<32xf32>
    %67 = vector.multi_reduction <add>, %65, %cst_76 [0] : vector<16x32xf32> to vector<32xf32>
    %68 = vector.shape_cast %67 : vector<32xf32> to vector<1x32xf32>
    %69 = arith.mulf %65, %65 : vector<16x32xf32>
    %cst_77 = arith.constant dense<0.000000e+00> : vector<32xf32>
    %70 = vector.multi_reduction <add>, %69, %cst_77 [0] : vector<16x32xf32> to vector<32xf32>
    %71 = vector.shape_cast %70 : vector<32xf32> to vector<1x32xf32>
    %72 = tpu.concatenate %68, %71 in 0 : vector<1x32xf32>, vector<1x32xf32> -> vector<2x32xf32>
    %73 = vector.shape_cast %72 : vector<2x32xf32> to vector<1x2x32xf32>
    %c0_78 = arith.constant 0 : index
    %c0_79 = arith.constant 0 : index
    %c0_80 = arith.constant 0 : index
    %74 = vector.load %arg9[%c0_78, %c0_79, %c0_80] : memref<1x2x32xf32, #tpu.memory_space<vmem>>, vector<1x2x32xf32>
    tpu.vector_store %arg9[%c0_78, %c0_79, %c0_80], %73 {strides = array<i32>} : memref<1x2x32xf32, #tpu.memory_space<vmem>>, vector<1x2x32xf32>,
    return
  }
  func.func @transform_0(%arg0: i32) -> (i32, i32, i32) {
    %c0_i32 = arith.constant 0 : i32
    %0 = arith.addi %arg0, %c0_i32 : i32
    %c0_i32_0 = arith.constant 0 : i32
    %c0_i32_1 = arith.constant 0 : i32
    %c0_i32_2 = arith.constant 0 : i32
    return %0, %c0_i32_0, %c0_i32_1 : i32, i32, i32
  }
  func.func @transform_1(%arg0: i32) -> (i32, i32, i32) {
    %c1_i32 = arith.constant 1 : i32
    %0 = arith.addi %arg0, %c1_i32 : i32
    %c0_i32 = arith.constant 0 : i32
    %c0_i32_0 = arith.constant 0 : i32
    %c0_i32_1 = arith.constant 0 : i32
    return %0, %c0_i32, %c0_i32_0 : i32, i32, i32
  }
  func.func @transform_2(%arg0: i32) -> (i32, i32, i32) {
    %c2_i32 = arith.constant 2 : i32
    %0 = arith.addi %arg0, %c2_i32 : i32
    %c0_i32 = arith.constant 0 : i32
    %c0_i32_0 = arith.constant 0 : i32
    %c0_i32_1 = arith.constant 0 : i32
    return %0, %c0_i32, %c0_i32_0 : i32, i32, i32
  }
  func.func @transform_3(%arg0: i32) -> (i32, i32, i32) {
    %c3_i32 = arith.constant 3 : i32
    %0 = arith.addi %arg0, %c3_i32 : i32
    %c0_i32 = arith.constant 0 : i32
    %c0_i32_0 = arith.constant 0 : i32
    %c0_i32_1 = arith.constant 0 : i32
    return %0, %c0_i32, %c0_i32_0 : i32, i32, i32
  }
  func.func @transform_4(%arg0: i32) -> (i32, i32, i32) {
    %c4_i32 = arith.constant 4 : i32
    %0 = arith.addi %arg0, %c4_i32 : i32
    %c0_i32 = arith.constant 0 : i32
    %c0_i32_0 = arith.constant 0 : i32
    %c0_i32_1 = arith.constant 0 : i32
    return %0, %c0_i32, %c0_i32_0 : i32, i32, i32
  }
  func.func @transform_5(%arg0: i32) -> (i32, i32) {
    %c0_i32 = arith.constant 0 : i32
    %c0_i32_0 = arith.constant 0 : i32
    %c0_i32_1 = arith.constant 0 : i32
    return %c0_i32, %c0_i32_0 : i32, i32
  }
  func.func @transform_6(%arg0: i32) -> (i32, i32) {
    %c0_i32 = arith.constant 0 : i32
    %c0_i32_0 = arith.constant 0 : i32
    %c0_i32_1 = arith.constant 0 : i32
    return %c0_i32, %c0_i32_0 : i32, i32
  }
  func.func @transform_7(%arg0: i32) -> (i32, i32) {
    %c0_i32 = arith.constant 0 : i32
    %c0_i32_0 = arith.constant 0 : i32
    return %arg0, %c0_i32 : i32, i32
  }
  func.func @transform_8(%arg0: i32) -> (i32, i32, i32) {
    %c0_i32 = arith.constant 0 : i32
    %c0_i32_0 = arith.constant 0 : i32
    %c0_i32_1 = arith.constant 0 : i32
    return %arg0, %c0_i32, %c0_i32_0 : i32, i32, i32
  }
}

module attributes {stable_mosaic.version = 11 : i64} {
  func.func @_apply_scse_res_kernel(%arg0: i32, %arg1: memref<256x32xf32, #tpu.memory_space<vmem>>, %arg2: memref<256x32xf32, #tpu.memory_space<vmem>>, %arg3: memref<2x32xf32, #tpu.memory_space<vmem>>, %arg4: memref<1x32xf32, #tpu.memory_space<vmem>>, %arg5: memref<1x32xf32, #tpu.memory_space<vmem>>, %arg6: memref<1x32xf32, #tpu.memory_space<vmem>>, %arg7: memref<1x32xf32, #tpu.memory_space<vmem>>, %arg8: memref<1x1xf32, #tpu.memory_space<vmem>>, %arg9: memref<256x32xf32, #tpu.memory_space<vmem>>) attributes {dimension_semantics = [#tpu.dimension_semantics<parallel>], iteration_bounds = array<i64: 1>, scalar_prefetch = 0 : i64, scratch_operands = 0 : i64, tpu.core_type = #tpu.core_type<tc>, window_params = [{transform_indices = @transform_0, window_bounds = array<i64: 256, 32>}, {transform_indices = @transform_1, window_bounds = array<i64: 256, 32>}, {pipeline_mode = #tpu.pipeline_mode<synchronous>, transform_indices = @transform_2, window_bounds = array<i64: 2, 32>}, {pipeline_mode = #tpu.pipeline_mode<synchronous>, transform_indices = @transform_3, window_bounds = array<i64: 1, 32>}, {pipeline_mode = #tpu.pipeline_mode<synchronous>, transform_indices = @transform_4, window_bounds = array<i64: 1, 32>}, {pipeline_mode = #tpu.pipeline_mode<synchronous>, transform_indices = @transform_5, window_bounds = array<i64: 1, 32>}, {pipeline_mode = #tpu.pipeline_mode<synchronous>, transform_indices = @transform_6, window_bounds = array<i64: 1, 32>}, {pipeline_mode = #tpu.pipeline_mode<synchronous>, transform_indices = @transform_7, window_bounds = array<i64: 1, 1>}, {transform_indices = @transform_8, window_bounds = array<i64: 256, 32>}]} {
    %c0 = arith.constant 0 : index
    %c0_0 = arith.constant 0 : index
    %0 = vector.load %arg1[%c0, %c0_0] : memref<256x32xf32, #tpu.memory_space<vmem>>, vector<256x32xf32>
    %c0_1 = arith.constant 0 : index
    %c0_2 = arith.constant 0 : index
    %1 = vector.load %arg3[%c0_1, %c0_2] : memref<2x32xf32, #tpu.memory_space<vmem>>, vector<1x32xf32>
    %2 = vector.broadcast %1 : vector<1x32xf32> to vector<256x32xf32>
    %3 = arith.subf %0, %2 : vector<256x32xf32>
    %c1 = arith.constant 1 : index
    %c0_3 = arith.constant 0 : index
    %4 = vector.load %arg3[%c1, %c0_3] : memref<2x32xf32, #tpu.memory_space<vmem>>, vector<1x32xf32>
    %5 = vector.broadcast %4 : vector<1x32xf32> to vector<256x32xf32>
    %6 = arith.mulf %3, %5 : vector<256x32xf32>
    %c0_4 = arith.constant 0 : index
    %c0_5 = arith.constant 0 : index
    %7 = vector.load %arg4[%c0_4, %c0_5] : memref<1x32xf32, #tpu.memory_space<vmem>>, vector<1x32xf32>
    %8 = vector.broadcast %7 : vector<1x32xf32> to vector<256x32xf32>
    %9 = arith.mulf %6, %8 : vector<256x32xf32>
    %c0_6 = arith.constant 0 : index
    %c0_7 = arith.constant 0 : index
    %10 = vector.load %arg5[%c0_6, %c0_7] : memref<1x32xf32, #tpu.memory_space<vmem>>, vector<1x32xf32>
    %11 = vector.broadcast %10 : vector<1x32xf32> to vector<256x32xf32>
    %12 = arith.addf %9, %11 : vector<256x32xf32>
    %c0_8 = arith.constant 0 : index
    %c0_9 = arith.constant 0 : index
    %13 = vector.load %arg7[%c0_8, %c0_9] : memref<1x32xf32, #tpu.memory_space<vmem>>, vector<1x32xf32>
    %14 = vector.broadcast %13 : vector<1x32xf32> to vector<256x32xf32>
    %15 = arith.mulf %12, %14 : vector<256x32xf32>
    %cst = arith.constant dense<0.000000e+00> : vector<256xf32>
    %16 = vector.multi_reduction <add>, %15, %cst [1] : vector<256x32xf32> to vector<256xf32>
    %17 = vector.shape_cast %16 : vector<256xf32> to vector<256x1xf32>
    %c0_10 = arith.constant 0 : index
    %c0_11 = arith.constant 0 : index
    %18 = vector.load %arg8[%c0_10, %c0_11] : memref<1x1xf32, #tpu.memory_space<vmem>>, vector<1x1xf32>
    %19 = vector.broadcast %18 : vector<1x1xf32> to vector<256x1xf32>
    %20 = arith.addf %17, %19 : vector<256x1xf32>
    %c0_12 = arith.constant 0 : index
    %c0_13 = arith.constant 0 : index
    %21 = vector.load %arg6[%c0_12, %c0_13] : memref<1x32xf32, #tpu.memory_space<vmem>>, vector<1x32xf32>
    %22 = arith.negf %20 : vector<256x1xf32>
    %23 = math.exp %22 : vector<256x1xf32>
    %cst_14 = arith.constant 1.000000e+00 : f32
    %24 = vector.broadcast %cst_14 : f32 to vector<256x1xf32>
    %25 = arith.addf %24, %23 : vector<256x1xf32>
    %26 = arith.divf %24, %25 : vector<256x1xf32>
    %27 = vector.broadcast %21 : vector<1x32xf32> to vector<256x32xf32>
    %28 = vector.broadcast %26 : vector<256x1xf32> to vector<256x32xf32>
    %29 = arith.addf %27, %28 : vector<256x32xf32>
    %30 = arith.mulf %12, %29 : vector<256x32xf32>
    %c0_15 = arith.constant 0 : index
    %c0_16 = arith.constant 0 : index
    %31 = vector.load %arg2[%c0_15, %c0_16] : memref<256x32xf32, #tpu.memory_space<vmem>>, vector<256x32xf32>
    %32 = arith.addf %30, %31 : vector<256x32xf32>
    %c0_17 = arith.constant 0 : index
    %c0_18 = arith.constant 0 : index
    %33 = vector.load %arg9[%c0_17, %c0_18] : memref<256x32xf32, #tpu.memory_space<vmem>>, vector<256x32xf32>
    tpu.vector_store %arg9[%c0_17, %c0_18], %32 {strides = array<i32>} : memref<256x32xf32, #tpu.memory_space<vmem>>, vector<256x32xf32>,
    return
  }
  func.func @transform_0(%arg0: i32) -> (i32, i32) {
    %c0_i32 = arith.constant 0 : i32
    %c0_i32_0 = arith.constant 0 : i32
    return %arg0, %c0_i32 : i32, i32
  }
  func.func @transform_1(%arg0: i32) -> (i32, i32) {
    %c0_i32 = arith.constant 0 : i32
    %c0_i32_0 = arith.constant 0 : i32
    return %arg0, %c0_i32 : i32, i32
  }
  func.func @transform_2(%arg0: i32) -> (i32, i32) {
    %c0_i32 = arith.constant 0 : i32
    %c0_i32_0 = arith.constant 0 : i32
    %c0_i32_1 = arith.constant 0 : i32
    return %c0_i32, %c0_i32_0 : i32, i32
  }
  func.func @transform_3(%arg0: i32) -> (i32, i32) {
    %c0_i32 = arith.constant 0 : i32
    %c0_i32_0 = arith.constant 0 : i32
    %c0_i32_1 = arith.constant 0 : i32
    return %c0_i32, %c0_i32_0 : i32, i32
  }
  func.func @transform_4(%arg0: i32) -> (i32, i32) {
    %c0_i32 = arith.constant 0 : i32
    %c0_i32_0 = arith.constant 0 : i32
    %c0_i32_1 = arith.constant 0 : i32
    return %c0_i32, %c0_i32_0 : i32, i32
  }
  func.func @transform_5(%arg0: i32) -> (i32, i32) {
    %c0_i32 = arith.constant 0 : i32
    %c0_i32_0 = arith.constant 0 : i32
    %c0_i32_1 = arith.constant 0 : i32
    return %c0_i32, %c0_i32_0 : i32, i32
  }
  func.func @transform_6(%arg0: i32) -> (i32, i32) {
    %c0_i32 = arith.constant 0 : i32
    %c0_i32_0 = arith.constant 0 : i32
    %c0_i32_1 = arith.constant 0 : i32
    return %c0_i32, %c0_i32_0 : i32, i32
  }
  func.func @transform_7(%arg0: i32) -> (i32, i32) {
    %c0_i32 = arith.constant 0 : i32
    %c0_i32_0 = arith.constant 0 : i32
    %c0_i32_1 = arith.constant 0 : i32
    return %c0_i32, %c0_i32_0 : i32, i32
  }
  func.func @transform_8(%arg0: i32) -> (i32, i32) {
    %c0_i32 = arith.constant 0 : i32
    %c0_i32_0 = arith.constant 0 : i32
    return %arg0, %c0_i32 : i32, i32
  }
}

module attributes {stable_mosaic.version = 11 : i64} {
  func.func @_apply_scse_res_head_kernel(%arg0: i32, %arg1: memref<256x32xf32, #tpu.memory_space<vmem>>, %arg2: memref<256x32xf32, #tpu.memory_space<vmem>>, %arg3: memref<2x32xf32, #tpu.memory_space<vmem>>, %arg4: memref<1x32xf32, #tpu.memory_space<vmem>>, %arg5: memref<1x32xf32, #tpu.memory_space<vmem>>, %arg6: memref<1x32xf32, #tpu.memory_space<vmem>>, %arg7: memref<1x32xf32, #tpu.memory_space<vmem>>, %arg8: memref<1x1xf32, #tpu.memory_space<vmem>>, %arg9: memref<32x104xf32, #tpu.memory_space<vmem>>, %arg10: memref<1x104xf32, #tpu.memory_space<vmem>>, %arg11: memref<256x104xf32, #tpu.memory_space<vmem>>) attributes {dimension_semantics = [#tpu.dimension_semantics<parallel>], iteration_bounds = array<i64: 1>, scalar_prefetch = 0 : i64, scratch_operands = 0 : i64, tpu.core_type = #tpu.core_type<tc>, window_params = [{transform_indices = @transform_0, window_bounds = array<i64: 256, 32>}, {transform_indices = @transform_1, window_bounds = array<i64: 256, 32>}, {pipeline_mode = #tpu.pipeline_mode<synchronous>, transform_indices = @transform_2, window_bounds = array<i64: 2, 32>}, {pipeline_mode = #tpu.pipeline_mode<synchronous>, transform_indices = @transform_3, window_bounds = array<i64: 1, 32>}, {pipeline_mode = #tpu.pipeline_mode<synchronous>, transform_indices = @transform_4, window_bounds = array<i64: 1, 32>}, {pipeline_mode = #tpu.pipeline_mode<synchronous>, transform_indices = @transform_5, window_bounds = array<i64: 1, 32>}, {pipeline_mode = #tpu.pipeline_mode<synchronous>, transform_indices = @transform_6, window_bounds = array<i64: 1, 32>}, {pipeline_mode = #tpu.pipeline_mode<synchronous>, transform_indices = @transform_7, window_bounds = array<i64: 1, 1>}, {pipeline_mode = #tpu.pipeline_mode<synchronous>, transform_indices = @transform_8, window_bounds = array<i64: 32, 104>}, {pipeline_mode = #tpu.pipeline_mode<synchronous>, transform_indices = @transform_9, window_bounds = array<i64: 1, 104>}, {transform_indices = @transform_10, window_bounds = array<i64: 256, 104>}]} {
    %c0 = arith.constant 0 : index
    %c0_0 = arith.constant 0 : index
    %0 = vector.load %arg1[%c0, %c0_0] : memref<256x32xf32, #tpu.memory_space<vmem>>, vector<256x32xf32>
    %c0_1 = arith.constant 0 : index
    %c0_2 = arith.constant 0 : index
    %1 = vector.load %arg3[%c0_1, %c0_2] : memref<2x32xf32, #tpu.memory_space<vmem>>, vector<1x32xf32>
    %2 = vector.broadcast %1 : vector<1x32xf32> to vector<256x32xf32>
    %3 = arith.subf %0, %2 : vector<256x32xf32>
    %c1 = arith.constant 1 : index
    %c0_3 = arith.constant 0 : index
    %4 = vector.load %arg3[%c1, %c0_3] : memref<2x32xf32, #tpu.memory_space<vmem>>, vector<1x32xf32>
    %5 = vector.broadcast %4 : vector<1x32xf32> to vector<256x32xf32>
    %6 = arith.mulf %3, %5 : vector<256x32xf32>
    %c0_4 = arith.constant 0 : index
    %c0_5 = arith.constant 0 : index
    %7 = vector.load %arg4[%c0_4, %c0_5] : memref<1x32xf32, #tpu.memory_space<vmem>>, vector<1x32xf32>
    %8 = vector.broadcast %7 : vector<1x32xf32> to vector<256x32xf32>
    %9 = arith.mulf %6, %8 : vector<256x32xf32>
    %c0_6 = arith.constant 0 : index
    %c0_7 = arith.constant 0 : index
    %10 = vector.load %arg5[%c0_6, %c0_7] : memref<1x32xf32, #tpu.memory_space<vmem>>, vector<1x32xf32>
    %11 = vector.broadcast %10 : vector<1x32xf32> to vector<256x32xf32>
    %12 = arith.addf %9, %11 : vector<256x32xf32>
    %c0_8 = arith.constant 0 : index
    %c0_9 = arith.constant 0 : index
    %13 = vector.load %arg7[%c0_8, %c0_9] : memref<1x32xf32, #tpu.memory_space<vmem>>, vector<1x32xf32>
    %14 = vector.broadcast %13 : vector<1x32xf32> to vector<256x32xf32>
    %15 = arith.mulf %12, %14 : vector<256x32xf32>
    %cst = arith.constant dense<0.000000e+00> : vector<256xf32>
    %16 = vector.multi_reduction <add>, %15, %cst [1] : vector<256x32xf32> to vector<256xf32>
    %17 = vector.shape_cast %16 : vector<256xf32> to vector<256x1xf32>
    %c0_10 = arith.constant 0 : index
    %c0_11 = arith.constant 0 : index
    %18 = vector.load %arg8[%c0_10, %c0_11] : memref<1x1xf32, #tpu.memory_space<vmem>>, vector<1x1xf32>
    %19 = vector.broadcast %18 : vector<1x1xf32> to vector<256x1xf32>
    %20 = arith.addf %17, %19 : vector<256x1xf32>
    %c0_12 = arith.constant 0 : index
    %c0_13 = arith.constant 0 : index
    %21 = vector.load %arg6[%c0_12, %c0_13] : memref<1x32xf32, #tpu.memory_space<vmem>>, vector<1x32xf32>
    %22 = arith.negf %20 : vector<256x1xf32>
    %23 = math.exp %22 : vector<256x1xf32>
    %cst_14 = arith.constant 1.000000e+00 : f32
    %24 = vector.broadcast %cst_14 : f32 to vector<256x1xf32>
    %25 = arith.addf %24, %23 : vector<256x1xf32>
    %26 = arith.divf %24, %25 : vector<256x1xf32>
    %27 = vector.broadcast %21 : vector<1x32xf32> to vector<256x32xf32>
    %28 = vector.broadcast %26 : vector<256x1xf32> to vector<256x32xf32>
    %29 = arith.addf %27, %28 : vector<256x32xf32>
    %30 = arith.mulf %12, %29 : vector<256x32xf32>
    %c0_15 = arith.constant 0 : index
    %c0_16 = arith.constant 0 : index
    %31 = vector.load %arg2[%c0_15, %c0_16] : memref<256x32xf32, #tpu.memory_space<vmem>>, vector<256x32xf32>
    %32 = arith.addf %30, %31 : vector<256x32xf32>
    %c0_17 = arith.constant 0 : index
    %c0_18 = arith.constant 0 : index
    %33 = vector.load %arg9[%c0_17, %c0_18] : memref<32x104xf32, #tpu.memory_space<vmem>>, vector<32x104xf32>
    %cst_19 = arith.constant dense<0.000000e+00> : vector<256x104xf32>
    %34 = tpu.matmul %32, %33, %cst_19 {dimension_numbers = #tpu.dot_dimension_numbers<[1], [0], [0], [1], [0, 0, 1, 1], [], []>} : vector<256x32xf32>, vector<32x104xf32>, vector<256x104xf32> -> vector<256x104xf32>
    %c0_20 = arith.constant 0 : index
    %c0_21 = arith.constant 0 : index
    %35 = vector.load %arg10[%c0_20, %c0_21] : memref<1x104xf32, #tpu.memory_space<vmem>>, vector<1x104xf32>
    %36 = vector.broadcast %35 : vector<1x104xf32> to vector<256x104xf32>
    %37 = arith.addf %34, %36 : vector<256x104xf32>
    %c0_22 = arith.constant 0 : index
    %c0_23 = arith.constant 0 : index
    %38 = vector.load %arg11[%c0_22, %c0_23] : memref<256x104xf32, #tpu.memory_space<vmem>>, vector<256x104xf32>
    tpu.vector_store %arg11[%c0_22, %c0_23], %37 {strides = array<i32>} : memref<256x104xf32, #tpu.memory_space<vmem>>, vector<256x104xf32>,
    return
  }
  func.func @transform_0(%arg0: i32) -> (i32, i32) {
    %c0_i32 = arith.constant 0 : i32
    %c0_i32_0 = arith.constant 0 : i32
    return %arg0, %c0_i32 : i32, i32
  }
  func.func @transform_1(%arg0: i32) -> (i32, i32) {
    %c0_i32 = arith.constant 0 : i32
    %c0_i32_0 = arith.constant 0 : i32
    return %arg0, %c0_i32 : i32, i32
  }
  func.func @transform_2(%arg0: i32) -> (i32, i32) {
    %c0_i32 = arith.constant 0 : i32
    %c0_i32_0 = arith.constant 0 : i32
    %c0_i32_1 = arith.constant 0 : i32
    return %c0_i32, %c0_i32_0 : i32, i32
  }
  func.func @transform_3(%arg0: i32) -> (i32, i32) {
    %c0_i32 = arith.constant 0 : i32
    %c0_i32_0 = arith.constant 0 : i32
    %c0_i32_1 = arith.constant 0 : i32
    return %c0_i32, %c0_i32_0 : i32, i32
  }
  func.func @transform_4(%arg0: i32) -> (i32, i32) {
    %c0_i32 = arith.constant 0 : i32
    %c0_i32_0 = arith.constant 0 : i32
    %c0_i32_1 = arith.constant 0 : i32
    return %c0_i32, %c0_i32_0 : i32, i32
  }
  func.func @transform_5(%arg0: i32) -> (i32, i32) {
    %c0_i32 = arith.constant 0 : i32
    %c0_i32_0 = arith.constant 0 : i32
    %c0_i32_1 = arith.constant 0 : i32
    return %c0_i32, %c0_i32_0 : i32, i32
  }
  func.func @transform_6(%arg0: i32) -> (i32, i32) {
    %c0_i32 = arith.constant 0 : i32
    %c0_i32_0 = arith.constant 0 : i32
    %c0_i32_1 = arith.constant 0 : i32
    return %c0_i32, %c0_i32_0 : i32, i32
  }
  func.func @transform_7(%arg0: i32) -> (i32, i32) {
    %c0_i32 = arith.constant 0 : i32
    %c0_i32_0 = arith.constant 0 : i32
    %c0_i32_1 = arith.constant 0 : i32
    return %c0_i32, %c0_i32_0 : i32, i32
  }
  func.func @transform_8(%arg0: i32) -> (i32, i32) {
    %c0_i32 = arith.constant 0 : i32
    %c0_i32_0 = arith.constant 0 : i32
    %c0_i32_1 = arith.constant 0 : i32
    return %c0_i32, %c0_i32_0 : i32, i32
  }
  func.func @transform_9(%arg0: i32) -> (i32, i32) {
    %c0_i32 = arith.constant 0 : i32
    %c0_i32_0 = arith.constant 0 : i32
    %c0_i32_1 = arith.constant 0 : i32
    return %c0_i32, %c0_i32_0 : i32, i32
  }
  func.func @transform_10(%arg0: i32) -> (i32, i32) {
    %c0_i32 = arith.constant 0 : i32
    %c0_i32_0 = arith.constant 0 : i32
    return %arg0, %c0_i32 : i32, i32
  }
}

</mosaic_0001>

<llo_original>
// kernel: custom-call
$region0: #{custom-call}
  %s0 = inlined_call_operand.vmem [shape: f32[16,32], index: 0, kind: output, shape index: {}]

// kernel: custom-call.3
$region0: #{custom-call.3}
  %s0 = inlined_call_operand.vmem [shape: f32[1,16], index: 0, kind: output, shape index: {}]

// kernel: oracle_forward.35
$region0: #{oracle_forward.35}
  #allocation0 [shape = 'u32[]', space=smem, size = 0x4, offset = 0x4, fixed_abs, tag = 'smem constant byte address 0x4 - core index']
  #allocation1 [shape = 'u32[144,128]{1,0:T(1,128)}', space=vmem, size = 0x12000, scoped, tag = 'internal scratch']
  %s0 = inlined_call_operand.hbm [shape: f32[256,32], index: 0, kind: input, shape index: {}]
  %s1 = inlined_call_operand.hbm [shape: f32[2,32], index: 1, kind: input, shape index: {}]
  %s2 = inlined_call_operand.hbm [shape: f32[1,32], index: 2, kind: input, shape index: {}]
  %s3 = inlined_call_operand.hbm [shape: f32[1,32], index: 3, kind: input, shape index: {}]
  %s4 = inlined_call_operand.hbm [shape: f32[256,32], index: 4, kind: output, shape index: {}]
  %s5 = sld [smem:[#allocation0]]
  $region42: #{oracle_forward.35} parent=0
    _
  %s7 = ssub.s32 1, %s5
  %s8 = scalar_select 0, %s7, %s5
  $region1: #{oracle_forward.35} parent=0
    #allocation2 [shape = 'u8[131072]{0}', space=vmem, size = 0x20000, scoped, tag = 'input window, operand 0, single buffered']
    #allocation3 [shape = 's32[1]{0}', space=sflag, size = 0x4, scoped, tag = 'scoped memory for oracle_forward.35']
    #allocation4 [shape = 's32[1]{0}', space=sflag, size = 0x4, scoped, tag = 'scoped memory for oracle_forward.35']
    #allocation5 [shape = 'u8[1024]{0}', space=vmem, size = 0x400, scoped, tag = 'input window, operand 1, single buffered']
    #allocation6 [shape = 's32[1]{0}', space=sflag, size = 0x4, scoped, tag = 'scoped memory for oracle_forward.35']
    #allocation7 [shape = 'u8[512]{0}', space=vmem, size = 0x400, scoped, tag = 'input window, operand 2, single buffered']
    #allocation8 [shape = 'u8[512]{0}', space=vmem, size = 0x400, scoped, tag = 'input window, operand 3, single buffered']
    #allocation9 [shape = 's32[1]{0}', space=sflag, size = 0x4, scoped, tag = 'scoped memory for oracle_forward.35']
    #allocation10 [shape = 'u8[131072]{0}', space=vmem, size = 0x20000, scoped, tag = 'output window, operand 0, single buffered']
    %9 = vsyncpa [#allocation3], 0
    %10 = vsyncpa [#allocation6], 0
    %11 = vsyncpa [#allocation9], 0
    %12 = vsyncpa [#allocation4], 0
    // Predicated region
    $region2: #{oracle_forward.35} parent=1 // pred_check
      _
    $region3: #{oracle_forward.35} parent=1 // pred_check_branch
      %14 = sbr.rel (0) target = $region5
    $region4: #{oracle_forward.35} parent=1 // pred_region
      %s16 = ssub.s32 4096, 4096
      %17 = vsyncadd [#allocation3], %s16
      %s18 = sshll.u32 [#allocation2], 4
      %s19 = int_to_ptr.vmem [resolvable:$true] %s18
      %24 = dma.hbm_to_vmem [thread:$0]  %s0, 4096, %s19, [#allocation3], 128, 128, 8
    $region5: #{oracle_forward.35} parent=1 // pred_fallthru
      _
    // Predicated region
    $region6: #{oracle_forward.35} parent=1 // pred_check
      _
    $region7: #{oracle_forward.35} parent=1 // pred_check_branch
      %26 = sbr.rel (0) target = $region9
    $region8: #{oracle_forward.35} parent=1 // pred_region
      %s28 = ssub.s32 32, 32
      %29 = vsyncadd [#allocation6], %s28
      %s31 = sshll.u32 [#allocation5], 4
      %s32 = int_to_ptr.vmem [resolvable:$true] %s31
      %34 = dma.hbm_to_vmem [thread:$0]  %s1, 32, %s32, [#allocation6]
    $region9: #{oracle_forward.35} parent=1 // pred_fallthru
      _
    // Predicated region
    $region10: #{oracle_forward.35} parent=1 // pred_check
      _
    $region11: #{oracle_forward.35} parent=1 // pred_check_branch
      %36 = sbr.rel (0) target = $region13
    $region12: #{oracle_forward.35} parent=1 // pred_region
      %s38 = ssub.s32 16, 16
      %39 = vsyncadd [#allocation6], %s38
      %s41 = sshll.u32 [#allocation7], 4
      %s42 = int_to_ptr.vmem [resolvable:$true] %s41
      %44 = dma.hbm_to_vmem [thread:$0]  %s2, 16, %s42, [#allocation6]
    $region13: #{oracle_forward.35} parent=1 // pred_fallthru
      _
    // Predicated region
    $region14: #{oracle_forward.35} parent=1 // pred_check
      _
    $region15: #{oracle_forward.35} parent=1 // pred_check_branch
      %46 = sbr.rel (0) target = $region17
    $region16: #{oracle_forward.35} parent=1 // pred_region
      %s48 = ssub.s32 16, 16
      %49 = vsyncadd [#allocation9], %s48
      %s51 = sshll.u32 [#allocation8], 4
      %s52 = int_to_ptr.vmem [resolvable:$true] %s51
      %54 = dma.hbm_to_vmem [thread:$0]  %s3, 16, %s52, [#allocation9]
    $region17: #{oracle_forward.35} parent=1 // pred_fallthru
      _
    // Predicated region
    $region18: #{oracle_forward.35} parent=1 // pred_check
      _
    $region19: #{oracle_forward.35} parent=1 // pred_check_branch
      %56 = sbr.rel (0) target = $region21
    $region20: #{oracle_forward.35} parent=1 // pred_region
      %57 = dma.done [#allocation3], 4096
    $region21: #{oracle_forward.35} parent=1 // pred_fallthru
      _
    // Predicated region
    $region22: #{oracle_forward.35} parent=1 // pred_check
      _
    $region23: #{oracle_forward.35} parent=1 // pred_check_branch
      %59 = sbr.rel (0) target = $region25
    $region24: #{oracle_forward.35} parent=1 // pred_region
      %60 = dma.done [#allocation6], 32
    $region25: #{oracle_forward.35} parent=1 // pred_fallthru
      _
    // Predicated region
    $region26: #{oracle_forward.35} parent=1 // pred_check
      _
    $region27: #{oracle_forward.35} parent=1 // pred_check_branch
      %62 = sbr.rel (0) target = $region29
    $region28: #{oracle_forward.35} parent=1 // pred_region
      %63 = dma.done [#allocation6], 16
    $region29: #{oracle_forward.35} parent=1 // pred_fallthru
      _
    // Predicated region
    $region30: #{oracle_forward.35} parent=1 // pred_check
      _
    $region31: #{oracle_forward.35} parent=1 // pred_check_branch
      %65 = sbr.rel (0) target = $region33
    $region32: #{oracle_forward.35} parent=1 // pred_region
      %66 = dma.done [#allocation9], 16
    $region33: #{oracle_forward.35} parent=1 // pred_fallthru
      _
    %v67 = vld [vmem:[#allocation2] sm:$0xff]
    %v68 = vld [vmem:[#allocation2 + $0x8] sm:$0xff]
    %v69 = vld [vmem:[#allocation2 + $0x10] sm:$0xff]
    %v70 = vld [vmem:[#allocation2 + $0x18] sm:$0xff]
    %v71 = vld [vmem:[#allocation2 + $0x20] sm:$0xff]
    %v72 = vld [vmem:[#allocation2 + $0x28] sm:$0xff]
    %v73 = vld [vmem:[#allocation2 + $0x30] sm:$0xff]
    %v74 = vld [vmem:[#allocation2 + $0x38] sm:$0xff]
    %v75 = vld [vmem:[#allocation2 + $0x40] sm:$0xff]
    %v76 = vld [vmem:[#allocation2 + $0x48] sm:$0xff]
    %v77 = vld [vmem:[#allocation2 + $0x50] sm:$0xff]
    %v78 = vld [vmem:[#allocation2 + $0x58] sm:$0xff]
    %v79 = vld [vmem:[#allocation2 + $0x60] sm:$0xff]
    %v80 = vld [vmem:[#allocation2 + $0x68] sm:$0xff]
    %v81 = vld [vmem:[#allocation2 + $0x70] sm:$0xff]
    %v82 = vld [vmem:[#allocation2 + $0x78] sm:$0xff]
    %v83 = vld [vmem:[#allocation2 + $0x80] sm:$0xff]
    %v84 = vld [vmem:[#allocation2 + $0x88] sm:$0xff]
    %v85 = vld [vmem:[#allocation2 + $0x90] sm:$0xff]
    %v86 = vld [vmem:[#allocation2 + $0x98] sm:$0xff]
    %v87 = vld [vmem:[#allocation2 + $0xa0] sm:$0xff]
    %v88 = vld [vmem:[#allocation2 + $0xa8] sm:$0xff]
    %v89 = vld [vmem:[#allocation2 + $0xb0] sm:$0xff]
    %v90 = vld [vmem:[#allocation2 + $0xb8] sm:$0xff]
    %v91 = vld [vmem:[#allocation2 + $0xc0] sm:$0xff]
    %v92 = vld [vmem:[#allocation2 + $0xc8] sm:$0xff]
    %v93 = vld [vmem:[#allocation2 + $0xd0] sm:$0xff]
    %v94 = vld [vmem:[#allocation2 + $0xd8] sm:$0xff]
    %v95 = vld [vmem:[#allocation2 + $0xe0] sm:$0xff]
    %v96 = vld [vmem:[#allocation2 + $0xe8] sm:$0xff]
    %v97 = vld [vmem:[#allocation2 + $0xf0] sm:$0xff]
    %v98 = vld [vmem:[#allocation2 + $0xf8] sm:$0xff]
    %v99 = vld [vmem:[#allocation5] sm:$0x1]
    %v100 = vlaneseq
    %v101 = vshrl.u32 %v100, 7
    %v102 = vsub.s32 0, %v101
    %v103 = vrot.slane %v99, %v102
    %v104 = vsub.f32 %v67, %v103
    %v105 = vsub.f32 %v68, %v103
    %v106 = vsub.f32 %v69, %v103
    %v107 = vsub.f32 %v70, %v103
    %v108 = vsub.f32 %v71, %v103
    %v109 = vsub.f32 %v72, %v103
    %v110 = vsub.f32 %v73, %v103
    %v111 = vsub.f32 %v74, %v103
    %v112 = vsub.f32 %v75, %v103
    %v113 = vsub.f32 %v76, %v103
    %v114 = vsub.f32 %v77, %v103
    %v115 = vsub.f32 %v78, %v103
    %v116 = vsub.f32 %v79, %v103
    %v117 = vsub.f32 %v80, %v103
    %v118 = vsub.f32 %v81, %v103
    %v119 = vsub.f32 %v82, %v103
    %v120 = vsub.f32 %v83, %v103
    %v121 = vsub.f32 %v84, %v103
    %v122 = vsub.f32 %v85, %v103
    %v123 = vsub.f32 %v86, %v103
    %v124 = vsub.f32 %v87, %v103
    %v125 = vsub.f32 %v88, %v103
    %v126 = vsub.f32 %v89, %v103
    %v127 = vsub.f32 %v90, %v103
    %v128 = vsub.f32 %v91, %v103
    %v129 = vsub.f32 %v92, %v103
    %v130 = vsub.f32 %v93, %v103
    %v131 = vsub.f32 %v94, %v103
    %v132 = vsub.f32 %v95, %v103
    %v133 = vsub.f32 %v96, %v103
    %v134 = vsub.f32 %v97, %v103
    %v135 = vsub.f32 %v98, %v103
    %v136 = vld [vmem:[#allocation5 + $0x1] sm:$0x1]
    %v137 = vlaneseq
    %v138 = vshrl.u32 %v137, 7
    %v139 = vsub.s32 0, %v138
    %v140 = vrot.slane %v136, %v139
    %v141 = vmul.f32 %v104, %v140
    %v142 = vmul.f32 %v105, %v140
    %v143 = vmul.f32 %v106, %v140
    %v144 = vmul.f32 %v107, %v140
    %v145 = vmul.f32 %v108, %v140
    %v146 = vmul.f32 %v109, %v140
    %v147 = vmul.f32 %v110, %v140
    %v148 = vmul.f32 %v111, %v140
    %v149 = vmul.f32 %v112, %v140
    %v150 = vmul.f32 %v113, %v140
    %v151 = vmul.f32 %v114, %v140
    %v152 = vmul.f32 %v115, %v140
    %v153 = vmul.f32 %v116, %v140
    %v154 = vmul.f32 %v117, %v140
    %v155 = vmul.f32 %v118, %v140
    %v156 = vmul.f32 %v119, %v140
    %v157 = vmul.f32 %v120, %v140
    %v158 = vmul.f32 %v121, %v140
    %v159 = vmul.f32 %v122, %v140
    %v160 = vmul.f32 %v123, %v140
    %v161 = vmul.f32 %v124, %v140
    %v162 = vmul.f32 %v125, %v140
    %v163 = vmul.f32 %v126, %v140
    %v164 = vmul.f32 %v127, %v140
    %v165 = vmul.f32 %v128, %v140
    %v166 = vmul.f32 %v129, %v140
    %v167 = vmul.f32 %v130, %v140
    %v168 = vmul.f32 %v131, %v140
    %v169 = vmul.f32 %v132, %v140
    %v170 = vmul.f32 %v133, %v140
    %v171 = vmul.f32 %v134, %v140
    %v172 = vmul.f32 %v135, %v140
    %v173 = vld [vmem:[#allocation7] sm:$0x1]
    %v175 = vlaneseq
    %v176 = vshrl.u32 %v175, 7
    %v177 = vsub.s32 0, %v176
    %v178 = vrot.slane %v173, %v177
    %v180 = vmul.f32 %v141, %v178
    %v181 = vmul.f32 %v142, %v178
    %v182 = vmul.f32 %v143, %v178
    %v183 = vmul.f32 %v144, %v178
    %v184 = vmul.f32 %v145, %v178
    %v185 = vmul.f32 %v146, %v178
    %v186 = vmul.f32 %v147, %v178
    %v187 = vmul.f32 %v148, %v178
    %v188 = vmul.f32 %v149, %v178
    %v189 = vmul.f32 %v150, %v178
    %v190 = vmul.f32 %v151, %v178
    %v191 = vmul.f32 %v152, %v178
    %v192 = vmul.f32 %v153, %v178
    %v193 = vmul.f32 %v154, %v178
    %v194 = vmul.f32 %v155, %v178
    %v195 = vmul.f32 %v156, %v178
    %v196 = vmul.f32 %v157, %v178
    %v197 = vmul.f32 %v158, %v178
    %v198 = vmul.f32 %v159, %v178
    %v199 = vmul.f32 %v160, %v178
    %v200 = vmul.f32 %v161, %v178
    %v201 = vmul.f32 %v162, %v178
    %v202 = vmul.f32 %v163, %v178
    %v203 = vmul.f32 %v164, %v178
    %v204 = vmul.f32 %v165, %v178
    %v205 = vmul.f32 %v166, %v178
    %v206 = vmul.f32 %v167, %v178
    %v207 = vmul.f32 %v168, %v178
    %v208 = vmul.f32 %v169, %v178
    %v209 = vmul.f32 %v170, %v178
    %v210 = vmul.f32 %v171, %v178
    %v211 = vmul.f32 %v172, %v178
    %v212 = vld [vmem:[#allocation8] sm:$0x1]
    %v214 = vlaneseq
    %v215 = vshrl.u32 %v214, 7
    %v216 = vsub.s32 0, %v215
    %v217 = vrot.slane %v212, %v216
    %v219 = vadd.f32 %v180, %v217
    %v220 = vadd.f32 %v181, %v217
    %v221 = vadd.f32 %v182, %v217
    %v222 = vadd.f32 %v183, %v217
    %v223 = vadd.f32 %v184, %v217
    %v224 = vadd.f32 %v185, %v217
    %v225 = vadd.f32 %v186, %v217
    %v226 = vadd.f32 %v187, %v217
    %v227 = vadd.f32 %v188, %v217
    %v228 = vadd.f32 %v189, %v217
    %v229 = vadd.f32 %v190, %v217
    %v230 = vadd.f32 %v191, %v217
    %v231 = vadd.f32 %v192, %v217
    %v232 = vadd.f32 %v193, %v217
    %v233 = vadd.f32 %v194, %v217
    %v234 = vadd.f32 %v195, %v217
    %v235 = vadd.f32 %v196, %v217
    %v236 = vadd.f32 %v197, %v217
    %v237 = vadd.f32 %v198, %v217
    %v238 = vadd.f32 %v199, %v217
    %v239 = vadd.f32 %v200, %v217
    %v240 = vadd.f32 %v201, %v217
    %v241 = vadd.f32 %v202, %v217
    %v242 = vadd.f32 %v203, %v217
    %v243 = vadd.f32 %v204, %v217
    %v244 = vadd.f32 %v205, %v217
    %v245 = vadd.f32 %v206, %v217
    %v246 = vadd.f32 %v207, %v217
    %v247 = vadd.f32 %v208, %v217
    %v248 = vadd.f32 %v209, %v217
    %v249 = vadd.f32 %v210, %v217
    %v250 = vadd.f32 %v211, %v217
    %vm251 = vcmask 261120
    %252 = vst.msk [vmem:[#allocation10] sm:$0xff] %vm251, %v219
    %253 = vst.msk [vmem:[#allocation10 + $0x8] sm:$0xff] %vm251, %v220
    %254 = vst.msk [vmem:[#allocation10 + $0x10] sm:$0xff] %vm251, %v221
    %255 = vst.msk [vmem:[#allocation10 + $0x18] sm:$0xff] %vm251, %v222
    %256 = vst.msk [vmem:[#allocation10 + $0x20] sm:$0xff] %vm251, %v223
    %257 = vst.msk [vmem:[#allocation10 + $0x28] sm:$0xff] %vm251, %v224
    %258 = vst.msk [vmem:[#allocation10 + $0x30] sm:$0xff] %vm251, %v225
    %259 = vst.msk [vmem:[#allocation10 + $0x38] sm:$0xff] %vm251, %v226
    %260 = vst.msk [vmem:[#allocation10 + $0x40] sm:$0xff] %vm251, %v227
    %261 = vst.msk [vmem:[#allocation10 + $0x48] sm:$0xff] %vm251, %v228
    %262 = vst.msk [vmem:[#allocation10 + $0x50] sm:$0xff] %vm251, %v229
    %263 = vst.msk [vmem:[#allocation10 + $0x58] sm:$0xff] %vm251, %v230
    %264 = vst.msk [vmem:[#allocation10 + $0x60] sm:$0xff] %vm251, %v231
    %265 = vst.msk [vmem:[#allocation10 + $0x68] sm:$0xff] %vm251, %v232
    %266 = vst.msk [vmem:[#allocation10 + $0x70] sm:$0xff] %vm251, %v233
    %267 = vst.msk [vmem:[#allocation10 + $0x78] sm:$0xff] %vm251, %v234
    %268 = vst.msk [vmem:[#allocation10 + $0x80] sm:$0xff] %vm251, %v235
    %269 = vst.msk [vmem:[#allocation10 + $0x88] sm:$0xff] %vm251, %v236
    %270 = vst.msk [vmem:[#allocation10 + $0x90] sm:$0xff] %vm251, %v237
    %271 = vst.msk [vmem:[#allocation10 + $0x98] sm:$0xff] %vm251, %v238
    %272 = vst.msk [vmem:[#allocation10 + $0xa0] sm:$0xff] %vm251, %v239
    %273 = vst.msk [vmem:[#allocation10 + $0xa8] sm:$0xff] %vm251, %v240
    %274 = vst.msk [vmem:[#allocation10 + $0xb0] sm:$0xff] %vm251, %v241
    %275 = vst.msk [vmem:[#allocation10 + $0xb8] sm:$0xff] %vm251, %v242
    %276 = vst.msk [vmem:[#allocation10 + $0xc0] sm:$0xff] %vm251, %v243
    %277 = vst.msk [vmem:[#allocation10 + $0xc8] sm:$0xff] %vm251, %v244
    %278 = vst.msk [vmem:[#allocation10 + $0xd0] sm:$0xff] %vm251, %v245
    %279 = vst.msk [vmem:[#allocation10 + $0xd8] sm:$0xff] %vm251, %v246
    %280 = vst.msk [vmem:[#allocation10 + $0xe0] sm:$0xff] %vm251, %v247
    %281 = vst.msk [vmem:[#allocation10 + $0xe8] sm:$0xff] %vm251, %v248
    %282 = vst.msk [vmem:[#allocation10 + $0xf0] sm:$0xff] %vm251, %v249
    %283 = vst.msk [vmem:[#allocation10 + $0xf8] sm:$0xff] %vm251, %v250
    // Predicated region
    $region34: #{oracle_forward.35} parent=1 // pred_check
      _
    $region35: #{oracle_forward.35} parent=1 // pred_check_branch
      %285 = sbr.rel (0) target = $region37
    $region36: #{oracle_forward.35} parent=1 // pred_region
      %s287 = ssub.s32 4096, 4096
      %288 = vsyncadd [#allocation4], %s287
      %s289 = sshll.u32 [#allocation10], 4
      %s290 = int_to_ptr.vmem [resolvable:$true] %s289
      %295 = dma.vmem_to_hbm [thread:$0]  %s290, 4096, %s4, [#allocation4], 128, 128, 8
    $region37: #{oracle_forward.35} parent=1 // pred_fallthru
      _
    // Predicated region
    $region38: #{oracle_forward.35} parent=1 // pred_check
      _
    $region39: #{oracle_forward.35} parent=1 // pred_check_branch
      %297 = sbr.rel (0) target = $region41
    $region40: #{oracle_forward.35} parent=1 // pred_region
      %298 = dma.done [#allocation4], 4096
    $region41: #{oracle_forward.35} parent=1 // pred_fallthru
      _
    %299 = vsyncpa [#allocation3], 1
    %300 = vsyncpa [#allocation6], 1
    %301 = vsyncpa [#allocation9], 1
    %302 = vsyncpa [#allocation4], 1

// kernel: oracle_forward.34
$region0: #{oracle_forward.34}
  #allocation0 [shape = 'u32[]', space=smem, size = 0x4, offset = 0x4, fixed_abs, tag = 'smem constant byte address 0x4 - core index']
  #allocation1 [shape = 'u32[144,128]{1,0:T(1,128)}', space=vmem, size = 0x12000, scoped, tag = 'internal scratch']
  %s0 = inlined_call_operand.hbm [shape: f32[256,474], index: 0, kind: input, shape index: {}]
  %s1 = inlined_call_operand.hbm [shape: bf16[474,96], index: 1, kind: input, shape index: {}]
  %s2 = inlined_call_operand.hbm [shape: f32[1,96], index: 2, kind: input, shape index: {}]
  %s3 = inlined_call_operand.hbm [shape: f32[256,32], index: 3, kind: output, shape index: {0}]
  %s4 = inlined_call_operand.hbm [shape: f32[1,2,32], index: 4, kind: output, shape index: {1}]
  %5 = xla_tuple %s3, %s4
  %s6 = sld [smem:[#allocation0]]
  $region42: #{oracle_forward.34} parent=0
    _
  %s8 = ssub.s32 1, %s6
  %s9 = scalar_select 0, %s8, %s6
  $region1: #{oracle_forward.34} parent=0
    #allocation2 [shape = 'u8[524288]{0}', space=vmem, size = 0x80000, scoped, tag = 'input window, operand 0, single buffered']
    #allocation3 [shape = 's32[1]{0}', space=sflag, size = 0x4, scoped, tag = 'scoped memory for oracle_forward.34']
    #allocation4 [shape = 's32[1]{0}', space=sflag, size = 0x4, scoped, tag = 'scoped memory for oracle_forward.34']
    #allocation5 [shape = 'u8[122880]{0}', space=vmem, size = 0x1e000, scoped, tag = 'input window, operand 1, single buffered']
    #allocation6 [shape = 's32[1]{0}', space=sflag, size = 0x4, scoped, tag = 'scoped memory for oracle_forward.34']
    #allocation7 [shape = 'u8[512]{0}', space=vmem, size = 0x400, scoped, tag = 'input window, operand 2, single buffered']
    #allocation8 [shape = 'u8[131072]{0}', space=vmem, size = 0x20000, scoped, tag = 'output window, operand 0, single buffered']
    #allocation9 [shape = 'u8[1024]{0}', space=vmem, size = 0x400, scoped, tag = 'output window, operand 1, single buffered']
    #allocation10 [shape = 's32[1]{0}', space=sflag, size = 0x4, scoped, tag = 'scoped memory for oracle_forward.34']
    %10 = vsyncpa [#allocation3], 0
    %11 = vsyncpa [#allocation6], 0
    %12 = vsyncpa [#allocation4], 0
    %13 = vsyncpa [#allocation10], 0
    // Predicated region
    $region2: #{oracle_forward.34} parent=1 // pred_check
      _
    $region3: #{oracle_forward.34} parent=1 // pred_check_branch
      %15 = sbr.rel (0) target = $region5
    $region4: #{oracle_forward.34} parent=1 // pred_region
      %s17 = ssub.s32 16384, 16384
      %18 = vsyncadd [#allocation3], %s17
      %s19 = sshll.u32 [#allocation2], 4
      %s20 = int_to_ptr.vmem [resolvable:$true] %s19
      %25 = dma.hbm_to_vmem [thread:$0]  %s0, 16384, %s20, [#allocation3], 512, 512, 32
    $region5: #{oracle_forward.34} parent=1 // pred_fallthru
      _
    // Predicated region
    $region6: #{oracle_forward.34} parent=1 // pred_check
      _
    $region7: #{oracle_forward.34} parent=1 // pred_check_branch
      %27 = sbr.rel (0) target = $region9
    $region8: #{oracle_forward.34} parent=1 // pred_region
      %s29 = ssub.s32 3840, 3840
      %30 = vsyncadd [#allocation6], %s29
      %s31 = sshll.u32 [#allocation5], 4
      %s32 = int_to_ptr.vmem [resolvable:$true] %s31
      %37 = dma.hbm_to_vmem [thread:$0]  %s1, 3840, %s32, [#allocation6], 64, 64, 4
    $region9: #{oracle_forward.34} parent=1 // pred_fallthru
      _
    // Predicated region
    $region10: #{oracle_forward.34} parent=1 // pred_check
      _
    $region11: #{oracle_forward.34} parent=1 // pred_check_branch
      %39 = sbr.rel (0) target = $region13
    $region12: #{oracle_forward.34} parent=1 // pred_region
      %s41 = ssub.s32 16, 16
      %42 = vsyncadd [#allocation6], %s41
      %s44 = sshll.u32 [#allocation7], 4
      %s45 = int_to_ptr.vmem [resolvable:$true] %s44
      %47 = dma.hbm_to_vmem [thread:$0]  %s2, 16, %s45, [#allocation6]
    $region13: #{oracle_forward.34} parent=1 // pred_fallthru
      _
    // Predicated region
    $region14: #{oracle_forward.34} parent=1 // pred_check
      _
    $region15: #{oracle_forward.34} parent=1 // pred_check_branch
      %49 = sbr.rel (0) target = $region17
    $region16: #{oracle_forward.34} parent=1 // pred_region
      %50 = dma.done [#allocation3], 16384
    $region17: #{oracle_forward.34} parent=1 // pred_fallthru
      _
    // Predicated region
    $region18: #{oracle_forward.34} parent=1 // pred_check
      _
    $region19: #{oracle_forward.34} parent=1 // pred_check_branch
      %52 = sbr.rel (0) target = $region21
    $region20: #{oracle_forward.34} parent=1 // pred_region
      %53 = dma.done [#allocation6], 3840
    $region21: #{oracle_forward.34} parent=1 // pred_fallthru
      _
    // Predicated region
    $region22: #{oracle_forward.34} parent=1 // pred_check
      _
    $region23: #{oracle_forward.34} parent=1 // pred_check_branch
      %55 = sbr.rel (0) target = $region25
    $region24: #{oracle_forward.34} parent=1 // pred_region
      %56 = dma.done [#allocation6], 16
    $region25: #{oracle_forward.34} parent=1 // pred_fallthru
      _
    %v58 = vld [vmem:[#allocation2] sm:$0xff]
    %v59 = vld [vmem:[#allocation2 + $0x8] sm:$0xff]
    %v60 = vld [vmem:[#allocation2 + $0x10] sm:$0xff]
    %v61 = vld [vmem:[#allocation2 + $0x18] sm:$0xff]
    %v62 = vld [vmem:[#allocation2 + $0x20] sm:$0xff]
    %v63 = vld [vmem:[#allocation2 + $0x28] sm:$0xff]
    %v64 = vld [vmem:[#allocation2 + $0x30] sm:$0xff]
    %v65 = vld [vmem:[#allocation2 + $0x38] sm:$0xff]
    %v66 = vld [vmem:[#allocation2 + $0x40] sm:$0xff]
    %v67 = vld [vmem:[#allocation2 + $0x48] sm:$0xff]
    %v68 = vld [vmem:[#allocation2 + $0x50] sm:$0xff]
    %v69 = vld [vmem:[#allocation2 + $0x58] sm:$0xff]
    %v70 = vld [vmem:[#allocation2 + $0x60] sm:$0xff]
    %v71 = vld [vmem:[#allocation2 + $0x68] sm:$0xff]
    %v72 = vld [vmem:[#allocation2 + $0x70] sm:$0xff]
    %v73 = vld [vmem:[#allocation2 + $0x78] sm:$0xff]
    %v74 = vld [vmem:[#allocation2 + $0x80] sm:$0xff]
    %v75 = vld [vmem:[#allocation2 + $0x88] sm:$0xff]
    %v76 = vld [vmem:[#allocation2 + $0x90] sm:$0xff]
    %v77 = vld [vmem:[#allocation2 + $0x98] sm:$0xff]
    %v78 = vld [vmem:[#allocation2 + $0xa0] sm:$0xff]
    %v79 = vld [vmem:[#allocation2 + $0xa8] sm:$0xff]
    %v80 = vld [vmem:[#allocation2 + $0xb0] sm:$0xff]
    %v81 = vld [vmem:[#allocation2 + $0xb8] sm:$0xff]
    %v82 = vld [vmem:[#allocation2 + $0xc0] sm:$0xff]
    %v83 = vld [vmem:[#allocation2 + $0xc8] sm:$0xff]
    %v84 = vld [vmem:[#allocation2 + $0xd0] sm:$0xff]
    %v85 = vld [vmem:[#allocation2 + $0xd8] sm:$0xff]
    %v86 = vld [vmem:[#allocation2 + $0xe0] sm:$0xff]
    %v87 = vld [vmem:[#allocation2 + $0xe8] sm:$0xff]
    %v88 = vld [vmem:[#allocation2 + $0xf0] sm:$0xff]
    %v89 = vld [vmem:[#allocation2 + $0xf8] sm:$0xff]
    %v90 = vld [vmem:[#allocation2 + $0x100] sm:$0xff]
    %v91 = vld [vmem:[#allocation2 + $0x108] sm:$0xff]
    %v92 = vld [vmem:[#allocation2 + $0x110] sm:$0xff]
    %v93 = vld [vmem:[#allocation2 + $0x118] sm:$0xff]
    %v94 = vld [vmem:[#allocation2 + $0x120] sm:$0xff]
    %v95 = vld [vmem:[#allocation2 + $0x128] sm:$0xff]
    %v96 = vld [vmem:[#allocation2 + $0x130] sm:$0xff]
    %v97 = vld [vmem:[#allocation2 + $0x138] sm:$0xff]
    %v98 = vld [vmem:[#allocation2 + $0x140] sm:$0xff]
    %v99 = vld [vmem:[#allocation2 + $0x148] sm:$0xff]
    %v100 = vld [vmem:[#allocation2 + $0x150] sm:$0xff]
    %v101 = vld [vmem:[#allocation2 + $0x158] sm:$0xff]
    %v102 = vld [vmem:[#allocation2 + $0x160] sm:$0xff]
    %v103 = vld [vmem:[#allocation2 + $0x168] sm:$0xff]
    %v104 = vld [vmem:[#allocation2 + $0x170] sm:$0xff]
    %v105 = vld [vmem:[#allocation2 + $0x178] sm:$0xff]
    %v106 = vld [vmem:[#allocation2 + $0x180] sm:$0xff]
    %v107 = vld [vmem:[#allocation2 + $0x188] sm:$0xff]
    %v108 = vld [vmem:[#allocation2 + $0x190] sm:$0xff]
    %v109 = vld [vmem:[#allocation2 + $0x198] sm:$0xff]
    %v110 = vld [vmem:[#allocation2 + $0x1a0] sm:$0xff]
    %v111 = vld [vmem:[#allocation2 + $0x1a8] sm:$0xff]
    %v112 = vld [vmem:[#allocation2 + $0x1b0] sm:$0xff]
    %v113 = vld [vmem:[#allocation2 + $0x1b8] sm:$0xff]
    %v114 = vld [vmem:[#allocation2 + $0x1c0] sm:$0xff]
    %v115 = vld [vmem:[#allocation2 + $0x1c8] sm:$0xff]
    %v116 = vld [vmem:[#allocation2 + $0x1d0] sm:$0xff]
    %v117 = vld [vmem:[#allocation2 + $0x1d8] sm:$0xff]
    %v118 = vld [vmem:[#allocation2 + $0x1e0] sm:$0xff]
    %v119 = vld [vmem:[#allocation2 + $0x1e8] sm:$0xff]
    %v120 = vld [vmem:[#allocation2 + $0x1f0] sm:$0xff]
    %v121 = vld [vmem:[#allocation2 + $0x1f8] sm:$0xff]
    %v122 = vld [vmem:[#allocation2 + $0x200] sm:$0xff]
    %v123 = vld [vmem:[#allocation2 + $0x208] sm:$0xff]
    %v124 = vld [vmem:[#allocation2 + $0x210] sm:$0xff]
    %v125 = vld [vmem:[#allocation2 + $0x218] sm:$0xff]
    %v126 = vld [vmem:[#allocation2 + $0x220] sm:$0xff]
    %v127 = vld [vmem:[#allocation2 + $0x228] sm:$0xff]
    %v128 = vld [vmem:[#allocation2 + $0x230] sm:$0xff]
    %v129 = vld [vmem:[#allocation2 + $0x238] sm:$0xff]
    %v130 = vld [vmem:[#allocation2 + $0x240] sm:$0xff]
    %v131 = vld [vmem:[#allocation2 + $0x248] sm:$0xff]
    %v132 = vld [vmem:[#allocation2 + $0x250] sm:$0xff]
    %v133 = vld [vmem:[#allocation2 + $0x258] sm:$0xff]
    %v134 = vld [vmem:[#allocation2 + $0x260] sm:$0xff]
    %v135 = vld [vmem:[#allocation2 + $0x268] sm:$0xff]
    %v136 = vld [vmem:[#allocation2 + $0x270] sm:$0xff]
    %v137 = vld [vmem:[#allocation2 + $0x278] sm:$0xff]
    %v138 = vld [vmem:[#allocation2 + $0x280] sm:$0xff]
    %v139 = vld [vmem:[#allocation2 + $0x288] sm:$0xff]
    %v140 = vld [vmem:[#allocation2 + $0x290] sm:$0xff]
    %v141 = vld [vmem:[#allocation2 + $0x298] sm:$0xff]
    %v142 = vld [vmem:[#allocation2 + $0x2a0] sm:$0xff]
    %v143 = vld [vmem:[#allocation2 + $0x2a8] sm:$0xff]
    %v144 = vld [vmem:[#allocation2 + $0x2b0] sm:$0xff]
    %v145 = vld [vmem:[#allocation2 + $0x2b8] sm:$0xff]
    %v146 = vld [vmem:[#allocation2 + $0x2c0] sm:$0xff]
    %v147 = vld [vmem:[#allocation2 + $0x2c8] sm:$0xff]
    %v148 = vld [vmem:[#allocation2 + $0x2d0] sm:$0xff]
    %v149 = vld [vmem:[#allocation2 + $0x2d8] sm:$0xff]
    %v150 = vld [vmem:[#allocation2 + $0x2e0] sm:$0xff]
    %v151 = vld [vmem:[#allocation2 + $0x2e8] sm:$0xff]
    %v152 = vld [vmem:[#allocation2 + $0x2f0] sm:$0xff]
    %v153 = vld [vmem:[#allocation2 + $0x2f8] sm:$0xff]
    %v154 = vld [vmem:[#allocation2 + $0x300] sm:$0xff]
    %v155 = vld [vmem:[#allocation2 + $0x308] sm:$0xff]
    %v156 = vld [vmem:[#allocation2 + $0x310] sm:$0xff]
    %v157 = vld [vmem:[#allocation2 + $0x318] sm:$0xff]
    %v158 = vld [vmem:[#allocation2 + $0x320] sm:$0xff]
    %v159 = vld [vmem:[#allocation2 + $0x328] sm:$0xff]
    %v160 = vld [vmem:[#allocation2 + $0x330] sm:$0xff]
    %v161 = vld [vmem:[#allocation2 + $0x338] sm:$0xff]
    %v162 = vld [vmem:[#allocation2 + $0x340] sm:$0xff]
    %v163 = vld [vmem:[#allocation2 + $0x348] sm:$0xff]
    %v164 = vld [vmem:[#allocation2 + $0x350] sm:$0xff]
    %v165 = vld [vmem:[#allocation2 + $0x358] sm:$0xff]
    %v166 = vld [vmem:[#allocation2 + $0x360] sm:$0xff]
    %v167 = vld [vmem:[#allocation2 + $0x368] sm:$0xff]
    %v168 = vld [vmem:[#allocation2 + $0x370] sm:$0xff]
    %v169 = vld [vmem:[#allocation2 + $0x378] sm:$0xff]
    %v170 = vld [vmem:[#allocation2 + $0x380] sm:$0xff]
    %v171 = vld [vmem:[#allocation2 + $0x388] sm:$0xff]
    %v172 = vld [vmem:[#allocation2 + $0x390] sm:$0xff]
    %v173 = vld [vmem:[#allocation2 + $0x398] sm:$0xff]
    %v174 = vld [vmem:[#allocation2 + $0x3a0] sm:$0xff]
    %v175 = vld [vmem:[#allocation2 + $0x3a8] sm:$0xff]
    %v176 = vld [vmem:[#allocation2 + $0x3b0] sm:$0xff]
    %v177 = vld [vmem:[#allocation2 + $0x3b8] sm:$0xff]
    %v178 = vld [vmem:[#allocation2 + $0x3c0] sm:$0xff]
    %v179 = vld [vmem:[#allocation2 + $0x3c8] sm:$0xff]
    %v180 = vld [vmem:[#allocation2 + $0x3d0] sm:$0xff]
    %v181 = vld [vmem:[#allocation2 + $0x3d8] sm:$0xff]
    %v182 = vld [vmem:[#allocation2 + $0x3e0] sm:$0xff]
    %v183 = vld [vmem:[#allocation2 + $0x3e8] sm:$0xff]
    %v184 = vld [vmem:[#allocation2 + $0x3f0] sm:$0xff]
    %v185 = vld [vmem:[#allocation2 + $0x3f8] sm:$0xff]
    %v186 = vpack.c.bf16 %v62, %v58
    %v187 = vpack.c.bf16 %v63, %v59
    %v188 = vpack.c.bf16 %v64, %v60
    %v189 = vpack.c.bf16 %v65, %v61
    %v190 = vpack.c.bf16 %v70, %v66
    %v191 = vpack.c.bf16 %v71, %v67
    %v192 = vpack.c.bf16 %v72, %v68
    %v193 = vpack.c.bf16 %v73, %v69
    %v194 = vpack.c.bf16 %v78, %v74
    %v195 = vpack.c.bf16 %v79, %v75
    %v196 = vpack.c.bf16 %v80, %v76
    %v197 = vpack.c.bf16 %v81, %v77
    %v198 = vpack.c.bf16 %v86, %v82
    %v199 = vpack.c.bf16 %v87, %v83
    %v200 = vpack.c.bf16 %v88, %v84
    %v201 = vpack.c.bf16 %v89, %v85
    %v202 = vpack.c.bf16 %v94, %v90
    %v203 = vpack.c.bf16 %v95, %v91
    %v204 = vpack.c.bf16 %v96, %v92
    %v205 = vpack.c.bf16 %v97, %v93
    %v206 = vpack.c.bf16 %v102, %v98
    %v207 = vpack.c.bf16 %v103, %v99
    %v208 = vpack.c.bf16 %v104, %v100
    %v209 = vpack.c.bf16 %v105, %v101
    %v210 = vpack.c.bf16 %v110, %v106
    %v211 = vpack.c.bf16 %v111, %v107
    %v212 = vpack.c.bf16 %v112, %v108
    %v213 = vpack.c.bf16 %v113, %v109
    %v214 = vpack.c.bf16 %v118, %v114
    %v215 = vpack.c.bf16 %v119, %v115
    %v216 = vpack.c.bf16 %v120, %v116
    %v217 = vpack.c.bf16 %v121, %v117
    %v218 = vpack.c.bf16 %v126, %v122
    %v219 = vpack.c.bf16 %v127, %v123
    %v220 = vpack.c.bf16 %v128, %v124
    %v221 = vpack.c.bf16 %v129, %v125
    %v222 = vpack.c.bf16 %v134, %v130
    %v223 = vpack.c.bf16 %v135, %v131
    %v224 = vpack.c.bf16 %v136, %v132
    %v225 = vpack.c.bf16 %v137, %v133
    %v226 = vpack.c.bf16 %v142, %v138
    %v227 = vpack.c.bf16 %v143, %v139
    %v228 = vpack.c.bf16 %v144, %v140
    %v229 = vpack.c.bf16 %v145, %v141
    %v230 = vpack.c.bf16 %v150, %v146
    %v231 = vpack.c.bf16 %v151, %v147
    %v232 = vpack.c.bf16 %v152, %v148
    %v233 = vpack.c.bf16 %v153, %v149
    %v234 = vpack.c.bf16 %v158, %v154
    %v235 = vpack.c.bf16 %v159, %v155
    %v236 = vpack.c.bf16 %v160, %v156
    %v237 = vpack.c.bf16 %v161, %v157
    %v238 = vpack.c.bf16 %v166, %v162
    %v239 = vpack.c.bf16 %v167, %v163
    %v240 = vpack.c.bf16 %v168, %v164
    %v241 = vpack.c.bf16 %v169, %v165
    %v242 = vpack.c.bf16 %v174, %v170
    %v243 = vpack.c.bf16 %v175, %v171
    %v244 = vpack.c.bf16 %v176, %v172
    %v245 = vpack.c.bf16 %v177, %v173
    %v246 = vpack.c.bf16 %v182, %v178
    %v247 = vpack.c.bf16 %v183, %v179
    %v248 = vpack.c.bf16 %v184, %v180
    %v249 = vpack.c.bf16 %v185, %v181
    %v250 = vld [vmem:[#allocation5] sm:$0xf]
    %v251 = vld [vmem:[#allocation5 + $0x4] sm:$0xf]
    %v252 = vld [vmem:[#allocation5 + $0x8] sm:$0xf]
    %v253 = vld [vmem:[#allocation5 + $0xc] sm:$0xf]
    %v254 = vld [vmem:[#allocation5 + $0x10] sm:$0xf]
    %v255 = vld [vmem:[#allocation5 + $0x14] sm:$0xf]
    %v256 = vld [vmem:[#allocation5 + $0x18] sm:$0xf]
    %v257 = vld [vmem:[#allocation5 + $0x1c] sm:$0xf]
    %v258 = vld [vmem:[#allocation5 + $0x20] sm:$0xf]
    %v259 = vld [vmem:[#allocation5 + $0x24] sm:$0xf]
    %v260 = vld [vmem:[#allocation5 + $0x28] sm:$0xf]
    %v261 = vld [vmem:[#allocation5 + $0x2c] sm:$0xf]
    %v262 = vld [vmem:[#allocation5 + $0x30] sm:$0xf]
    %v263 = vld [vmem:[#allocation5 + $0x34] sm:$0xf]
    %v264 = vld [vmem:[#allocation5 + $0x38] sm:$0xf]
    %v265 = vld [vmem:[#allocation5 + $0x3c] sm:$0xf]
    %v266 = vld [vmem:[#allocation5 + $0x40] sm:$0xf]
    %v267 = vld [vmem:[#allocation5 + $0x44] sm:$0xf]
    %v268 = vld [vmem:[#allocation5 + $0x48] sm:$0xf]
    %v269 = vld [vmem:[#allocation5 + $0x4c] sm:$0xf]
    %v270 = vld [vmem:[#allocation5 + $0x50] sm:$0xf]
    %v271 = vld [vmem:[#allocation5 + $0x54] sm:$0xf]
    %v272 = vld [vmem:[#allocation5 + $0x58] sm:$0xf]
    %v273 = vld [vmem:[#allocation5 + $0x5c] sm:$0xf]
    %v274 = vld [vmem:[#allocation5 + $0x60] sm:$0xf]
    %v275 = vld [vmem:[#allocation5 + $0x64] sm:$0xf]
    %v276 = vld [vmem:[#allocation5 + $0x68] sm:$0xf]
    %v277 = vld [vmem:[#allocation5 + $0x6c] sm:$0xf]
    %v278 = vld [vmem:[#allocation5 + $0x70] sm:$0xf]
    %v279 = vld [vmem:[#allocation5 + $0x74] sm:$0xf]
    %v280 = vld [vmem:[#allocation5 + $0x78] sm:$0xf]
    %v281 = vld [vmem:[#allocation5 + $0x7c] sm:$0xf]
    %v282 = vld [vmem:[#allocation5 + $0x80] sm:$0xf]
    %v283 = vld [vmem:[#allocation5 + $0x84] sm:$0xf]
    %v284 = vld [vmem:[#allocation5 + $0x88] sm:$0xf]
    %v285 = vld [vmem:[#allocation5 + $0x8c] sm:$0xf]
    %v286 = vld [vmem:[#allocation5 + $0x90] sm:$0xf]
    %v287 = vld [vmem:[#allocation5 + $0x94] sm:$0xf]
    %v288 = vld [vmem:[#allocation5 + $0x98] sm:$0xf]
    %v289 = vld [vmem:[#allocation5 + $0x9c] sm:$0xf]
    %v290 = vld [vmem:[#allocation5 + $0xa0] sm:$0xf]
    %v291 = vld [vmem:[#allocation5 + $0xa4] sm:$0xf]
    %v292 = vld [vmem:[#allocation5 + $0xa8] sm:$0xf]
    %v293 = vld [vmem:[#allocation5 + $0xac] sm:$0xf]
    %v294 = vld [vmem:[#allocation5 + $0xb0] sm:$0xf]
    %v295 = vld [vmem:[#allocation5 + $0xb4] sm:$0xf]
    %v296 = vld [vmem:[#allocation5 + $0xb8] sm:$0xf]
    %v297 = vld [vmem:[#allocation5 + $0xbc] sm:$0xf]
    %v298 = vld [vmem:[#allocation5 + $0xc0] sm:$0xf]
    %v299 = vld [vmem:[#allocation5 + $0xc4] sm:$0xf]
    %v300 = vld [vmem:[#allocation5 + $0xc8] sm:$0xf]
    %v301 = vld [vmem:[#allocation5 + $0xcc] sm:$0xf]
    %v302 = vld [vmem:[#allocation5 + $0xd0] sm:$0xf]
    %v303 = vld [vmem:[#allocation5 + $0xd4] sm:$0xf]
    %v304 = vld [vmem:[#allocation5 + $0xd8] sm:$0xf]
    %v305 = vld [vmem:[#allocation5 + $0xdc] sm:$0xf]
    %v306 = vld [vmem:[#allocation5 + $0xe0] sm:$0xf]
    %v307 = vld [vmem:[#allocation5 + $0xe4] sm:$0xf]
    %v308 = vld [vmem:[#allocation5 + $0xe8] sm:$0xf]
    %v309 = vld [vmem:[#allocation5 + $0xec] sm:$0x1]
    %v310 = vld [vmem:[#allocation7] sm:$0x1]
    %v312 = vlaneseq
    %v313 = vshrl.u32 %v312, 7
    %v314 = vsub.s32 0, %v313
    %v315 = vrot.slane %v310, %v314
    %v377 = vunpack.c.l.b16 %v250
    %v378 = vunpack.c.l.b16 %v251
    %v379 = vunpack.c.l.b16 %v252
    %v380 = vunpack.c.l.b16 %v253
    %v381 = vunpack.c.l.b16 %v254
    %v382 = vunpack.c.l.b16 %v255
    %v383 = vunpack.c.l.b16 %v256
    %v384 = vunpack.c.l.b16 %v257
    %v385 = vunpack.c.l.b16 %v258
    %v386 = vunpack.c.l.b16 %v259
    %v387 = vunpack.c.l.b16 %v260
    %v388 = vunpack.c.l.b16 %v261
    %v389 = vunpack.c.l.b16 %v262
    %v390 = vunpack.c.l.b16 %v263
    %v391 = vunpack.c.l.b16 %v264
    %v392 = vunpack.c.l.b16 %v265
    %v393 = vunpack.c.l.b16 %v266
    %v394 = vunpack.c.l.b16 %v267
    %v395 = vunpack.c.l.b16 %v268
    %v396 = vunpack.c.l.b16 %v269
    %v397 = vunpack.c.l.b16 %v270
    %v398 = vunpack.c.l.b16 %v271
    %v399 = vunpack.c.l.b16 %v272
    %v400 = vunpack.c.l.b16 %v273
    %v401 = vunpack.c.l.b16 %v274
    %v402 = vunpack.c.l.b16 %v275
    %v403 = vunpack.c.l.b16 %v276
    %v404 = vunpack.c.l.b16 %v277
    %v405 = vunpack.c.l.b16 %v278
    %v406 = vunpack.c.l.b16 %v279
    %v407 = vunpack.c.l.b16 %v280
    %v408 = vunpack.c.l.b16 %v281
    %v409 = vunpack.c.l.b16 %v282
    %v410 = vunpack.c.l.b16 %v283
    %v411 = vunpack.c.l.b16 %v284
    %v412 = vunpack.c.l.b16 %v285
    %v413 = vunpack.c.l.b16 %v286
    %v414 = vunpack.c.l.b16 %v287
    %v415 = vunpack.c.l.b16 %v288
    %v416 = vunpack.c.l.b16 %v289
    %v417 = vunpack.c.l.b16 %v290
    %v418 = vunpack.c.l.b16 %v291
    %v419 = vunpack.c.l.b16 %v292
    %v420 = vunpack.c.l.b16 %v293
    %v421 = vunpack.c.l.b16 %v294
    %v422 = vunpack.c.l.b16 %v295
    %v423 = vunpack.c.l.b16 %v296
    %v424 = vunpack.c.l.b16 %v297
    %v425 = vunpack.c.l.b16 %v298
    %v426 = vunpack.c.l.b16 %v299
    %v427 = vunpack.c.l.b16 %v300
    %v428 = vunpack.c.l.b16 %v301
    %v429 = vunpack.c.l.b16 %v302
    %v430 = vunpack.c.l.b16 %v303
    %v431 = vunpack.c.l.b16 %v304
    %v432 = vunpack.c.l.b16 %v305
    %v433 = vunpack.c.l.b16 %v306
    %v434 = vunpack.c.l.b16 %v307
    %v435 = vunpack.c.l.b16 %v308
    %v436 = vunpack.c.l.b16 %v309
    %v437 = vpack.c.b16 %v378, %v377
    %v438 = vpack.c.b16 %v380, %v379
    %v439 = vpack.c.b16 %v382, %v381
    %v440 = vpack.c.b16 %v384, %v383
    %v441 = vpack.c.b16 %v386, %v385
    %v442 = vpack.c.b16 %v388, %v387
    %v443 = vpack.c.b16 %v390, %v389
    %v444 = vpack.c.b16 %v392, %v391
    %v445 = vpack.c.b16 %v394, %v393
    %v446 = vpack.c.b16 %v396, %v395
    %v447 = vpack.c.b16 %v398, %v397
    %v448 = vpack.c.b16 %v400, %v399
    %v449 = vpack.c.b16 %v402, %v401
    %v450 = vpack.c.b16 %v404, %v403
    %v451 = vpack.c.b16 %v406, %v405
    %v452 = vpack.c.b16 %v408, %v407
    %v453 = vpack.c.b16 %v410, %v409
    %v454 = vpack.c.b16 %v412, %v411
    %v455 = vpack.c.b16 %v414, %v413
    %v456 = vpack.c.b16 %v416, %v415
    %v457 = vpack.c.b16 %v418, %v417
    %v458 = vpack.c.b16 %v420, %v419
    %v459 = vpack.c.b16 %v422, %v421
    %v460 = vpack.c.b16 %v424, %v423
    %v461 = vpack.c.b16 %v426, %v425
    %v462 = vpack.c.b16 %v428, %v427
    %v463 = vpack.c.b16 %v430, %v429
    %v464 = vpack.c.b16 %v432, %v431
    %v465 = vpack.c.b16 %v434, %v433
    %v466 = vpack.c.b16 %v436, %v435
    %vm496 = vcmask 736256
    %v498 = vsel %vm496, %v189, 0
    %v501 = vsel %vm496, %v193, 0
    %v504 = vsel %vm496, %v197, 0
    %v507 = vsel %vm496, %v201, 0
    %v510 = vsel %vm496, %v205, 0
    %v513 = vsel %vm496, %v209, 0
    %v516 = vsel %vm496, %v213, 0
    %v519 = vsel %vm496, %v217, 0
    %v522 = vsel %vm496, %v221, 0
    %v525 = vsel %vm496, %v225, 0
    %v528 = vsel %vm496, %v229, 0
    %v531 = vsel %vm496, %v233, 0
    %v534 = vsel %vm496, %v237, 0
    %v537 = vsel %vm496, %v241, 0
    %v540 = vsel %vm496, %v245, 0
    %v543 = vsel %vm496, %v249, 0
    %vm545 = vcmask 1044480
    %v547 = vsel %vm545, %v466, 0
    %549 = vmatprep.subr.bf16.mxu0 0
    %550 = vmatpush1.bf16.msra.mxu0 %v437
    %551 = vmatprep.subr.bf16.mxu0 0
    %552 = vmatpush1.bf16.msra.mxu0 %v438
    %553 = vmatprep.subr.bf16.mxu0 0
    %554 = vmatpush1.bf16.msra.mxu0 %v439
    %555 = vmatprep.subr.bf16.mxu0 0
    %556 = vmatpush1.bf16.msra.mxu0 %v440
    %557 = vmatprep.subr.bf16.mxu0 0
    %558 = vmatpush1.bf16.msra.mxu0 %v441
    %559 = vmatprep.subr.bf16.mxu0 0
    %560 = vmatpush1.bf16.msra.mxu0 %v442
    %561 = vmatprep.subr.bf16.mxu0 0
    %562 = vmatpush1.bf16.msra.mxu0 %v443
    %563 = vmatprep.subr.bf16.mxu0 0
    %564 = vmatpush1.bf16.msra.mxu0 %v444
    %565 = vmatprep.subr.bf16.mxu0 0
    %566 = vmatpush1.bf16.msra.mxu0 %v445
    %567 = vmatprep.subr.bf16.mxu0 0
    %568 = vmatpush1.bf16.msra.mxu0 %v446
    %569 = vmatprep.subr.bf16.mxu0 0
    %570 = vmatpush1.bf16.msra.mxu0 %v447
    %571 = vmatprep.subr.bf16.mxu0 0
    %572 = vmatpush1.bf16.msra.mxu0 %v448
    %573 = vmatprep.subr.bf16.mxu0 0
    %574 = vmatpush1.bf16.msra.mxu0 %v449
    %575 = vmatprep.subr.bf16.mxu0 0
    %576 = vmatpush1.bf16.msra.mxu0 %v450
    %577 = vmatprep.subr.bf16.mxu0 0
    %578 = vmatpush1.bf16.msra.mxu0 %v451
    %579 = vmatprep.subr.bf16.mxu0 0
    %580 = vmatpush1.bf16.msra.mxu0 %v452
    %581 = vmatprep.mubr.bf16.mxu0 %v187
    %582 = vmatmul.mubr.bf16.gmra.mrb[0].mxu0 %v186
    %v583 = vpop.f32.mrb[0].mxu0
    %v584 = vadd.f32 %v315, %v583
    %v585 = vpop.f32.mrb[0].mxu0
    %v586 = vpop.f32.mrb[0].mxu0
    %v587 = vadd.f32 %v315, %v586
    %v588 = vpop.f32.mrb[0].mxu0
    %589 = vmatprep.mubr.bf16.mxu0 %v191
    %590 = vmatmul.mubr.bf16.gmra.mrb[0].mxu0 %v190
    %v591 = vpop.f32.mrb[0].mxu0
    %v592 = vadd.f32 %v315, %v591
    %v593 = vpop.f32.mrb[0].mxu0
    %v594 = vpop.f32.mrb[0].mxu0
    %v595 = vadd.f32 %v315, %v594
    %v596 = vpop.f32.mrb[0].mxu0
    %597 = vmatprep.mubr.bf16.mxu0 %v195
    %598 = vmatmul.mubr.bf16.gmra.mrb[0].mxu0 %v194
    %v599 = vpop.f32.mrb[0].mxu0
    %v600 = vadd.f32 %v315, %v599
    %v601 = vpop.f32.mrb[0].mxu0
    %v602 = vpop.f32.mrb[0].mxu0
    %v603 = vadd.f32 %v315, %v602
    %v604 = vpop.f32.mrb[0].mxu0
    %605 = vmatprep.mubr.bf16.mxu0 %v199
    %606 = vmatmul.mubr.bf16.gmra.mrb[0].mxu0 %v198
    %v607 = vpop.f32.mrb[0].mxu0
    %v608 = vadd.f32 %v315, %v607
    %v609 = vpop.f32.mrb[0].mxu0
    %v610 = vpop.f32.mrb[0].mxu0
    %v611 = vadd.f32 %v315, %v610
    %v612 = vpop.f32.mrb[0].mxu0
    %613 = vmatprep.mubr.bf16.mxu0 %v203
    %614 = vmatmul.mubr.bf16.gmra.mrb[0].mxu0 %v202
    %v615 = vpop.f32.mrb[0].mxu0
    %v616 = vadd.f32 %v315, %v615
    %v617 = vpop.f32.mrb[0].mxu0
    %v618 = vpop.f32.mrb[0].mxu0
    %v619 = vadd.f32 %v315, %v618
    %v620 = vpop.f32.mrb[0].mxu0
    %621 = vmatprep.mubr.bf16.mxu0 %v207
    %622 = vmatmul.mubr.bf16.gmra.mrb[0].mxu0 %v206
    %v623 = vpop.f32.mrb[0].mxu0
    %v624 = vadd.f32 %v315, %v623
    %v625 = vpop.f32.mrb[0].mxu0
    %v626 = vpop.f32.mrb[0].mxu0
    %v627 = vadd.f32 %v315, %v626
    %v628 = vpop.f32.mrb[0].mxu0
    %629 = vmatprep.mubr.bf16.mxu0 %v211
    %630 = vmatmul.mubr.bf16.gmra.mrb[0].mxu0 %v210
    %v631 = vpop.f32.mrb[0].mxu0
    %v632 = vadd.f32 %v315, %v631
    %v633 = vpop.f32.mrb[0].mxu0
    %v634 = vpop.f32.mrb[0].mxu0
    %v635 = vadd.f32 %v315, %v634
    %v636 = vpop.f32.mrb[0].mxu0
    %637 = vmatprep.mubr.bf16.mxu0 %v215
    %638 = vmatmul.mubr.bf16.gmra.mrb[0].mxu0 %v214
    %v639 = vpop.f32.mrb[0].mxu0
    %v640 = vadd.f32 %v315, %v639
    %v641 = vpop.f32.mrb[0].mxu0
    %v642 = vpop.f32.mrb[0].mxu0
    %v643 = vadd.f32 %v315, %v642
    %v644 = vpop.f32.mrb[0].mxu0
    %645 = vmatprep.mubr.bf16.mxu0 %v219
    %646 = vmatmul.mubr.bf16.gmra.mrb[0].mxu0 %v218
    %v647 = vpop.f32.mrb[0].mxu0
    %v648 = vadd.f32 %v315, %v647
    %v649 = vpop.f32.mrb[0].mxu0
    %v650 = vpop.f32.mrb[0].mxu0
    %v651 = vadd.f32 %v315, %v650
    %v652 = vpop.f32.mrb[0].mxu0
    %653 = vmatprep.mubr.bf16.mxu0 %v223
    %654 = vmatmul.mubr.bf16.gmra.mrb[0].mxu0 %v222
    %v655 = vpop.f32.mrb[0].mxu0
    %v656 = vadd.f32 %v315, %v655
    %v657 = vpop.f32.mrb[0].mxu0
    %v658 = vpop.f32.mrb[0].mxu0
    %v659 = vadd.f32 %v315, %v658
    %v660 = vpop.f32.mrb[0].mxu0
    %661 = vmatprep.mubr.bf16.mxu0 %v227
    %662 = vmatmul.mubr.bf16.gmra.mrb[0].mxu0 %v226
    %v663 = vpop.f32.mrb[0].mxu0
    %v664 = vadd.f32 %v315, %v663
    %v665 = vpop.f32.mrb[0].mxu0
    %v666 = vpop.f32.mrb[0].mxu0
    %v667 = vadd.f32 %v315, %v666
    %v668 = vpop.f32.mrb[0].mxu0
    %669 = vmatprep.mubr.bf16.mxu0 %v231
    %670 = vmatmul.mubr.bf16.gmra.mrb[0].mxu0 %v230
    %v671 = vpop.f32.mrb[0].mxu0
    %v672 = vadd.f32 %v315, %v671
    %v673 = vpop.f32.mrb[0].mxu0
    %v674 = vpop.f32.mrb[0].mxu0
    %v675 = vadd.f32 %v315, %v674
    %v676 = vpop.f32.mrb[0].mxu0
    %677 = vmatprep.mubr.bf16.mxu0 %v235
    %678 = vmatmul.mubr.bf16.gmra.mrb[0].mxu0 %v234
    %v679 = vpop.f32.mrb[0].mxu0
    %v680 = vadd.f32 %v315, %v679
    %v681 = vpop.f32.mrb[0].mxu0
    %v682 = vpop.f32.mrb[0].mxu0
    %v683 = vadd.f32 %v315, %v682
    %v684 = vpop.f32.mrb[0].mxu0
    %685 = vmatprep.mubr.bf16.mxu0 %v239
    %686 = vmatmul.mubr.bf16.gmra.mrb[0].mxu0 %v238
    %v687 = vpop.f32.mrb[0].mxu0
    %v688 = vadd.f32 %v315, %v687
    %v689 = vpop.f32.mrb[0].mxu0
    %v690 = vpop.f32.mrb[0].mxu0
    %v691 = vadd.f32 %v315, %v690
    %v692 = vpop.f32.mrb[0].mxu0
    %693 = vmatprep.mubr.bf16.mxu0 %v243
    %694 = vmatmul.mubr.bf16.gmra.mrb[0].mxu0 %v242
    %v695 = vpop.f32.mrb[0].mxu0
    %v696 = vadd.f32 %v315, %v695
    %v697 = vpop.f32.mrb[0].mxu0
    %v698 = vpop.f32.mrb[0].mxu0
    %v699 = vadd.f32 %v315, %v698
    %v700 = vpop.f32.mrb[0].mxu0
    %701 = vmatprep.mubr.bf16.mxu0 %v247
    %702 = vmatmul.mubr.bf16.gmra.mrb[0].mxu0 %v246
    %v703 = vpop.f32.mrb[0].mxu0
    %v704 = vadd.f32 %v315, %v703
    %v705 = vpop.f32.mrb[0].mxu0
    %v706 = vpop.f32.mrb[0].mxu0
    %v707 = vadd.f32 %v315, %v706
    %v708 = vpop.f32.mrb[0].mxu0
    %709 = vdwg.mxu0
    %710 = vmatprep.subr.bf16.mxu0 0
    %711 = vmatpush1.bf16.msra.mxu0 %v453
    %712 = vmatprep.subr.bf16.mxu0 0
    %713 = vmatpush1.bf16.msra.mxu0 %v454
    %714 = vmatprep.subr.bf16.mxu0 0
    %715 = vmatpush1.bf16.msra.mxu0 %v455
    %716 = vmatprep.subr.bf16.mxu0 0
    %717 = vmatpush1.bf16.msra.mxu0 %v456
    %718 = vmatprep.subr.bf16.mxu0 0
    %719 = vmatpush1.bf16.msra.mxu0 %v457
    %720 = vmatprep.subr.bf16.mxu0 0
    %721 = vmatpush1.bf16.msra.mxu0 %v458
    %722 = vmatprep.subr.bf16.mxu0 0
    %723 = vmatpush1.bf16.msra.mxu0 %v459
    %724 = vmatprep.subr.bf16.mxu0 0
    %725 = vmatpush1.bf16.msra.mxu0 %v460
    %726 = vmatprep.subr.bf16.mxu0 0
    %727 = vmatpush1.bf16.msra.mxu0 %v461
    %728 = vmatprep.subr.bf16.mxu0 0
    %729 = vmatpush1.bf16.msra.mxu0 %v462
    %730 = vmatprep.subr.bf16.mxu0 0
    %731 = vmatpush1.bf16.msra.mxu0 %v463
    %732 = vmatprep.subr.bf16.mxu0 0
    %733 = vmatpush1.bf16.msra.mxu0 %v464
    %734 = vmatprep.subr.bf16.mxu0 0
    %735 = vmatpush1.bf16.msra.mxu0 %v465
    %736 = vmatprep.subr.bf16.mxu0 0
    %737 = vmatpush1.bf16.msra.mxu0 %v547
    %738 = vmatprep.subr.bf16.mxu0 0
    %739 = vmatpush1.bf16.msra.mxu0 0
    %740 = vmatprep.subr.bf16.mxu0 0
    %741 = vmatpush1.bf16.msra.mxu0 0
    %742 = vmatprep.mubr.bf16.mxu0 %v498
    %743 = vmatmul.mubr.bf16.gmra.mrb[0].mxu0 %v188
    %v744 = vpop.f32.mrb[0].mxu0
    %v745 = vadd.f32 %v584, %v744
    %v746 = vpop.f32.mrb[0].mxu0
    %v747 = vpop.f32.mrb[0].mxu0
    %v748 = vadd.f32 %v587, %v747
    %v749 = vpop.f32.mrb[0].mxu0
    %750 = vmatprep.mubr.bf16.mxu0 %v501
    %751 = vmatmul.mubr.bf16.gmra.mrb[0].mxu0 %v192
    %v752 = vpop.f32.mrb[0].mxu0
    %v753 = vadd.f32 %v592, %v752
    %v754 = vpop.f32.mrb[0].mxu0
    %v755 = vpop.f32.mrb[0].mxu0
    %v756 = vadd.f32 %v595, %v755
    %v757 = vpop.f32.mrb[0].mxu0
    %758 = vmatprep.mubr.bf16.mxu0 %v504
    %759 = vmatmul.mubr.bf16.gmra.mrb[0].mxu0 %v196
    %v760 = vpop.f32.mrb[0].mxu0
    %v761 = vadd.f32 %v600, %v760
    %v762 = vpop.f32.mrb[0].mxu0
    %v763 = vpop.f32.mrb[0].mxu0
    %v764 = vadd.f32 %v603, %v763
    %v765 = vpop.f32.mrb[0].mxu0
    %766 = vmatprep.mubr.bf16.mxu0 %v507
    %767 = vmatmul.mubr.bf16.gmra.mrb[0].mxu0 %v200
    %v768 = vpop.f32.mrb[0].mxu0
    %v769 = vadd.f32 %v608, %v768
    %v770 = vpop.f32.mrb[0].mxu0
    %v771 = vpop.f32.mrb[0].mxu0
    %v772 = vadd.f32 %v611, %v771
    %v773 = vpop.f32.mrb[0].mxu0
    %774 = vmatprep.mubr.bf16.mxu0 %v510
    %775 = vmatmul.mubr.bf16.gmra.mrb[0].mxu0 %v204
    %v776 = vpop.f32.mrb[0].mxu0
    %v777 = vadd.f32 %v616, %v776
    %v778 = vpop.f32.mrb[0].mxu0
    %v779 = vpop.f32.mrb[0].mxu0
    %v780 = vadd.f32 %v619, %v779
    %v781 = vpop.f32.mrb[0].mxu0
    %782 = vmatprep.mubr.bf16.mxu0 %v513
    %783 = vmatmul.mubr.bf16.gmra.mrb[0].mxu0 %v208
    %v784 = vpop.f32.mrb[0].mxu0
    %v785 = vadd.f32 %v624, %v784
    %v786 = vpop.f32.mrb[0].mxu0
    %v787 = vpop.f32.mrb[0].mxu0
    %v788 = vadd.f32 %v627, %v787
    %v789 = vpop.f32.mrb[0].mxu0
    %790 = vmatprep.mubr.bf16.mxu0 %v516
    %791 = vmatmul.mubr.bf16.gmra.mrb[0].mxu0 %v212
    %v792 = vpop.f32.mrb[0].mxu0
    %v793 = vadd.f32 %v632, %v792
    %v794 = vpop.f32.mrb[0].mxu0
    %v795 = vpop.f32.mrb[0].mxu0
    %v796 = vadd.f32 %v635, %v795
    %v797 = vpop.f32.mrb[0].mxu0
    %798 = vmatprep.mubr.bf16.mxu0 %v519
    %799 = vmatmul.mubr.bf16.gmra.mrb[0].mxu0 %v216
    %v800 = vpop.f32.mrb[0].mxu0
    %v801 = vadd.f32 %v640, %v800
    %v802 = vpop.f32.mrb[0].mxu0
    %v803 = vpop.f32.mrb[0].mxu0
    %v804 = vadd.f32 %v643, %v803
    %v805 = vpop.f32.mrb[0].mxu0
    %806 = vmatprep.mubr.bf16.mxu0 %v522
    %807 = vmatmul.mubr.bf16.gmra.mrb[0].mxu0 %v220
    %v808 = vpop.f32.mrb[0].mxu0
    %v809 = vadd.f32 %v648, %v808
    %v810 = vpop.f32.mrb[0].mxu0
    %v811 = vpop.f32.mrb[0].mxu0
    %v812 = vadd.f32 %v651, %v811
    %v813 = vpop.f32.mrb[0].mxu0
    %814 = vmatprep.mubr.bf16.mxu0 %v525
    %815 = vmatmul.mubr.bf16.gmra.mrb[0].mxu0 %v224
    %v816 = vpop.f32.mrb[0].mxu0
    %v817 = vadd.f32 %v656, %v816
    %v818 = vpop.f32.mrb[0].mxu0
    %v819 = vpop.f32.mrb[0].mxu0
    %v820 = vadd.f32 %v659, %v819
    %v821 = vpop.f32.mrb[0].mxu0
    %822 = vmatprep.mubr.bf16.mxu0 %v528
    %823 = vmatmul.mubr.bf16.gmra.mrb[0].mxu0 %v228
    %v824 = vpop.f32.mrb[0].mxu0
    %v825 = vadd.f32 %v664, %v824
    %v826 = vpop.f32.mrb[0].mxu0
    %v827 = vpop.f32.mrb[0].mxu0
    %v828 = vadd.f32 %v667, %v827
    %v829 = vpop.f32.mrb[0].mxu0
    %830 = vmatprep.mubr.bf16.mxu0 %v531
    %831 = vmatmul.mubr.bf16.gmra.mrb[0].mxu0 %v232
    %v832 = vpop.f32.mrb[0].mxu0
    %v833 = vadd.f32 %v672, %v832
    %v834 = vpop.f32.mrb[0].mxu0
    %v835 = vpop.f32.mrb[0].mxu0
    %v836 = vadd.f32 %v675, %v835
    %v837 = vpop.f32.mrb[0].mxu0
    %838 = vmatprep.mubr.bf16.mxu0 %v534
    %839 = vmatmul.mubr.bf16.gmra.mrb[0].mxu0 %v236
    %v840 = vpop.f32.mrb[0].mxu0
    %v841 = vadd.f32 %v680, %v840
    %v842 = vpop.f32.mrb[0].mxu0
    %v843 = vpop.f32.mrb[0].mxu0
    %v844 = vadd.f32 %v683, %v843
    %v845 = vpop.f32.mrb[0].mxu0
    %846 = vmatprep.mubr.bf16.mxu0 %v537
    %847 = vmatmul.mubr.bf16.gmra.mrb[0].mxu0 %v240
    %v848 = vpop.f32.mrb[0].mxu0
    %v849 = vadd.f32 %v688, %v848
    %v850 = vpop.f32.mrb[0].mxu0
    %v851 = vpop.f32.mrb[0].mxu0
    %v852 = vadd.f32 %v691, %v851
    %v853 = vpop.f32.mrb[0].mxu0
    %854 = vmatprep.mubr.bf16.mxu0 %v540
    %855 = vmatmul.mubr.bf16.gmra.mrb[0].mxu0 %v244
    %v856 = vpop.f32.mrb[0].mxu0
    %v857 = vadd.f32 %v696, %v856
    %v858 = vpop.f32.mrb[0].mxu0
    %v859 = vpop.f32.mrb[0].mxu0
    %v860 = vadd.f32 %v699, %v859
    %v861 = vpop.f32.mrb[0].mxu0
    %862 = vmatprep.mubr.bf16.mxu0 %v543
    %863 = vmatmul.mubr.bf16.gmra.mrb[0].mxu0 %v248
    %v864 = vpop.f32.mrb[0].mxu0
    %v865 = vadd.f32 %v704, %v864
    %v866 = vpop.f32.mrb[0].mxu0
    %v867 = vpop.f32.mrb[0].mxu0
    %v868 = vadd.f32 %v707, %v867
    %v869 = vpop.f32.mrb[0].mxu0
    %870 = vdwg.mxu0
    %903 = vrot.lane.b32.xlu0 %v745, 96
    %v904 = vpop.permute.xlu0 %903
    %905 = vrot.lane.b32.xlu0 %v748, 96
    %v906 = vpop.permute.xlu0 %905
    %907 = vrot.lane.b32.xlu0 %v753, 96
    %v908 = vpop.permute.xlu0 %907
    %909 = vrot.lane.b32.xlu0 %v756, 96
    %v910 = vpop.permute.xlu0 %909
    %911 = vrot.lane.b32.xlu0 %v761, 96
    %v912 = vpop.permute.xlu0 %911
    %913 = vrot.lane.b32.xlu0 %v764, 96
    %v914 = vpop.permute.xlu0 %913
    %915 = vrot.lane.b32.xlu0 %v769, 96
    %v916 = vpop.permute.xlu0 %915
    %917 = vrot.lane.b32.xlu0 %v772, 96
    %v918 = vpop.permute.xlu0 %917
    %919 = vrot.lane.b32.xlu0 %v777, 96
    %v920 = vpop.permute.xlu0 %919
    %921 = vrot.lane.b32.xlu0 %v780, 96
    %v922 = vpop.permute.xlu0 %921
    %923 = vrot.lane.b32.xlu0 %v785, 96
    %v924 = vpop.permute.xlu0 %923
    %925 = vrot.lane.b32.xlu0 %v788, 96
    %v926 = vpop.permute.xlu0 %925
    %927 = vrot.lane.b32.xlu0 %v793, 96
    %v928 = vpop.permute.xlu0 %927
    %929 = vrot.lane.b32.xlu0 %v796, 96
    %v930 = vpop.permute.xlu0 %929
    %931 = vrot.lane.b32.xlu0 %v801, 96
    %v932 = vpop.permute.xlu0 %931
    %933 = vrot.lane.b32.xlu0 %v804, 96
    %v934 = vpop.permute.xlu0 %933
    %935 = vrot.lane.b32.xlu0 %v809, 96
    %v936 = vpop.permute.xlu0 %935
    %937 = vrot.lane.b32.xlu0 %v812, 96
    %v938 = vpop.permute.xlu0 %937
    %939 = vrot.lane.b32.xlu0 %v817, 96
    %v940 = vpop.permute.xlu0 %939
    %941 = vrot.lane.b32.xlu0 %v820, 96
    %v942 = vpop.permute.xlu0 %941
    %943 = vrot.lane.b32.xlu0 %v825, 96
    %v944 = vpop.permute.xlu0 %943
    %945 = vrot.lane.b32.xlu0 %v828, 96
    %v946 = vpop.permute.xlu0 %945
    %947 = vrot.lane.b32.xlu0 %v833, 96
    %v948 = vpop.permute.xlu0 %947
    %949 = vrot.lane.b32.xlu0 %v836, 96
    %v950 = vpop.permute.xlu0 %949
    %951 = vrot.lane.b32.xlu0 %v841, 96
    %v952 = vpop.permute.xlu0 %951
    %953 = vrot.lane.b32.xlu0 %v844, 96
    %v954 = vpop.permute.xlu0 %953
    %955 = vrot.lane.b32.xlu0 %v849, 96
    %v956 = vpop.permute.xlu0 %955
    %957 = vrot.lane.b32.xlu0 %v852, 96
    %v958 = vpop.permute.xlu0 %957
    %959 = vrot.lane.b32.xlu0 %v857, 96
    %v960 = vpop.permute.xlu0 %959
    %961 = vrot.lane.b32.xlu0 %v860, 96
    %v962 = vpop.permute.xlu0 %961
    %963 = vrot.lane.b32.xlu0 %v865, 96
    %v964 = vpop.permute.xlu0 %963
    %965 = vrot.lane.b32.xlu0 %v868, 96
    %v966 = vpop.permute.xlu0 %965
    %v999 = vmax.f32 %v745, %v904
    %v1000 = vmax.f32 %v748, %v906
    %v1001 = vmax.f32 %v753, %v908
    %v1002 = vmax.f32 %v756, %v910
    %v1003 = vmax.f32 %v761, %v912
    %v1004 = vmax.f32 %v764, %v914
    %v1005 = vmax.f32 %v769, %v916
    %v1006 = vmax.f32 %v772, %v918
    %v1007 = vmax.f32 %v777, %v920
    %v1008 = vmax.f32 %v780, %v922
    %v1009 = vmax.f32 %v785, %v924
    %v1010 = vmax.f32 %v788, %v926
    %v1011 = vmax.f32 %v793, %v928
    %v1012 = vmax.f32 %v796, %v930
    %v1013 = vmax.f32 %v801, %v932
    %v1014 = vmax.f32 %v804, %v934
    %v1015 = vmax.f32 %v809, %v936
    %v1016 = vmax.f32 %v812, %v938
    %v1017 = vmax.f32 %v817, %v940
    %v1018 = vmax.f32 %v820, %v942
    %v1019 = vmax.f32 %v825, %v944
    %v1020 = vmax.f32 %v828, %v946
    %v1021 = vmax.f32 %v833, %v948
    %v1022 = vmax.f32 %v836, %v950
    %v1023 = vmax.f32 %v841, %v952
    %v1024 = vmax.f32 %v844, %v954
    %v1025 = vmax.f32 %v849, %v956
    %v1026 = vmax.f32 %v852, %v958
    %v1027 = vmax.f32 %v857, %v960
    %v1028 = vmax.f32 %v860, %v962
    %v1029 = vmax.f32 %v865, %v964
    %v1030 = vmax.f32 %v868, %v966
    %1031 = vrot.lane.b32.xlu0 %v745, 64
    %v1032 = vpop.permute.xlu0 %1031
    %1033 = vrot.lane.b32.xlu0 %v748, 64
    %v1034 = vpop.permute.xlu0 %1033
    %1035 = vrot.lane.b32.xlu0 %v753, 64
    %v1036 = vpop.permute.xlu0 %1035
    %1037 = vrot.lane.b32.xlu0 %v756, 64
    %v1038 = vpop.permute.xlu0 %1037
    %1039 = vrot.lane.b32.xlu0 %v761, 64
    %v1040 = vpop.permute.xlu0 %1039
    %1041 = vrot.lane.b32.xlu0 %v764, 64
    %v1042 = vpop.permute.xlu0 %1041
    %1043 = vrot.lane.b32.xlu0 %v769, 64
    %v1044 = vpop.permute.xlu0 %1043
    %1045 = vrot.lane.b32.xlu0 %v772, 64
    %v1046 = vpop.permute.xlu0 %1045
    %1047 = vrot.lane.b32.xlu0 %v777, 64
    %v1048 = vpop.permute.xlu0 %1047
    %1049 = vrot.lane.b32.xlu0 %v780, 64
    %v1050 = vpop.permute.xlu0 %1049
    %1051 = vrot.lane.b32.xlu0 %v785, 64
    %v1052 = vpop.permute.xlu0 %1051
    %1053 = vrot.lane.b32.xlu0 %v788, 64
    %v1054 = vpop.permute.xlu0 %1053
    %1055 = vrot.lane.b32.xlu0 %v793, 64
    %v1056 = vpop.permute.xlu0 %1055
    %1057 = vrot.lane.b32.xlu0 %v796, 64
    %v1058 = vpop.permute.xlu0 %1057
    %1059 = vrot.lane.b32.xlu0 %v801, 64
    %v1060 = vpop.permute.xlu0 %1059
    %1061 = vrot.lane.b32.xlu0 %v804, 64
    %v1062 = vpop.permute.xlu0 %1061
    %1063 = vrot.lane.b32.xlu0 %v809, 64
    %v1064 = vpop.permute.xlu0 %1063
    %1065 = vrot.lane.b32.xlu0 %v812, 64
    %v1066 = vpop.permute.xlu0 %1065
    %1067 = vrot.lane.b32.xlu0 %v817, 64
    %v1068 = vpop.permute.xlu0 %1067
    %1069 = vrot.lane.b32.xlu0 %v820, 64
    %v1070 = vpop.permute.xlu0 %1069
    %1071 = vrot.lane.b32.xlu0 %v825, 64
    %v1072 = vpop.permute.xlu0 %1071
    %1073 = vrot.lane.b32.xlu0 %v828, 64
    %v1074 = vpop.permute.xlu0 %1073
    %1075 = vrot.lane.b32.xlu0 %v833, 64
    %v1076 = vpop.permute.xlu0 %1075
    %1077 = vrot.lane.b32.xlu0 %v836, 64
    %v1078 = vpop.permute.xlu0 %1077
    %1079 = vrot.lane.b32.xlu0 %v841, 64
    %v1080 = vpop.permute.xlu0 %1079
    %1081 = vrot.lane.b32.xlu0 %v844, 64
    %v1082 = vpop.permute.xlu0 %1081
    %1083 = vrot.lane.b32.xlu0 %v849, 64
    %v1084 = vpop.permute.xlu0 %1083
    %1085 = vrot.lane.b32.xlu0 %v852, 64
    %v1086 = vpop.permute.xlu0 %1085
    %1087 = vrot.lane.b32.xlu0 %v857, 64
    %v1088 = vpop.permute.xlu0 %1087
    %1089 = vrot.lane.b32.xlu0 %v860, 64
    %v1090 = vpop.permute.xlu0 %1089
    %1091 = vrot.lane.b32.xlu0 %v865, 64
    %v1092 = vpop.permute.xlu0 %1091
    %1093 = vrot.lane.b32.xlu0 %v868, 64
    %v1094 = vpop.permute.xlu0 %1093
    %v1127 = vmax.f32 %v999, %v1032
    %v1128 = vmax.f32 %v1000, %v1034
    %v1129 = vmax.f32 %v1001, %v1036
    %v1130 = vmax.f32 %v1002, %v1038
    %v1131 = vmax.f32 %v1003, %v1040
    %v1132 = vmax.f32 %v1004, %v1042
    %v1133 = vmax.f32 %v1005, %v1044
    %v1134 = vmax.f32 %v1006, %v1046
    %v1135 = vmax.f32 %v1007, %v1048
    %v1136 = vmax.f32 %v1008, %v1050
    %v1137 = vmax.f32 %v1009, %v1052
    %v1138 = vmax.f32 %v1010, %v1054
    %v1139 = vmax.f32 %v1011, %v1056
    %v1140 = vmax.f32 %v1012, %v1058
    %v1141 = vmax.f32 %v1013, %v1060
    %v1142 = vmax.f32 %v1014, %v1062
    %v1143 = vmax.f32 %v1015, %v1064
    %v1144 = vmax.f32 %v1016, %v1066
    %v1145 = vmax.f32 %v1017, %v1068
    %v1146 = vmax.f32 %v1018, %v1070
    %v1147 = vmax.f32 %v1019, %v1072
    %v1148 = vmax.f32 %v1020, %v1074
    %v1149 = vmax.f32 %v1021, %v1076
    %v1150 = vmax.f32 %v1022, %v1078
    %v1151 = vmax.f32 %v1023, %v1080
    %v1152 = vmax.f32 %v1024, %v1082
    %v1153 = vmax.f32 %v1025, %v1084
    %v1154 = vmax.f32 %v1026, %v1086
    %v1155 = vmax.f32 %v1027, %v1088
    %v1156 = vmax.f32 %v1028, %v1090
    %v1157 = vmax.f32 %v1029, %v1092
    %v1158 = vmax.f32 %v1030, %v1094
    %vm1159 = vcmask 261120
    %1160 = vst.msk [vmem:[#allocation8] sm:$0xff] %vm1159, %v1127
    %1161 = vst.msk [vmem:[#allocation8 + $0x8] sm:$0xff] %vm1159, %v1128
    %1162 = vst.msk [vmem:[#allocation8 + $0x10] sm:$0xff] %vm1159, %v1129
    %1163 = vst.msk [vmem:[#allocation8 + $0x18] sm:$0xff] %vm1159, %v1130
    %1164 = vst.msk [vmem:[#allocation8 + $0x20] sm:$0xff] %vm1159, %v1131
    %1165 = vst.msk [vmem:[#allocation8 + $0x28] sm:$0xff] %vm1159, %v1132
    %1166 = vst.msk [vmem:[#allocation8 + $0x30] sm:$0xff] %vm1159, %v1133
    %1167 = vst.msk [vmem:[#allocation8 + $0x38] sm:$0xff] %vm1159, %v1134
    %1168 = vst.msk [vmem:[#allocation8 + $0x40] sm:$0xff] %vm1159, %v1135
    %1169 = vst.msk [vmem:[#allocation8 + $0x48] sm:$0xff] %vm1159, %v1136
    %1170 = vst.msk [vmem:[#allocation8 + $0x50] sm:$0xff] %vm1159, %v1137
    %1171 = vst.msk [vmem:[#allocation8 + $0x58] sm:$0xff] %vm1159, %v1138
    %1172 = vst.msk [vmem:[#allocation8 + $0x60] sm:$0xff] %vm1159, %v1139
    %1173 = vst.msk [vmem:[#allocation8 + $0x68] sm:$0xff] %vm1159, %v1140
    %1174 = vst.msk [vmem:[#allocation8 + $0x70] sm:$0xff] %vm1159, %v1141
    %1175 = vst.msk [vmem:[#allocation8 + $0x78] sm:$0xff] %vm1159, %v1142
    %1176 = vst.msk [vmem:[#allocation8 + $0x80] sm:$0xff] %vm1159, %v1143
    %1177 = vst.msk [vmem:[#allocation8 + $0x88] sm:$0xff] %vm1159, %v1144
    %1178 = vst.msk [vmem:[#allocation8 + $0x90] sm:$0xff] %vm1159, %v1145
    %1179 = vst.msk [vmem:[#allocation8 + $0x98] sm:$0xff] %vm1159, %v1146
    %1180 = vst.msk [vmem:[#allocation8 + $0xa0] sm:$0xff] %vm1159, %v1147
    %1181 = vst.msk [vmem:[#allocation8 + $0xa8] sm:$0xff] %vm1159, %v1148
    %1182 = vst.msk [vmem:[#allocation8 + $0xb0] sm:$0xff] %vm1159, %v1149
    %1183 = vst.msk [vmem:[#allocation8 + $0xb8] sm:$0xff] %vm1159, %v1150
    %1184 = vst.msk [vmem:[#allocation8 + $0xc0] sm:$0xff] %vm1159, %v1151
    %1185 = vst.msk [vmem:[#allocation8 + $0xc8] sm:$0xff] %vm1159, %v1152
    %1186 = vst.msk [vmem:[#allocation8 + $0xd0] sm:$0xff] %vm1159, %v1153
    %1187 = vst.msk [vmem:[#allocation8 + $0xd8] sm:$0xff] %vm1159, %v1154
    %1188 = vst.msk [vmem:[#allocation8 + $0xe0] sm:$0xff] %vm1159, %v1155
    %1189 = vst.msk [vmem:[#allocation8 + $0xe8] sm:$0xff] %vm1159, %v1156
    %1190 = vst.msk [vmem:[#allocation8 + $0xf0] sm:$0xff] %vm1159, %v1157
    %1191 = vst.msk [vmem:[#allocation8 + $0xf8] sm:$0xff] %vm1159, %v1158
    %v1192 = vsel %vm1159, %v1127, 0.0
    %v1193 = vsel %vm1159, %v1128, 0.0
    %v1194 = vadd.f32 %v1192, %v1193
    %v1195 = vsel %vm1159, %v1129, 0.0
    %v1196 = vadd.f32 %v1194, %v1195
    %v1197 = vsel %vm1159, %v1130, 0.0
    %v1198 = vadd.f32 %v1196, %v1197
    %v1199 = vsel %vm1159, %v1131, 0.0
    %v1200 = vadd.f32 %v1198, %v1199
    %v1201 = vsel %vm1159, %v1132, 0.0
    %v1202 = vadd.f32 %v1200, %v1201
    %v1203 = vsel %vm1159, %v1133, 0.0
    %v1204 = vadd.f32 %v1202, %v1203
    %v1205 = vsel %vm1159, %v1134, 0.0
    %v1206 = vadd.f32 %v1204, %v1205
    %v1207 = vsel %vm1159, %v1135, 0.0
    %v1208 = vadd.f32 %v1206, %v1207
    %v1209 = vsel %vm1159, %v1136, 0.0
    %v1210 = vadd.f32 %v1208, %v1209
    %v1211 = vsel %vm1159, %v1137, 0.0
    %v1212 = vadd.f32 %v1210, %v1211
    %v1213 = vsel %vm1159, %v1138, 0.0
    %v1214 = vadd.f32 %v1212, %v1213
    %v1215 = vsel %vm1159, %v1139, 0.0
    %v1216 = vadd.f32 %v1214, %v1215
    %v1217 = vsel %vm1159, %v1140, 0.0
    %v1218 = vadd.f32 %v1216, %v1217
    %v1219 = vsel %vm1159, %v1141, 0.0
    %v1220 = vadd.f32 %v1218, %v1219
    %v1221 = vsel %vm1159, %v1142, 0.0
    %v1222 = vadd.f32 %v1220, %v1221
    %v1223 = vsel %vm1159, %v1143, 0.0
    %v1224 = vadd.f32 %v1222, %v1223
    %v1225 = vsel %vm1159, %v1144, 0.0
    %v1226 = vadd.f32 %v1224, %v1225
    %v1227 = vsel %vm1159, %v1145, 0.0
    %v1228 = vadd.f32 %v1226, %v1227
    %v1229 = vsel %vm1159, %v1146, 0.0
    %v1230 = vadd.f32 %v1228, %v1229
    %v1231 = vsel %vm1159, %v1147, 0.0
    %v1232 = vadd.f32 %v1230, %v1231
    %v1233 = vsel %vm1159, %v1148, 0.0
    %v1234 = vadd.f32 %v1232, %v1233
    %v1235 = vsel %vm1159, %v1149, 0.0
    %v1236 = vadd.f32 %v1234, %v1235
    %v1237 = vsel %vm1159, %v1150, 0.0
    %v1238 = vadd.f32 %v1236, %v1237
    %v1239 = vsel %vm1159, %v1151, 0.0
    %v1240 = vadd.f32 %v1238, %v1239
    %v1241 = vsel %vm1159, %v1152, 0.0
    %v1242 = vadd.f32 %v1240, %v1241
    %v1243 = vsel %vm1159, %v1153, 0.0
    %v1244 = vadd.f32 %v1242, %v1243
    %v1245 = vsel %vm1159, %v1154, 0.0
    %v1246 = vadd.f32 %v1244, %v1245
    %v1247 = vsel %vm1159, %v1155, 0.0
    %v1248 = vadd.f32 %v1246, %v1247
    %v1249 = vsel %vm1159, %v1156, 0.0
    %v1250 = vadd.f32 %v1248, %v1249
    %v1251 = vsel %vm1159, %v1157, 0.0
    %v1252 = vadd.f32 %v1250, %v1251
    %v1253 = vsel %vm1159, %v1158, 0.0
    %v1254 = vadd.f32 %v1252, %v1253
    %v1255 = vrot.slane %v1254, 4
    %v1256 = vadd.f32 %v1254, %v1255
    %v1257 = vrot.slane %v1256, 2
    %v1258 = vadd.f32 %v1256, %v1257
    %v1259 = vrot.slane %v1258, 1
    %v1260 = vadd.f32 %v1258, %v1259
    %v1261 = vmul.f32 %v1127, %v1127
    %v1262 = vmul.f32 %v1128, %v1128
    %v1263 = vmul.f32 %v1129, %v1129
    %v1264 = vmul.f32 %v1130, %v1130
    %v1265 = vmul.f32 %v1131, %v1131
    %v1266 = vmul.f32 %v1132, %v1132
    %v1267 = vmul.f32 %v1133, %v1133
    %v1268 = vmul.f32 %v1134, %v1134
    %v1269 = vmul.f32 %v1135, %v1135
    %v1270 = vmul.f32 %v1136, %v1136
    %v1271 = vmul.f32 %v1137, %v1137
    %v1272 = vmul.f32 %v1138, %v1138
    %v1273 = vmul.f32 %v1139, %v1139
    %v1274 = vmul.f32 %v1140, %v1140
    %v1275 = vmul.f32 %v1141, %v1141
    %v1276 = vmul.f32 %v1142, %v1142
    %v1277 = vmul.f32 %v1143, %v1143
    %v1278 = vmul.f32 %v1144, %v1144
    %v1279 = vmul.f32 %v1145, %v1145
    %v1280 = vmul.f32 %v1146, %v1146
    %v1281 = vmul.f32 %v1147, %v1147
    %v1282 = vmul.f32 %v1148, %v1148
    %v1283 = vmul.f32 %v1149, %v1149
    %v1284 = vmul.f32 %v1150, %v1150
    %v1285 = vmul.f32 %v1151, %v1151
    %v1286 = vmul.f32 %v1152, %v1152
    %v1287 = vmul.f32 %v1153, %v1153
    %v1288 = vmul.f32 %v1154, %v1154
    %v1289 = vmul.f32 %v1155, %v1155
    %v1290 = vmul.f32 %v1156, %v1156
    %v1291 = vmul.f32 %v1157, %v1157
    %v1292 = vmul.f32 %v1158, %v1158
    %v1293 = vsel %vm1159, %v1261, 0.0
    %v1294 = vsel %vm1159, %v1262, 0.0
    %v1295 = vadd.f32 %v1293, %v1294
    %v1296 = vsel %vm1159, %v1263, 0.0
    %v1297 = vadd.f32 %v1295, %v1296
    %v1298 = vsel %vm1159, %v1264, 0.0
    %v1299 = vadd.f32 %v1297, %v1298
    %v1300 = vsel %vm1159, %v1265, 0.0
    %v1301 = vadd.f32 %v1299, %v1300
    %v1302 = vsel %vm1159, %v1266, 0.0
    %v1303 = vadd.f32 %v1301, %v1302
    %v1304 = vsel %vm1159, %v1267, 0.0
    %v1305 = vadd.f32 %v1303, %v1304
    %v1306 = vsel %vm1159, %v1268, 0.0
    %v1307 = vadd.f32 %v1305, %v1306
    %v1308 = vsel %vm1159, %v1269, 0.0
    %v1309 = vadd.f32 %v1307, %v1308
    %v1310 = vsel %vm1159, %v1270, 0.0
    %v1311 = vadd.f32 %v1309, %v1310
    %v1312 = vsel %vm1159, %v1271, 0.0
    %v1313 = vadd.f32 %v1311, %v1312
    %v1314 = vsel %vm1159, %v1272, 0.0
    %v1315 = vadd.f32 %v1313, %v1314
    %v1316 = vsel %vm1159, %v1273, 0.0
    %v1317 = vadd.f32 %v1315, %v1316
    %v1318 = vsel %vm1159, %v1274, 0.0
    %v1319 = vadd.f32 %v1317, %v1318
    %v1320 = vsel %vm1159, %v1275, 0.0
    %v1321 = vadd.f32 %v1319, %v1320
    %v1322 = vsel %vm1159, %v1276, 0.0
    %v1323 = vadd.f32 %v1321, %v1322
    %v1324 = vsel %vm1159, %v1277, 0.0
    %v1325 = vadd.f32 %v1323, %v1324
    %v1326 = vsel %vm1159, %v1278, 0.0
    %v1327 = vadd.f32 %v1325, %v1326
    %v1328 = vsel %vm1159, %v1279, 0.0
    %v1329 = vadd.f32 %v1327, %v1328
    %v1330 = vsel %vm1159, %v1280, 0.0
    %v1331 = vadd.f32 %v1329, %v1330
    %v1332 = vsel %vm1159, %v1281, 0.0
    %v1333 = vadd.f32 %v1331, %v1332
    %v1334 = vsel %vm1159, %v1282, 0.0
    %v1335 = vadd.f32 %v1333, %v1334
    %v1336 = vsel %vm1159, %v1283, 0.0
    %v1337 = vadd.f32 %v1335, %v1336
    %v1338 = vsel %vm1159, %v1284, 0.0
    %v1339 = vadd.f32 %v1337, %v1338
    %v1340 = vsel %vm1159, %v1285, 0.0
    %v1341 = vadd.f32 %v1339, %v1340
    %v1342 = vsel %vm1159, %v1286, 0.0
    %v1343 = vadd.f32 %v1341, %v1342
    %v1344 = vsel %vm1159, %v1287, 0.0
    %v1345 = vadd.f32 %v1343, %v1344
    %v1346 = vsel %vm1159, %v1288, 0.0
    %v1347 = vadd.f32 %v1345, %v1346
    %v1348 = vsel %vm1159, %v1289, 0.0
    %v1349 = vadd.f32 %v1347, %v1348
    %v1350 = vsel %vm1159, %v1290, 0.0
    %v1351 = vadd.f32 %v1349, %v1350
    %v1352 = vsel %vm1159, %v1291, 0.0
    %v1353 = vadd.f32 %v1351, %v1352
    %v1354 = vsel %vm1159, %v1292, 0.0
    %v1355 = vadd.f32 %v1353, %v1354
    %v1356 = vrot.slane %v1355, 4
    %v1357 = vadd.f32 %v1355, %v1356
    %v1358 = vrot.slane %v1357, 2
    %v1359 = vadd.f32 %v1357, %v1358
    %v1360 = vrot.slane %v1359, 1
    %v1361 = vadd.f32 %v1359, %v1360
    %vm1362 = vcmask 1040384
    %v1363 = vsel %vm1362, %v1260, %v1361
    %vm1364 = vcmask 254976
    %1365 = vst.msk [vmem:[#allocation9] sm:$0x3] %vm1364, %v1363
    // Predicated region
    $region26: #{oracle_forward.34} parent=1 // pred_check
      _
    $region27: #{oracle_forward.34} parent=1 // pred_check_branch
      %1367 = sbr.rel (0) target = $region29
    $region28: #{oracle_forward.34} parent=1 // pred_region
      %s1369 = ssub.s32 4096, 4096
      %1370 = vsyncadd [#allocation4], %s1369
      %s1371 = sshll.u32 [#allocation8], 4
      %s1372 = int_to_ptr.vmem [resolvable:$true] %s1371
      %1377 = dma.vmem_to_hbm [thread:$0]  %s1372, 4096, %s3, [#allocation4], 128, 128, 8
    $region29: #{oracle_forward.34} parent=1 // pred_fallthru
      _
    // Predicated region
    $region30: #{oracle_forward.34} parent=1 // pred_check
      _
    $region31: #{oracle_forward.34} parent=1 // pred_check_branch
      %1379 = sbr.rel (0) target = $region33
    $region32: #{oracle_forward.34} parent=1 // pred_region
      %s1381 = ssub.s32 32, 32
      %1382 = vsyncadd [#allocation10], %s1381
      %s1384 = sshll.u32 [#allocation9], 4
      %s1385 = int_to_ptr.vmem [resolvable:$true] %s1384
      %1387 = dma.vmem_to_hbm [thread:$0]  %s1385, 32, %s4, [#allocation10]
    $region33: #{oracle_forward.34} parent=1 // pred_fallthru
      _
    // Predicated region
    $region34: #{oracle_forward.34} parent=1 // pred_check
      _
    $region35: #{oracle_forward.34} parent=1 // pred_check_branch
      %1389 = sbr.rel (0) target = $region37
    $region36: #{oracle_forward.34} parent=1 // pred_region
      %1390 = dma.done [#allocation4], 4096
    $region37: #{oracle_forward.34} parent=1 // pred_fallthru
      _
    // Predicated region
    $region38: #{oracle_forward.34} parent=1 // pred_check
      _
    $region39: #{oracle_forward.34} parent=1 // pred_check_branch
      %1392 = sbr.rel (0) target = $region41
    $region40: #{oracle_forward.34} parent=1 // pred_region
      %1393 = dma.done [#allocation10], 32
    $region41: #{oracle_forward.34} parent=1 // pred_fallthru
      _
    %1394 = vsyncpa [#allocation3], 1
    %1395 = vsyncpa [#allocation6], 1
    %1396 = vsyncpa [#allocation4], 1
    %1397 = vsyncpa [#allocation10], 1

// kernel: oracle_forward.36
$region0: #{oracle_forward.36}
  #allocation0 [shape = 'u32[]', space=smem, size = 0x4, offset = 0x4, fixed_abs, tag = 'smem constant byte address 0x4 - core index']
  #allocation1 [shape = 'u32[144,128]{1,0:T(1,128)}', space=vmem, size = 0x12000, scoped, tag = 'internal scratch']
  %s0 = inlined_call_operand.hbm [shape: f32[20,20,32], index: 0, kind: input, shape index: {}, may-alias: {0,1,2,3,4}]
  %s1 = inlined_call_operand.hbm [shape: f32[20,20,32], index: 1, kind: input, shape index: {}, may-alias: {0,1,2,3,4}]
  %s2 = inlined_call_operand.hbm [shape: f32[20,20,32], index: 2, kind: input, shape index: {}, may-alias: {0,1,2,3,4}]
  %s3 = inlined_call_operand.hbm [shape: f32[20,20,32], index: 3, kind: input, shape index: {}, may-alias: {0,1,2,3,4}]
  %s4 = inlined_call_operand.hbm [shape: f32[20,20,32], index: 4, kind: input, shape index: {}, may-alias: {0,1,2,3,4}]
  %s5 = inlined_call_operand.hbm [shape: bf16[800,128], index: 5, kind: input, shape index: {}]
  %s6 = inlined_call_operand.hbm [shape: f32[1,128], index: 6, kind: input, shape index: {}]
  %s7 = inlined_call_operand.hbm [shape: f32[256,32], index: 7, kind: output, shape index: {0}]
  %s8 = inlined_call_operand.hbm [shape: f32[16,2,32], index: 8, kind: output, shape index: {1}]
  %9 = xla_tuple %s7, %s8
  %s10 = sld [smem:[#allocation0]]
  $region97: #{oracle_forward.36} parent=0
    _
  %s12 = ssub.s32 1, %s10
  %s13 = scalar_select 0, %s12, %s10
  $region1: #{oracle_forward.36} parent=0
    #allocation2 [shape = 'u8[24576]{0}', space=vmem, size = 0x6000, scoped, tag = 'input window, operand 0']
    #allocation3 [shape = 's32[2]{0}', space=sflag, size = 0x8, scoped, tag = 'scoped memory for oracle_forward.36']
    #allocation4 [shape = 's32[2]{0}', space=sflag, size = 0x8, scoped, tag = 'scoped memory for oracle_forward.36']
    #allocation5 [shape = 'u8[24576]{0}', space=vmem, size = 0x6000, scoped, tag = 'input window, operand 1']
    #allocation6 [shape = 's32[2]{0}', space=sflag, size = 0x8, scoped, tag = 'scoped memory for oracle_forward.36']
    #allocation7 [shape = 'u8[24576]{0}', space=vmem, size = 0x6000, scoped, tag = 'input window, operand 2']
    #allocation8 [shape = 'u8[24576]{0}', space=vmem, size = 0x6000, scoped, tag = 'input window, operand 3']
    #allocation9 [shape = 's32[2]{0}', space=sflag, size = 0x8, scoped, tag = 'scoped memory for oracle_forward.36']
    #allocation10 [shape = 'u8[24576]{0}', space=vmem, size = 0x6000, scoped, tag = 'input window, operand 4']
    #allocation11 [shape = 'u8[204800]{0}', space=vmem, size = 0x32000, scoped, tag = 'input window, operand 5, single buffered']
    #allocation12 [shape = 's32[1]{0}', space=sflag, size = 0x4, scoped, tag = 'scoped memory for oracle_forward.36']
    #allocation13 [shape = 'u8[512]{0}', space=vmem, size = 0x400, scoped, tag = 'input window, operand 6, single buffered']
    #allocation14 [shape = 'u8[16384]{0}', space=vmem, size = 0x4000, scoped, tag = 'output window, operand 0']
    #allocation15 [shape = 'u8[2048]{0}', space=vmem, size = 0x800, scoped, tag = 'output window, operand 1']
    #allocation16 [shape = 's32[2]{0}', space=sflag, size = 0x8, scoped, tag = 'scoped memory for oracle_forward.36']
    %14 = vsyncpa [#allocation3], 0
    %s15 = scalar_lea.sflag [#allocation3], 1
    %16 = vsyncpa %s15, 0
    %17 = vsyncpa [#allocation6], 0
    %s18 = scalar_lea.sflag [#allocation6], 1
    %19 = vsyncpa %s18, 0
    %20 = vsyncpa [#allocation9], 0
    %s21 = scalar_lea.sflag [#allocation9], 1
    %22 = vsyncpa %s21, 0
    %23 = vsyncpa [#allocation12], 0
    %24 = vsyncpa [#allocation4], 0
    %s25 = scalar_lea.sflag [#allocation4], 1
    %26 = vsyncpa %s25, 0
    %27 = vsyncpa [#allocation16], 0
    %s28 = scalar_lea.sflag [#allocation16], 1
    %29 = vsyncpa %s28, 0
    loop: start=0, step=1, limit=18
    $region2: #{oracle_forward.36} parent=1 // loop_pre_header
      _
    $region3: #{oracle_forward.36} parent=1 // loop_header
      %s31 = sphi 0, %s35
      %p32 = scmp.ge.s32.totalorder %s31, 18
      %s41 = sphi 0, %s43
      %s44 = sphi 0, %s41
      %s45 = sphi 0, %s44
      %s61 = sphi 0, %s45
      %s69 = sphi 0, %s71
      %s72 = sphi 0, %s69
      %s73 = sphi 0, %s72
      %s89 = sphi 0, %s73
      %s97 = sphi 0, %s99
      %s100 = sphi 0, %s97
      %s101 = sphi 0, %s100
      %s117 = sphi 0, %s101
      %s125 = sphi 0, %s127
      %s128 = sphi 0, %s125
      %s129 = sphi 0, %s128
      %s145 = sphi 0, %s129
      %s153 = sphi 0, %s155
      %s156 = sphi 0, %s153
      %s157 = sphi 0, %s156
      %s173 = sphi 0, %s157
      %s177 = sphi 0, %s177
      %s179 = sphi 0, %s177
      %s180 = sphi 0, %s179
      %s194 = sphi 0, %s180
      %s198 = sphi 0, %s198
      %s200 = sphi 0, %s198
      %s201 = sphi 0, %s200
      %s215 = sphi 0, %s201
      %s221 = sphi 0, %s223
      %s224 = sphi 0, %s221
      %s225 = sphi 0, %s224
      %s241 = sphi 0, %s225
      %s247 = sphi 0, %s249
      %s250 = sphi 0, %s247
      %s251 = sphi 0, %s250
      %s267 = sphi 0, %s251
    $region4: #{oracle_forward.36} parent=1 // loop_header_branch
      %34 = sbr.rel (%p32) target = $region8
    $region5: #{oracle_forward.36} parent=1 // loop_body
      %s36 = ssub.s32 %s31, 1
      %s37 = ssub.s32 %s31, 2
      %s38 = sadd.s32 %s31, 1
      %s39 = ssub.s32 %s31, %s38
      %p40 = scmp.eq.s32.totalorder %s39, 0
      %s42 = sadd.s32 %s41, 1
      %s43 = scalar_select %p40, %s41, %s42
      %p46 = pneg %p40
      %p47 = scmp.eq.s32.totalorder %s31, 15
      %p48 = por %p46, %p47
      %p49 = scmp.ne.s32.totalorder %s41, %s44
      %p50 = scmp.eq.s32.totalorder %s31, 0
      %p51 = por %p49, %p50
      %p52 = scmp.ne.s32.totalorder %s41, %s44
      %p53 = scmp.eq.s32.totalorder %s36, 15
      %p54 = por %p52, %p53
      %p55 = scmp.ne.s32.totalorder %s44, %s45
      %p56 = scmp.eq.s32.totalorder %s36, 0
      %p57 = por %p55, %p56
      %p58 = scmp.ne.s32.totalorder %s44, %s45
      %p59 = scmp.eq.s32.totalorder %s37, 15
      %p60 = por %p58, %p59
      %p62 = scmp.ne.s32.totalorder %s45, %s61
      %p63 = scmp.eq.s32.totalorder %s37, 0
      %p64 = por %p62, %p63
      %s65 = sadd.s32 %s31, 1
      %s66 = sadd.s32 %s38, 1
      %s67 = ssub.s32 %s65, %s66
      %p68 = scmp.eq.s32.totalorder %s67, 0
      %s70 = sadd.s32 %s69, 1
      %s71 = scalar_select %p68, %s69, %s70
      %p74 = pneg %p68
      %p75 = scmp.eq.s32.totalorder %s31, 15
      %p76 = por %p74, %p75
      %p77 = scmp.ne.s32.totalorder %s69, %s72
      %p78 = scmp.eq.s32.totalorder %s31, 0
      %p79 = por %p77, %p78
      %p80 = scmp.ne.s32.totalorder %s69, %s72
      %p81 = scmp.eq.s32.totalorder %s36, 15
      %p82 = por %p80, %p81
      %p83 = scmp.ne.s32.totalorder %s72, %s73
      %p84 = scmp.eq.s32.totalorder %s36, 0
      %p85 = por %p83, %p84
      %p86 = scmp.ne.s32.totalorder %s72, %s73
      %p87 = scmp.eq.s32.totalorder %s37, 15
      %p88 = por %p86, %p87
      %p90 = scmp.ne.s32.totalorder %s73, %s89
      %p91 = scmp.eq.s32.totalorder %s37, 0
      %p92 = por %p90, %p91
      %s93 = sadd.s32 %s31, 2
      %s94 = sadd.s32 %s38, 2
      %s95 = ssub.s32 %s93, %s94
      %p96 = scmp.eq.s32.totalorder %s95, 0
      %s98 = sadd.s32 %s97, 1
      %s99 = scalar_select %p96, %s97, %s98
      %p102 = pneg %p96
      %p103 = scmp.eq.s32.totalorder %s31, 15
      %p104 = por %p102, %p103
      %p105 = scmp.ne.s32.totalorder %s97, %s100
      %p106 = scmp.eq.s32.totalorder %s31, 0
      %p107 = por %p105, %p106
      %p108 = scmp.ne.s32.totalorder %s97, %s100
      %p109 = scmp.eq.s32.totalorder %s36, 15
      %p110 = por %p108, %p109
      %p111 = scmp.ne.s32.totalorder %s100, %s101
      %p112 = scmp.eq.s32.totalorder %s36, 0
      %p113 = por %p111, %p112
      %p114 = scmp.ne.s32.totalorder %s100, %s101
      %p115 = scmp.eq.s32.totalorder %s37, 15
      %p116 = por %p114, %p115
      %p118 = scmp.ne.s32.totalorder %s101, %s117
      %p119 = scmp.eq.s32.totalorder %s37, 0
      %p120 = por %p118, %p119
      %s121 = sadd.s32 %s31, 3
      %s122 = sadd.s32 %s38, 3
      %s123 = ssub.s32 %s121, %s122
      %p124 = scmp.eq.s32.totalorder %s123, 0
      %s126 = sadd.s32 %s125, 1
      %s127 = scalar_select %p124, %s125, %s126
      %p130 = pneg %p124
      %p131 = scmp.eq.s32.totalorder %s31, 15
      %p132 = por %p130, %p131
      %p133 = scmp.ne.s32.totalorder %s125, %s128
      %p134 = scmp.eq.s32.totalorder %s31, 0
      %p135 = por %p133, %p134
      %p136 = scmp.ne.s32.totalorder %s125, %s128
      %p137 = scmp.eq.s32.totalorder %s36, 15
      %p138 = por %p136, %p137
      %p139 = scmp.ne.s32.totalorder %s128, %s129
      %p140 = scmp.eq.s32.totalorder %s36, 0
      %p141 = por %p139, %p140
      %p142 = scmp.ne.s32.totalorder %s128, %s129
      %p143 = scmp.eq.s32.totalorder %s37, 15
      %p144 = por %p142, %p143
      %p146 = scmp.ne.s32.totalorder %s129, %s145
      %p147 = scmp.eq.s32.totalorder %s37, 0
      %p148 = por %p146, %p147
      %s149 = sadd.s32 %s31, 4
      %s150 = sadd.s32 %s38, 4
      %s151 = ssub.s32 %s149, %s150
      %p152 = scmp.eq.s32.totalorder %s151, 0
      %s154 = sadd.s32 %s153, 1
      %s155 = scalar_select %p152, %s153, %s154
      %p158 = pneg %p152
      %p159 = scmp.eq.s32.totalorder %s31, 15
      %p160 = por %p158, %p159
      %p161 = scmp.ne.s32.totalorder %s153, %s156
      %p162 = scmp.eq.s32.totalorder %s31, 0
      %p163 = por %p161, %p162
      %p164 = scmp.ne.s32.totalorder %s153, %s156
      %p165 = scmp.eq.s32.totalorder %s36, 15
      %p166 = por %p164, %p165
      %p167 = scmp.ne.s32.totalorder %s156, %s157
      %p168 = scmp.eq.s32.totalorder %s36, 0
      %p169 = por %p167, %p168
      %p170 = scmp.ne.s32.totalorder %s156, %s157
      %p171 = scmp.eq.s32.totalorder %s37, 15
      %p172 = por %p170, %p171
      %p174 = scmp.ne.s32.totalorder %s157, %s173
      %p175 = scmp.eq.s32.totalorder %s37, 0
      %p176 = por %p174, %p175
      %s178 = sadd.s32 %s177, 1
      %p181 = scmp.eq.s32.totalorder %s31, 15
      %p182 = scmp.ne.s32.totalorder %s177, %s179
      %p183 = scmp.eq.s32.totalorder %s31, 0
      %p184 = por %p182, %p183
      %p185 = scmp.ne.s32.totalorder %s177, %s179
      %p186 = scmp.eq.s32.totalorder %s36, 15
      %p187 = por %p185, %p186
      %p188 = scmp.ne.s32.totalorder %s179, %s180
      %p189 = scmp.eq.s32.totalorder %s36, 0
      %p190 = por %p188, %p189
      %p191 = scmp.ne.s32.totalorder %s179, %s180
      %p192 = scmp.eq.s32.totalorder %s37, 15
      %p193 = por %p191, %p192
      %p195 = scmp.ne.s32.totalorder %s180, %s194
      %p196 = scmp.eq.s32.totalorder %s37, 0
      %p197 = por %p195, %p196
      %s199 = sadd.s32 %s198, 1
      %p202 = scmp.eq.s32.totalorder %s31, 15
      %p203 = scmp.ne.s32.totalorder %s198, %s200
      %p204 = scmp.eq.s32.totalorder %s31, 0
      %p205 = por %p203, %p204
      %p206 = scmp.ne.s32.totalorder %s198, %s200
      %p207 = scmp.eq.s32.totalorder %s36, 15
      %p208 = por %p206, %p207
      %p209 = scmp.ne.s32.totalorder %s200, %s201
      %p210 = scmp.eq.s32.totalorder %s36, 0
      %p211 = por %p209, %p210
      %p212 = scmp.ne.s32.totalorder %s200, %s201
      %p213 = scmp.eq.s32.totalorder %s37, 15
      %p214 = por %p212, %p213
      %p216 = scmp.ne.s32.totalorder %s201, %s215
      %p217 = scmp.eq.s32.totalorder %s37, 0
      %p218 = por %p216, %p217
      %s219 = ssub.s32 %s31, %s38
      %p220 = scmp.eq.s32.totalorder %s219, 0
      %s222 = sadd.s32 %s221, 1
      %s223 = scalar_select %p220, %s221, %s222
      %p226 = pneg %p220
      %p227 = scmp.eq.s32.totalorder %s31, 15
      %p228 = por %p226, %p227
      %p229 = scmp.ne.s32.totalorder %s221, %s224
      %p230 = scmp.eq.s32.totalorder %s31, 0
      %p231 = por %p229, %p230
      %p232 = scmp.ne.s32.totalorder %s221, %s224
      %p233 = scmp.eq.s32.totalorder %s36, 15
      %p234 = por %p232, %p233
      %p235 = scmp.ne.s32.totalorder %s224, %s225
      %p236 = scmp.eq.s32.totalorder %s36, 0
      %p237 = por %p235, %p236
      %p238 = scmp.ne.s32.totalorder %s224, %s225
      %p239 = scmp.eq.s32.totalorder %s37, 15
      %p240 = por %p238, %p239
      %p242 = scmp.ne.s32.totalorder %s225, %s241
      %p243 = scmp.eq.s32.totalorder %s37, 0
      %p244 = por %p242, %p243
      %s245 = ssub.s32 %s31, %s38
      %p246 = scmp.eq.s32.totalorder %s245, 0
      %s248 = sadd.s32 %s247, 1
      %s249 = scalar_select %p246, %s247, %s248
      %p252 = pneg %p246
      %p253 = scmp.eq.s32.totalorder %s31, 15
      %p254 = por %p252, %p253
      %p255 = scmp.ne.s32.totalorder %s247, %s250
      %p256 = scmp.eq.s32.totalorder %s31, 0
      %p257 = por %p255, %p256
      %p258 = scmp.ne.s32.totalorder %s247, %s250
      %p259 = scmp.eq.s32.totalorder %s36, 15
      %p260 = por %p258, %p259
      %p261 = scmp.ne.s32.totalorder %s250, %s251
      %p262 = scmp.eq.s32.totalorder %s36, 0
      %p263 = por %p261, %p262
      %p264 = scmp.ne.s32.totalorder %s250, %s251
      %p265 = scmp.eq.s32.totalorder %s37, 15
      %p266 = por %p264, %p265
      %p268 = scmp.ne.s32.totalorder %s251, %s267
      %p269 = scmp.eq.s32.totalorder %s37, 0
      %p270 = por %p268, %p269
      %p271 = scmp.le.s32.totalorder 1, %s31
      %p272 = scmp.lt.s32.totalorder %s31, 17
      %p273 = pnand %p271, %p272
      %p274 = pneg %p273
      // Predicated region
      $region9: #{oracle_forward.36} parent=5 // pred_check
        _
      $region10: #{oracle_forward.36} parent=5 // pred_check_branch
        %276 = sbr.rel (%p273) target = $region12
      $region11: #{oracle_forward.36} parent=5 // pred_region
        %s277 = ssub.s32 %s31, 1
        // Predicated region
        $region13: #{oracle_forward.36} parent=11 // pred_check
          %p278 = pneg %p190
        $region14: #{oracle_forward.36} parent=11 // pred_check_branch
          %280 = sbr.rel (%p278) target = $region16
        $region15: #{oracle_forward.36} parent=11 // pred_region
          %s282 = ssub.s32 6400, 6400
          %283 = vsyncadd [#allocation12], %s282
          %s284 = sshll.u32 [#allocation11], 4
          %s285 = int_to_ptr.vmem [resolvable:$true] %s284
          %290 = dma.hbm_to_vmem [thread:$0]  %s5, 6400, %s285, [#allocation12], 64, 64, 4
        $region16: #{oracle_forward.36} parent=11 // pred_fallthru
          _
        // Predicated region
        $region17: #{oracle_forward.36} parent=11 // pred_check
          %p291 = pneg %p211
        $region18: #{oracle_forward.36} parent=11 // pred_check_branch
          %293 = sbr.rel (%p291) target = $region20
        $region19: #{oracle_forward.36} parent=11 // pred_region
          %s295 = ssub.s32 16, 16
          %296 = vsyncadd [#allocation12], %s295
          %s298 = sshll.u32 [#allocation13], 4
          %s299 = int_to_ptr.vmem [resolvable:$true] %s298
          %301 = dma.hbm_to_vmem [thread:$0]  %s6, 16, %s299, [#allocation12]
        $region20: #{oracle_forward.36} parent=11 // pred_fallthru
          _
      $region12: #{oracle_forward.36} parent=5 // pred_fallthru
        _
      %p302 = scmp.lt.s32.totalorder %s31, 16
      // Predicated region
      $region21: #{oracle_forward.36} parent=5 // pred_check
        %p303 = pneg %p302
      $region22: #{oracle_forward.36} parent=5 // pred_check_branch
        %305 = sbr.rel (%p303) target = $region24
      $region23: #{oracle_forward.36} parent=5 // pred_region
        // Predicated region
        $region25: #{oracle_forward.36} parent=23 // pred_check
          %p306 = pneg %p51
        $region26: #{oracle_forward.36} parent=23 // pred_check_branch
          %308 = sbr.rel (%p306) target = $region28
        $region27: #{oracle_forward.36} parent=23 // pred_region
          %s309 = sand.u32 %s41, 1
          %s310 = scalar_lea.sflag [#allocation3], %s309
          %s311 = sand.u32 %s41, 1
          %s312 = smul.addr %s311, 24
          %s313 = scalar_lea.vmem [#allocation2], %s312
          %s315 = ssub.s32 384, 384
          %316 = vsyncadd %s310, %s315
          %s317 = smul.addr %s31, 3
          %s318 = smul.addr %s317, 128
          %s319 = scalar_lea.hbm %s0, %s318
          %s320 = sshll.u32 %s313, 4
          %s321 = int_to_ptr.vmem [resolvable:$true] %s320
          %326 = dma.hbm_to_vmem [thread:$0]  %s319, 384, %s321, %s310, 128, 128, 8
        $region28: #{oracle_forward.36} parent=23 // pred_fallthru
          _
        // Predicated region
        $region29: #{oracle_forward.36} parent=23 // pred_check
          %p327 = pneg %p79
        $region30: #{oracle_forward.36} parent=23 // pred_check_branch
          %329 = sbr.rel (%p327) target = $region32
        $region31: #{oracle_forward.36} parent=23 // pred_region
          %s330 = sand.u32 %s31, 1
          %s331 = scalar_lea.sflag [#allocation6], %s330
          %s332 = sand.u32 %s69, 1
          %s333 = smul.addr %s332, 24
          %s334 = scalar_lea.vmem [#allocation5], %s333
          %s335 = sadd.s32 %s31, 1
          %s337 = ssub.s32 384, 384
          %338 = vsyncadd %s331, %s337
          %s339 = smul.addr %s335, 3
          %s340 = smul.addr %s339, 128
          %s341 = scalar_lea.hbm %s1, %s340
          %s342 = sshll.u32 %s334, 4
          %s343 = int_to_ptr.vmem [resolvable:$true] %s342
          %348 = dma.hbm_to_vmem [thread:$0]  %s341, 384, %s343, %s331, 128, 128, 8
        $region32: #{oracle_forward.36} parent=23 // pred_fallthru
          _
        // Predicated region
        $region33: #{oracle_forward.36} parent=23 // pred_check
          %p349 = pneg %p107
        $region34: #{oracle_forward.36} parent=23 // pred_check_branch
          %351 = sbr.rel (%p349) target = $region36
        $region35: #{oracle_forward.36} parent=23 // pred_region
          %s352 = sand.u32 %s31, 1
          %s353 = scalar_lea.sflag [#allocation6], %s352
          %s354 = sand.u32 %s97, 1
          %s355 = smul.addr %s354, 24
          %s356 = scalar_lea.vmem [#allocation7], %s355
          %s357 = sadd.s32 %s31, 2
          %s359 = ssub.s32 384, 384
          %360 = vsyncadd %s353, %s359
          %s361 = smul.addr %s357, 3
          %s362 = smul.addr %s361, 128
          %s363 = scalar_lea.hbm %s2, %s362
          %s364 = sshll.u32 %s356, 4
          %s365 = int_to_ptr.vmem [resolvable:$true] %s364
          %370 = dma.hbm_to_vmem [thread:$0]  %s363, 384, %s365, %s353, 128, 128, 8
        $region36: #{oracle_forward.36} parent=23 // pred_fallthru
          _
        // Predicated region
        $region37: #{oracle_forward.36} parent=23 // pred_check
          %p371 = pneg %p135
        $region38: #{oracle_forward.36} parent=23 // pred_check_branch
          %373 = sbr.rel (%p371) target = $region40
        $region39: #{oracle_forward.36} parent=23 // pred_region
          %s374 = sand.u32 %s31, 1
          %s375 = scalar_lea.sflag [#allocation9], %s374
          %s376 = sand.u32 %s125, 1
          %s377 = smul.addr %s376, 24
          %s378 = scalar_lea.vmem [#allocation8], %s377
          %s379 = sadd.s32 %s31, 3
          %s381 = ssub.s32 384, 384
          %382 = vsyncadd %s375, %s381
          %s383 = smul.addr %s379, 3
          %s384 = smul.addr %s383, 128
          %s385 = scalar_lea.hbm %s3, %s384
          %s386 = sshll.u32 %s378, 4
          %s387 = int_to_ptr.vmem [resolvable:$true] %s386
          %392 = dma.hbm_to_vmem [thread:$0]  %s385, 384, %s387, %s375, 128, 128, 8
        $region40: #{oracle_forward.36} parent=23 // pred_fallthru
          _
        // Predicated region
        $region41: #{oracle_forward.36} parent=23 // pred_check
          %p393 = pneg %p163
        $region42: #{oracle_forward.36} parent=23 // pred_check_branch
          %395 = sbr.rel (%p393) target = $region44
        $region43: #{oracle_forward.36} parent=23 // pred_region
          %s396 = sand.u32 %s31, 1
          %s397 = scalar_lea.sflag [#allocation9], %s396
          %s398 = sand.u32 %s153, 1
          %s399 = smul.addr %s398, 24
          %s400 = scalar_lea.vmem [#allocation10], %s399
          %s401 = sadd.s32 %s31, 4
          %s403 = ssub.s32 384, 384
          %404 = vsyncadd %s397, %s403
          %s405 = smul.addr %s401, 3
          %s406 = smul.addr %s405, 128
          %s407 = scalar_lea.hbm %s4, %s406
          %s408 = sshll.u32 %s400, 4
          %s409 = int_to_ptr.vmem [resolvable:$true] %s408
          %414 = dma.hbm_to_vmem [thread:$0]  %s407, 384, %s409, %s397, 128, 128, 8
        $region44: #{oracle_forward.36} parent=23 // pred_fallthru
          _
      $region24: #{oracle_forward.36} parent=5 // pred_fallthru
        _
      %p415 = scmp.le.s32.totalorder 1, %s31
      %p416 = scmp.lt.s32.totalorder %s31, 17
      %p417 = pnand %p415, %p416
      %p418 = pneg %p417
      // Predicated region
      $region45: #{oracle_forward.36} parent=5 // pred_check
        _
      $region46: #{oracle_forward.36} parent=5 // pred_check_branch
        %420 = sbr.rel (%p417) target = $region48
      $region47: #{oracle_forward.36} parent=5 // pred_region
        %s421 = ssub.s32 %s31, 1
        %s422 = sand.u32 %s44, 1
        %s423 = scalar_lea.sflag [#allocation3], %s422
        %s424 = sand.u32 %s44, 1
        %s425 = smul.addr %s424, 24
        %s426 = scalar_lea.vmem [#allocation2], %s425
        // Predicated region
        $region49: #{oracle_forward.36} parent=47 // pred_check
          %p427 = pneg %p57
        $region50: #{oracle_forward.36} parent=47 // pred_check_branch
          %429 = sbr.rel (%p427) target = $region52
        $region51: #{oracle_forward.36} parent=47 // pred_region
          %430 = dma.done %s423, 384
        $region52: #{oracle_forward.36} parent=47 // pred_fallthru
          _
        %s431 = sand.u32 %s36, 1
        %s432 = scalar_lea.sflag [#allocation6], %s431
        %s433 = sand.u32 %s72, 1
        %s434 = smul.addr %s433, 24
        %s435 = scalar_lea.vmem [#allocation5], %s434
        // Predicated region
        $region53: #{oracle_forward.36} parent=47 // pred_check
          %p436 = pneg %p85
        $region54: #{oracle_forward.36} parent=47 // pred_check_branch
          %438 = sbr.rel (%p436) target = $region56
        $region55: #{oracle_forward.36} parent=47 // pred_region
          %439 = dma.done %s432, 384
        $region56: #{oracle_forward.36} parent=47 // pred_fallthru
          _
        %s440 = sand.u32 %s36, 1
        %s441 = scalar_lea.sflag [#allocation6], %s440
        %s442 = sand.u32 %s100, 1
        %s443 = smul.addr %s442, 24
        %s444 = scalar_lea.vmem [#allocation7], %s443
        // Predicated region
        $region57: #{oracle_forward.36} parent=47 // pred_check
          %p445 = pneg %p113
        $region58: #{oracle_forward.36} parent=47 // pred_check_branch
          %447 = sbr.rel (%p445) target = $region60
        $region59: #{oracle_forward.36} parent=47 // pred_region
          %448 = dma.done %s441, 384
        $region60: #{oracle_forward.36} parent=47 // pred_fallthru
          _
        %s449 = sand.u32 %s36, 1
        %s450 = scalar_lea.sflag [#allocation9], %s449
        %s451 = sand.u32 %s128, 1
        %s452 = smul.addr %s451, 24
        %s453 = scalar_lea.vmem [#allocation8], %s452
        // Predicated region
        $region61: #{oracle_forward.36} parent=47 // pred_check
          %p454 = pneg %p141
        $region62: #{oracle_forward.36} parent=47 // pred_check_branch
          %456 = sbr.rel (%p454) target = $region64
        $region63: #{oracle_forward.36} parent=47 // pred_region
          %457 = dma.done %s450, 384
        $region64: #{oracle_forward.36} parent=47 // pred_fallthru
          _
        %s458 = sand.u32 %s36, 1
        %s459 = scalar_lea.sflag [#allocation9], %s458
        %s460 = sand.u32 %s156, 1
        %s461 = smul.addr %s460, 24
        %s462 = scalar_lea.vmem [#allocation10], %s461
        // Predicated region
        $region65: #{oracle_forward.36} parent=47 // pred_check
          %p463 = pneg %p169
        $region66: #{oracle_forward.36} parent=47 // pred_check_branch
          %465 = sbr.rel (%p463) target = $region68
        $region67: #{oracle_forward.36} parent=47 // pred_region
          %466 = dma.done %s459, 384
        $region68: #{oracle_forward.36} parent=47 // pred_fallthru
          _
        // Predicated region
        $region69: #{oracle_forward.36} parent=47 // pred_check
          %p467 = pneg %p190
        $region70: #{oracle_forward.36} parent=47 // pred_check_branch
          %469 = sbr.rel (%p467) target = $region72
        $region71: #{oracle_forward.36} parent=47 // pred_region
          %470 = dma.done [#allocation12], 6400
        $region72: #{oracle_forward.36} parent=47 // pred_fallthru
          _
        // Predicated region
        $region73: #{oracle_forward.36} parent=47 // pred_check
          %p471 = pneg %p211
        $region74: #{oracle_forward.36} parent=47 // pred_check_branch
          %473 = sbr.rel (%p471) target = $region76
        $region75: #{oracle_forward.36} parent=47 // pred_region
          %474 = dma.done [#allocation12], 16
        $region76: #{oracle_forward.36} parent=47 // pred_fallthru
          _
        %s475 = sand.u32 %s44, 1
        %s476 = scalar_lea.sflag [#allocation3], %s475
        %s477 = sand.u32 %s44, 1
        %s478 = smul.addr %s477, 24
        %s479 = scalar_lea.vmem [#allocation2], %s478
        %p480 = pneg %p57
        %p481 = pneg %p54
        %s482 = sand.u32 %s36, 1
        %s483 = scalar_lea.sflag [#allocation6], %s482
        %s484 = sand.u32 %s72, 1
        %s485 = smul.addr %s484, 24
        %s486 = scalar_lea.vmem [#allocation5], %s485
        %p487 = pneg %p85
        %p488 = pneg %p82
        %s489 = sand.u32 %s36, 1
        %s490 = scalar_lea.sflag [#allocation6], %s489
        %s491 = sand.u32 %s100, 1
        %s492 = smul.addr %s491, 24
        %s493 = scalar_lea.vmem [#allocation7], %s492
        %p494 = pneg %p113
        %p495 = pneg %p110
        %s496 = sand.u32 %s36, 1
        %s497 = scalar_lea.sflag [#allocation9], %s496
        %s498 = sand.u32 %s128, 1
        %s499 = smul.addr %s498, 24
        %s500 = scalar_lea.vmem [#allocation8], %s499
        %p501 = pneg %p141
        %p502 = pneg %p138
        %s503 = sand.u32 %s36, 1
        %s504 = scalar_lea.sflag [#allocation9], %s503
        %s505 = sand.u32 %s156, 1
        %s506 = smul.addr %s505, 24
        %s507 = scalar_lea.vmem [#allocation10], %s506
        %p508 = pneg %p169
        %p509 = pneg %p166
        %p510 = pneg %p190
        %p511 = pneg %p187
        %p512 = pneg %p211
        %p513 = pneg %p208
        %p514 = pneg %p237
        %p515 = pneg %p234
        %s516 = sand.u32 %s224, 1
        %s517 = scalar_lea.sflag [#allocation4], %s516
        %s518 = sand.u32 %s224, 1
        %s519 = smul.addr %s518, 16
        %s520 = scalar_lea.vmem [#allocation14], %s519
        %p521 = pneg %p263
        %p522 = pneg %p260
        %s523 = sand.u32 %s250, 1
        %s524 = scalar_lea.sflag [#allocation16], %s523
        %s525 = sand.u32 %s250, 1
        %s526 = smul.addr %s525, 2
        %s527 = scalar_lea.vmem [#allocation15], %s526
        %s528 = sadd.s32 %s36, 1
        %s529 = sadd.s32 %s36, 2
        %s530 = sadd.s32 %s36, 3
        %s531 = sadd.s32 %s36, 4
        %s532 = smul.u32 2, %s36
        %v534 = vld [vmem:[%s426] sm:$0xff]
        %v535 = vld [vmem:[%s426 + $0x8] sm:$0xff]
        %v536 = vld [vmem:[%s426 + $0x1] sm:$0xff]
        %v537 = vld [vmem:[%s426 + $0x9] sm:$0xff]
        %v538 = vld [vmem:[%s426 + $0x2] sm:$0xff]
        %v539 = vld [vmem:[%s426 + $0xa] sm:$0xff]
        %v540 = vld [vmem:[%s426 + $0x3] sm:$0xff]
        %v541 = vld [vmem:[%s426 + $0xb] sm:$0xff]
        %v542 = vld [vmem:[%s426 + $0x4] sm:$0xff]
        %v543 = vld [vmem:[%s426 + $0xc] sm:$0xff]
        %v544 = vld [vmem:[%s435] sm:$0xff]
        %v545 = vld [vmem:[%s435 + $0x8] sm:$0xff]
        %v546 = vld [vmem:[%s435 + $0x1] sm:$0xff]
        %v547 = vld [vmem:[%s435 + $0x9] sm:$0xff]
        %v548 = vld [vmem:[%s435 + $0x2] sm:$0xff]
        %v549 = vld [vmem:[%s435 + $0xa] sm:$0xff]
        %v550 = vld [vmem:[%s435 + $0x3] sm:$0xff]
        %v551 = vld [vmem:[%s435 + $0xb] sm:$0xff]
        %v552 = vld [vmem:[%s435 + $0x4] sm:$0xff]
        %v553 = vld [vmem:[%s435 + $0xc] sm:$0xff]
        %v554 = vld [vmem:[%s444] sm:$0xff]
        %v555 = vld [vmem:[%s444 + $0x8] sm:$0xff]
        %v556 = vld [vmem:[%s444 + $0x1] sm:$0xff]
        %v557 = vld [vmem:[%s444 + $0x9] sm:$0xff]
        %v558 = vld [vmem:[%s444 + $0x2] sm:$0xff]
        %v559 = vld [vmem:[%s444 + $0xa] sm:$0xff]
        %v560 = vld [vmem:[%s444 + $0x3] sm:$0xff]
        %v561 = vld [vmem:[%s444 + $0xb] sm:$0xff]
        %v562 = vld [vmem:[%s444 + $0x4] sm:$0xff]
        %v563 = vld [vmem:[%s444 + $0xc] sm:$0xff]
        %v564 = vld [vmem:[%s453] sm:$0xff]
        %v565 = vld [vmem:[%s453 + $0x8] sm:$0xff]
        %v566 = vld [vmem:[%s453 + $0x1] sm:$0xff]
        %v567 = vld [vmem:[%s453 + $0x9] sm:$0xff]
        %v568 = vld [vmem:[%s453 + $0x2] sm:$0xff]
        %v569 = vld [vmem:[%s453 + $0xa] sm:$0xff]
        %v570 = vld [vmem:[%s453 + $0x3] sm:$0xff]
        %v571 = vld [vmem:[%s453 + $0xb] sm:$0xff]
        %v572 = vld [vmem:[%s453 + $0x4] sm:$0xff]
        %v573 = vld [vmem:[%s453 + $0xc] sm:$0xff]
        %v574 = vld [vmem:[%s462] sm:$0xff]
        %v575 = vld [vmem:[%s462 + $0x8] sm:$0xff]
        %v576 = vld [vmem:[%s462 + $0x1] sm:$0xff]
        %v577 = vld [vmem:[%s462 + $0x9] sm:$0xff]
        %v578 = vld [vmem:[%s462 + $0x2] sm:$0xff]
        %v579 = vld [vmem:[%s462 + $0xa] sm:$0xff]
        %v580 = vld [vmem:[%s462 + $0x3] sm:$0xff]
        %v581 = vld [vmem:[%s462 + $0xb] sm:$0xff]
        %v582 = vld [vmem:[%s462 + $0x4] sm:$0xff]
        %v583 = vld [vmem:[%s462 + $0xc] sm:$0xff]
        %586 = vrot.lane.b32.xlu0 %v536, 32
        %v587 = vpop.permute.xlu0 %586
        %588 = vrot.lane.b32.xlu0 %v537, 32
        %v589 = vpop.permute.xlu0 %588
        %594 = vrot.lane.b32.xlu0 %v538, 64
        %v595 = vpop.permute.xlu0 %594
        %596 = vrot.lane.b32.xlu0 %v539, 64
        %v597 = vpop.permute.xlu0 %596
        %602 = vrot.lane.b32.xlu0 %v540, 96
        %v603 = vpop.permute.xlu0 %602
        %604 = vrot.lane.b32.xlu0 %v541, 96
        %v605 = vpop.permute.xlu0 %604
        %610 = vrot.lane.b32.xlu0 %v544, 32
        %v611 = vpop.permute.xlu0 %610
        %612 = vrot.lane.b32.xlu0 %v545, 32
        %v613 = vpop.permute.xlu0 %612
        %618 = vrot.lane.b32.xlu0 %v546, 64
        %v619 = vpop.permute.xlu0 %618
        %620 = vrot.lane.b32.xlu0 %v547, 64
        %v621 = vpop.permute.xlu0 %620
        %626 = vrot.lane.b32.xlu0 %v548, 96
        %v627 = vpop.permute.xlu0 %626
        %628 = vrot.lane.b32.xlu0 %v549, 96
        %v629 = vpop.permute.xlu0 %628
        %634 = vrot.lane.b32.xlu0 %v552, 32
        %v635 = vpop.permute.xlu0 %634
        %636 = vrot.lane.b32.xlu0 %v553, 32
        %v637 = vpop.permute.xlu0 %636
        %642 = vrot.lane.b32.xlu0 %v554, 64
        %v643 = vpop.permute.xlu0 %642
        %644 = vrot.lane.b32.xlu0 %v555, 64
        %v645 = vpop.permute.xlu0 %644
        %650 = vrot.lane.b32.xlu0 %v556, 96
        %v651 = vpop.permute.xlu0 %650
        %652 = vrot.lane.b32.xlu0 %v557, 96
        %v653 = vpop.permute.xlu0 %652
        %658 = vrot.lane.b32.xlu0 %v560, 32
        %v659 = vpop.permute.xlu0 %658
        %660 = vrot.lane.b32.xlu0 %v561, 32
        %v661 = vpop.permute.xlu0 %660
        %666 = vrot.lane.b32.xlu0 %v562, 64
        %v667 = vpop.permute.xlu0 %666
        %668 = vrot.lane.b32.xlu0 %v563, 64
        %v669 = vpop.permute.xlu0 %668
        %674 = vrot.lane.b32.xlu0 %v564, 96
        %v675 = vpop.permute.xlu0 %674
        %676 = vrot.lane.b32.xlu0 %v565, 96
        %v677 = vpop.permute.xlu0 %676
        %vm680 = vcmask 261120
        %v681 = vsel %vm680, %v534, %v587
        %v682 = vsel %vm680, %v535, %v589
        %vm683 = vcmask 523264
        %v684 = vsel %vm683, %v681, %v595
        %v685 = vsel %vm683, %v682, %v597
        %vm686 = vcmask 785408
        %v687 = vsel %vm686, %v684, %v603
        %v688 = vsel %vm686, %v685, %v605
        %v689 = vsel %vm680, %v542, %v611
        %v690 = vsel %vm680, %v543, %v613
        %v691 = vsel %vm683, %v689, %v619
        %v692 = vsel %vm683, %v690, %v621
        %v693 = vsel %vm686, %v691, %v627
        %v694 = vsel %vm686, %v692, %v629
        %v695 = vsel %vm680, %v550, %v635
        %v696 = vsel %vm680, %v551, %v637
        %v697 = vsel %vm683, %v695, %v643
        %v698 = vsel %vm683, %v696, %v645
        %v699 = vsel %vm686, %v697, %v651
        %v700 = vsel %vm686, %v698, %v653
        %v701 = vsel %vm680, %v558, %v659
        %v702 = vsel %vm680, %v559, %v661
        %v703 = vsel %vm683, %v701, %v667
        %v704 = vsel %vm683, %v702, %v669
        %v705 = vsel %vm686, %v703, %v675
        %v706 = vsel %vm686, %v704, %v677
        %709 = vrot.lane.b32.xlu0 %v568, 32
        %v710 = vpop.permute.xlu0 %709
        %711 = vrot.lane.b32.xlu0 %v569, 32
        %v712 = vpop.permute.xlu0 %711
        %717 = vrot.lane.b32.xlu0 %v570, 64
        %v718 = vpop.permute.xlu0 %717
        %719 = vrot.lane.b32.xlu0 %v571, 64
        %v720 = vpop.permute.xlu0 %719
        %725 = vrot.lane.b32.xlu0 %v572, 96
        %v726 = vpop.permute.xlu0 %725
        %727 = vrot.lane.b32.xlu0 %v573, 96
        %v728 = vpop.permute.xlu0 %727
        %733 = vrot.lane.b32.xlu0 %v576, 32
        %v734 = vpop.permute.xlu0 %733
        %735 = vrot.lane.b32.xlu0 %v577, 32
        %v736 = vpop.permute.xlu0 %735
        %741 = vrot.lane.b32.xlu0 %v578, 64
        %v742 = vpop.permute.xlu0 %741
        %743 = vrot.lane.b32.xlu0 %v579, 64
        %v744 = vpop.permute.xlu0 %743
        %749 = vrot.lane.b32.xlu0 %v580, 96
        %v750 = vpop.permute.xlu0 %749
        %751 = vrot.lane.b32.xlu0 %v581, 96
        %v752 = vpop.permute.xlu0 %751
        %v755 = vsel %vm680, %v566, %v710
        %v756 = vsel %vm680, %v567, %v712
        %v757 = vsel %vm683, %v755, %v718
        %v758 = vsel %vm683, %v756, %v720
        %v759 = vsel %vm686, %v757, %v726
        %v760 = vsel %vm686, %v758, %v728
        %v761 = vsel %vm680, %v574, %v734
        %v762 = vsel %vm680, %v575, %v736
        %v763 = vsel %vm683, %v761, %v742
        %v764 = vsel %vm683, %v762, %v744
        %v765 = vsel %vm686, %v763, %v750
        %v766 = vsel %vm686, %v764, %v752
        %v767 = vpack.c.bf16 %v688, %v687
        %v768 = vpack.c.bf16 %v694, %v693
        %v769 = vpack.c.bf16 %v700, %v699
        %v770 = vpack.c.bf16 %v706, %v705
        %v771 = vpack.c.bf16 %v760, %v759
        %v772 = vpack.c.bf16 %v766, %v765
        %v773 = vpack.c.bf16 %v583, %v582
        %v774 = vld [vmem:[#allocation11] sm:$0xf]
        %v775 = vld [vmem:[#allocation11 + $0x4] sm:$0xf]
        %v776 = vld [vmem:[#allocation11 + $0x8] sm:$0xf]
        %v777 = vld [vmem:[#allocation11 + $0xc] sm:$0xf]
        %v778 = vld [vmem:[#allocation11 + $0x10] sm:$0xf]
        %v779 = vld [vmem:[#allocation11 + $0x14] sm:$0xf]
        %v780 = vld [vmem:[#allocation11 + $0x18] sm:$0xf]
        %v781 = vld [vmem:[#allocation11 + $0x1c] sm:$0xf]
        %v782 = vld [vmem:[#allocation11 + $0x20] sm:$0xf]
        %v783 = vld [vmem:[#allocation11 + $0x24] sm:$0xf]
        %v784 = vld [vmem:[#allocation11 + $0x28] sm:$0xf]
        %v785 = vld [vmem:[#allocation11 + $0x2c] sm:$0xf]
        %v786 = vld [vmem:[#allocation11 + $0x30] sm:$0xf]
        %v787 = vld [vmem:[#allocation11 + $0x34] sm:$0xf]
        %v788 = vld [vmem:[#allocation11 + $0x38] sm:$0xf]
        %v789 = vld [vmem:[#allocation11 + $0x3c] sm:$0xf]
        %v790 = vld [vmem:[#allocation11 + $0x40] sm:$0xf]
        %v791 = vld [vmem:[#allocation11 + $0x44] sm:$0xf]
        %v792 = vld [vmem:[#allocation11 + $0x48] sm:$0xf]
        %v793 = vld [vmem:[#allocation11 + $0x4c] sm:$0xf]
        %v794 = vld [vmem:[#allocation11 + $0x50] sm:$0xf]
        %v795 = vld [vmem:[#allocation11 + $0x54] sm:$0xf]
        %v796 = vld [vmem:[#allocation11 + $0x58] sm:$0xf]
        %v797 = vld [vmem:[#allocation11 + $0x5c] sm:$0xf]
        %v798 = vld [vmem:[#allocation11 + $0x60] sm:$0xf]
        %v799 = vld [vmem:[#allocation11 + $0x64] sm:$0xf]
        %v800 = vld [vmem:[#allocation11 + $0x68] sm:$0xf]
        %v801 = vld [vmem:[#allocation11 + $0x6c] sm:$0xf]
        %v802 = vld [vmem:[#allocation11 + $0x70] sm:$0xf]
        %v803 = vld [vmem:[#allocation11 + $0x74] sm:$0xf]
        %v804 = vld [vmem:[#allocation11 + $0x78] sm:$0xf]
        %v805 = vld [vmem:[#allocation11 + $0x7c] sm:$0xf]
        %v806 = vld [vmem:[#allocation11 + $0x80] sm:$0xf]
        %v807 = vld [vmem:[#allocation11 + $0x84] sm:$0xf]
        %v808 = vld [vmem:[#allocation11 + $0x88] sm:$0xf]
        %v809 = vld [vmem:[#allocation11 + $0x8c] sm:$0xf]
        %v810 = vld [vmem:[#allocation11 + $0x90] sm:$0xf]
        %v811 = vld [vmem:[#allocation11 + $0x94] sm:$0xf]
        %v812 = vld [vmem:[#allocation11 + $0x98] sm:$0xf]
        %v813 = vld [vmem:[#allocation11 + $0x9c] sm:$0xf]
        %v814 = vld [vmem:[#allocation11 + $0xa0] sm:$0xf]
        %v815 = vld [vmem:[#allocation11 + $0xa4] sm:$0xf]
        %v816 = vld [vmem:[#allocation11 + $0xa8] sm:$0xf]
        %v817 = vld [vmem:[#allocation11 + $0xac] sm:$0xf]
        %v818 = vld [vmem:[#allocation11 + $0xb0] sm:$0xf]
        %v819 = vld [vmem:[#allocation11 + $0xb4] sm:$0xf]
        %v820 = vld [vmem:[#allocation11 + $0xb8] sm:$0xf]
        %v821 = vld [vmem:[#allocation11 + $0xbc] sm:$0xf]
        %v822 = vld [vmem:[#allocation11 + $0xc0] sm:$0xf]
        %v823 = vld [vmem:[#allocation11 + $0xc4] sm:$0xf]
        %v824 = vld [vmem:[#allocation11 + $0xc8] sm:$0xf]
        %v825 = vld [vmem:[#allocation11 + $0xcc] sm:$0xf]
        %v826 = vld [vmem:[#allocation11 + $0xd0] sm:$0xf]
        %v827 = vld [vmem:[#allocation11 + $0xd4] sm:$0xf]
        %v828 = vld [vmem:[#allocation11 + $0xd8] sm:$0xf]
        %v829 = vld [vmem:[#allocation11 + $0xdc] sm:$0xf]
        %v830 = vld [vmem:[#allocation11 + $0xe0] sm:$0xf]
        %v831 = vld [vmem:[#allocation11 + $0xe4] sm:$0xf]
        %v832 = vld [vmem:[#allocation11 + $0xe8] sm:$0xf]
        %v833 = vld [vmem:[#allocation11 + $0xec] sm:$0xf]
        %v834 = vld [vmem:[#allocation11 + $0xf0] sm:$0xf]
        %v835 = vld [vmem:[#allocation11 + $0xf4] sm:$0xf]
        %v836 = vld [vmem:[#allocation11 + $0xf8] sm:$0xf]
        %v837 = vld [vmem:[#allocation11 + $0xfc] sm:$0xf]
        %v838 = vld [vmem:[#allocation11 + $0x100] sm:$0xf]
        %v839 = vld [vmem:[#allocation11 + $0x104] sm:$0xf]
        %v840 = vld [vmem:[#allocation11 + $0x108] sm:$0xf]
        %v841 = vld [vmem:[#allocation11 + $0x10c] sm:$0xf]
        %v842 = vld [vmem:[#allocation11 + $0x110] sm:$0xf]
        %v843 = vld [vmem:[#allocation11 + $0x114] sm:$0xf]
        %v844 = vld [vmem:[#allocation11 + $0x118] sm:$0xf]
        %v845 = vld [vmem:[#allocation11 + $0x11c] sm:$0xf]
        %v846 = vld [vmem:[#allocation11 + $0x120] sm:$0xf]
        %v847 = vld [vmem:[#allocation11 + $0x124] sm:$0xf]
        %v848 = vld [vmem:[#allocation11 + $0x128] sm:$0xf]
        %v849 = vld [vmem:[#allocation11 + $0x12c] sm:$0xf]
        %v850 = vld [vmem:[#allocation11 + $0x130] sm:$0xf]
        %v851 = vld [vmem:[#allocation11 + $0x134] sm:$0xf]
        %v852 = vld [vmem:[#allocation11 + $0x138] sm:$0xf]
        %v853 = vld [vmem:[#allocation11 + $0x13c] sm:$0xf]
        %v854 = vld [vmem:[#allocation11 + $0x140] sm:$0xf]
        %v855 = vld [vmem:[#allocation11 + $0x144] sm:$0xf]
        %v856 = vld [vmem:[#allocation11 + $0x148] sm:$0xf]
        %v857 = vld [vmem:[#allocation11 + $0x14c] sm:$0xf]
        %v858 = vld [vmem:[#allocation11 + $0x150] sm:$0xf]
        %v859 = vld [vmem:[#allocation11 + $0x154] sm:$0xf]
        %v860 = vld [vmem:[#allocation11 + $0x158] sm:$0xf]
        %v861 = vld [vmem:[#allocation11 + $0x15c] sm:$0xf]
        %v862 = vld [vmem:[#allocation11 + $0x160] sm:$0xf]
        %v863 = vld [vmem:[#allocation11 + $0x164] sm:$0xf]
        %v864 = vld [vmem:[#allocation11 + $0x168] sm:$0xf]
        %v865 = vld [vmem:[#allocation11 + $0x16c] sm:$0xf]
        %v866 = vld [vmem:[#allocation11 + $0x170] sm:$0xf]
        %v867 = vld [vmem:[#allocation11 + $0x174] sm:$0xf]
        %v868 = vld [vmem:[#allocation11 + $0x178] sm:$0xf]
        %v869 = vld [vmem:[#allocation11 + $0x17c] sm:$0xf]
        %v870 = vld [vmem:[#allocation11 + $0x180] sm:$0xf]
        %v871 = vld [vmem:[#allocation11 + $0x184] sm:$0xf]
        %v872 = vld [vmem:[#allocation11 + $0x188] sm:$0xf]
        %v873 = vld [vmem:[#allocation11 + $0x18c] sm:$0xf]
        %v874 = vld [vmem:[#allocation13] sm:$0x1]
        %v876 = vlaneseq
        %v877 = vshrl.u32 %v876, 7
        %v878 = vsub.s32 0, %v877
        %v879 = vrot.slane %v874, %v878
        %v981 = vunpack.c.l.b16 %v774
        %v982 = vunpack.c.l.b16 %v775
        %v983 = vunpack.c.l.b16 %v776
        %v984 = vunpack.c.l.b16 %v777
        %v985 = vunpack.c.l.b16 %v778
        %v986 = vunpack.c.l.b16 %v779
        %v987 = vunpack.c.l.b16 %v780
        %v988 = vunpack.c.l.b16 %v781
        %v989 = vunpack.c.l.b16 %v782
        %v990 = vunpack.c.l.b16 %v783
        %v991 = vunpack.c.l.b16 %v784
        %v992 = vunpack.c.l.b16 %v785
        %v993 = vunpack.c.l.b16 %v786
        %v994 = vunpack.c.l.b16 %v787
        %v995 = vunpack.c.l.b16 %v788
        %v996 = vunpack.c.l.b16 %v789
        %v997 = vunpack.c.l.b16 %v790
        %v998 = vunpack.c.l.b16 %v791
        %v999 = vunpack.c.l.b16 %v792
        %v1000 = vunpack.c.l.b16 %v793
        %v1001 = vunpack.c.l.b16 %v794
        %v1002 = vunpack.c.l.b16 %v795
        %v1003 = vunpack.c.l.b16 %v796
        %v1004 = vunpack.c.l.b16 %v797
        %v1005 = vunpack.c.l.b16 %v798
        %v1006 = vunpack.c.l.b16 %v799
        %v1007 = vunpack.c.l.b16 %v800
        %v1008 = vunpack.c.l.b16 %v801
        %v1009 = vunpack.c.l.b16 %v802
        %v1010 = vunpack.c.l.b16 %v803
        %v1011 = vunpack.c.l.b16 %v804
        %v1012 = vunpack.c.l.b16 %v805
        %v1013 = vunpack.c.l.b16 %v806
        %v1014 = vunpack.c.l.b16 %v807
        %v1015 = vunpack.c.l.b16 %v808
        %v1016 = vunpack.c.l.b16 %v809
        %v1017 = vunpack.c.l.b16 %v810
        %v1018 = vunpack.c.l.b16 %v811
        %v1019 = vunpack.c.l.b16 %v812
        %v1020 = vunpack.c.l.b16 %v813
        %v1021 = vunpack.c.l.b16 %v814
        %v1022 = vunpack.c.l.b16 %v815
        %v1023 = vunpack.c.l.b16 %v816
        %v1024 = vunpack.c.l.b16 %v817
        %v1025 = vunpack.c.l.b16 %v818
        %v1026 = vunpack.c.l.b16 %v819
        %v1027 = vunpack.c.l.b16 %v820
        %v1028 = vunpack.c.l.b16 %v821
        %v1029 = vunpack.c.l.b16 %v822
        %v1030 = vunpack.c.l.b16 %v823
        %v1031 = vunpack.c.l.b16 %v824
        %v1032 = vunpack.c.l.b16 %v825
        %v1033 = vunpack.c.l.b16 %v826
        %v1034 = vunpack.c.l.b16 %v827
        %v1035 = vunpack.c.l.b16 %v828
        %v1036 = vunpack.c.l.b16 %v829
        %v1037 = vunpack.c.l.b16 %v830
        %v1038 = vunpack.c.l.b16 %v831
        %v1039 = vunpack.c.l.b16 %v832
        %v1040 = vunpack.c.l.b16 %v833
        %v1041 = vunpack.c.l.b16 %v834
        %v1042 = vunpack.c.l.b16 %v835
        %v1043 = vunpack.c.l.b16 %v836
        %v1044 = vunpack.c.l.b16 %v837
        %v1045 = vunpack.c.l.b16 %v838
        %v1046 = vunpack.c.l.b16 %v839
        %v1047 = vunpack.c.l.b16 %v840
        %v1048 = vunpack.c.l.b16 %v841
        %v1049 = vunpack.c.l.b16 %v842
        %v1050 = vunpack.c.l.b16 %v843
        %v1051 = vunpack.c.l.b16 %v844
        %v1052 = vunpack.c.l.b16 %v845
        %v1053 = vunpack.c.l.b16 %v846
        %v1054 = vunpack.c.l.b16 %v847
        %v1055 = vunpack.c.l.b16 %v848
        %v1056 = vunpack.c.l.b16 %v849
        %v1057 = vunpack.c.l.b16 %v850
        %v1058 = vunpack.c.l.b16 %v851
        %v1059 = vunpack.c.l.b16 %v852
        %v1060 = vunpack.c.l.b16 %v853
        %v1061 = vunpack.c.l.b16 %v854
        %v1062 = vunpack.c.l.b16 %v855
        %v1063 = vunpack.c.l.b16 %v856
        %v1064 = vunpack.c.l.b16 %v857
        %v1065 = vunpack.c.l.b16 %v858
        %v1066 = vunpack.c.l.b16 %v859
        %v1067 = vunpack.c.l.b16 %v860
        %v1068 = vunpack.c.l.b16 %v861
        %v1069 = vunpack.c.l.b16 %v862
        %v1070 = vunpack.c.l.b16 %v863
        %v1071 = vunpack.c.l.b16 %v864
        %v1072 = vunpack.c.l.b16 %v865
        %v1073 = vunpack.c.l.b16 %v866
        %v1074 = vunpack.c.l.b16 %v867
        %v1075 = vunpack.c.l.b16 %v868
        %v1076 = vunpack.c.l.b16 %v869
        %v1077 = vunpack.c.l.b16 %v870
        %v1078 = vunpack.c.l.b16 %v871
        %v1079 = vunpack.c.l.b16 %v872
        %v1080 = vunpack.c.l.b16 %v873
        %v1081 = vpack.c.b16 %v982, %v981
        %v1082 = vpack.c.b16 %v984, %v983
        %v1083 = vpack.c.b16 %v986, %v985
        %v1084 = vpack.c.b16 %v988, %v987
        %v1085 = vpack.c.b16 %v990, %v989
        %v1086 = vpack.c.b16 %v992, %v991
        %v1087 = vpack.c.b16 %v994, %v993
        %v1088 = vpack.c.b16 %v996, %v995
        %v1089 = vpack.c.b16 %v998, %v997
        %v1090 = vpack.c.b16 %v1000, %v999
        %v1091 = vpack.c.b16 %v1002, %v1001
        %v1092 = vpack.c.b16 %v1004, %v1003
        %v1093 = vpack.c.b16 %v1006, %v1005
        %v1094 = vpack.c.b16 %v1008, %v1007
        %v1095 = vpack.c.b16 %v1010, %v1009
        %v1096 = vpack.c.b16 %v1012, %v1011
        %v1097 = vpack.c.b16 %v1014, %v1013
        %v1098 = vpack.c.b16 %v1016, %v1015
        %v1099 = vpack.c.b16 %v1018, %v1017
        %v1100 = vpack.c.b16 %v1020, %v1019
        %v1101 = vpack.c.b16 %v1022, %v1021
        %v1102 = vpack.c.b16 %v1024, %v1023
        %v1103 = vpack.c.b16 %v1026, %v1025
        %v1104 = vpack.c.b16 %v1028, %v1027
        %v1105 = vpack.c.b16 %v1030, %v1029
        %v1106 = vpack.c.b16 %v1032, %v1031
        %v1107 = vpack.c.b16 %v1034, %v1033
        %v1108 = vpack.c.b16 %v1036, %v1035
        %v1109 = vpack.c.b16 %v1038, %v1037
        %v1110 = vpack.c.b16 %v1040, %v1039
        %v1111 = vpack.c.b16 %v1042, %v1041
        %v1112 = vpack.c.b16 %v1044, %v1043
        %v1113 = vpack.c.b16 %v1046, %v1045
        %v1114 = vpack.c.b16 %v1048, %v1047
        %v1115 = vpack.c.b16 %v1050, %v1049
        %v1116 = vpack.c.b16 %v1052, %v1051
        %v1117 = vpack.c.b16 %v1054, %v1053
        %v1118 = vpack.c.b16 %v1056, %v1055
        %v1119 = vpack.c.b16 %v1058, %v1057
        %v1120 = vpack.c.b16 %v1060, %v1059
        %v1121 = vpack.c.b16 %v1062, %v1061
        %v1122 = vpack.c.b16 %v1064, %v1063
        %v1123 = vpack.c.b16 %v1066, %v1065
        %v1124 = vpack.c.b16 %v1068, %v1067
        %v1125 = vpack.c.b16 %v1070, %v1069
        %v1126 = vpack.c.b16 %v1072, %v1071
        %v1127 = vpack.c.b16 %v1074, %v1073
        %v1128 = vpack.c.b16 %v1076, %v1075
        %v1129 = vpack.c.b16 %v1078, %v1077
        %v1130 = vpack.c.b16 %v1080, %v1079
        %v1182 = vsel %vm680, %v773, 0
        %1184 = vmatprep.subr.bf16.mxu0 0
        %1185 = vmatpush1.bf16.msra.mxu0 %v1081
        %1186 = vmatprep.subr.bf16.mxu0 0
        %1187 = vmatpush1.bf16.msra.mxu0 %v1082
        %1188 = vmatprep.subr.bf16.mxu0 0
        %1189 = vmatpush1.bf16.msra.mxu0 %v1083
        %1190 = vmatprep.subr.bf16.mxu0 0
        %1191 = vmatpush1.bf16.msra.mxu0 %v1084
        %1192 = vmatprep.subr.bf16.mxu0 0
        %1193 = vmatpush1.bf16.msra.mxu0 %v1085
        %1194 = vmatprep.subr.bf16.mxu0 0
        %1195 = vmatpush1.bf16.msra.mxu0 %v1086
        %1196 = vmatprep.subr.bf16.mxu0 0
        %1197 = vmatpush1.bf16.msra.mxu0 %v1087
        %1198 = vmatprep.subr.bf16.mxu0 0
        %1199 = vmatpush1.bf16.msra.mxu0 %v1088
        %1200 = vmatprep.subr.bf16.mxu0 0
        %1201 = vmatpush1.bf16.msra.mxu0 %v1089
        %1202 = vmatprep.subr.bf16.mxu0 0
        %1203 = vmatpush1.bf16.msra.mxu0 %v1090
        %1204 = vmatprep.subr.bf16.mxu0 0
        %1205 = vmatpush1.bf16.msra.mxu0 %v1091
        %1206 = vmatprep.subr.bf16.mxu0 0
        %1207 = vmatpush1.bf16.msra.mxu0 %v1092
        %1208 = vmatprep.subr.bf16.mxu0 0
        %1209 = vmatpush1.bf16.msra.mxu0 %v1093
        %1210 = vmatprep.subr.bf16.mxu0 0
        %1211 = vmatpush1.bf16.msra.mxu0 %v1094
        %1212 = vmatprep.subr.bf16.mxu0 0
        %1213 = vmatpush1.bf16.msra.mxu0 %v1095
        %1214 = vmatprep.subr.bf16.mxu0 0
        %1215 = vmatpush1.bf16.msra.mxu0 %v1096
        %1216 = vmatprep.mubr.bf16.mxu0 %v768
        %1217 = vmatmul.mubr.bf16.gmra.mrb[0].mxu0 %v767
        %v1218 = vpop.f32.mrb[0].mxu0
        %v1219 = vadd.f32 %v879, %v1218
        %v1220 = vpop.f32.mrb[0].mxu0
        %v1221 = vpop.f32.mrb[0].mxu0
        %v1222 = vadd.f32 %v879, %v1221
        %v1223 = vpop.f32.mrb[0].mxu0
        %1224 = vdwg.mxu0
        %1225 = vmatprep.subr.bf16.mxu0 0
        %1226 = vmatpush1.bf16.msra.mxu0 %v1097
        %1227 = vmatprep.subr.bf16.mxu0 0
        %1228 = vmatpush1.bf16.msra.mxu0 %v1098
        %1229 = vmatprep.subr.bf16.mxu0 0
        %1230 = vmatpush1.bf16.msra.mxu0 %v1099
        %1231 = vmatprep.subr.bf16.mxu0 0
        %1232 = vmatpush1.bf16.msra.mxu0 %v1100
        %1233 = vmatprep.subr.bf16.mxu0 0
        %1234 = vmatpush1.bf16.msra.mxu0 %v1101
        %1235 = vmatprep.subr.bf16.mxu0 0
        %1236 = vmatpush1.bf16.msra.mxu0 %v1102
        %1237 = vmatprep.subr.bf16.mxu0 0
        %1238 = vmatpush1.bf16.msra.mxu0 %v1103
        %1239 = vmatprep.subr.bf16.mxu0 0
        %1240 = vmatpush1.bf16.msra.mxu0 %v1104
        %1241 = vmatprep.subr.bf16.mxu0 0
        %1242 = vmatpush1.bf16.msra.mxu0 %v1105
        %1243 = vmatprep.subr.bf16.mxu0 0
        %1244 = vmatpush1.bf16.msra.mxu0 %v1106
        %1245 = vmatprep.subr.bf16.mxu0 0
        %1246 = vmatpush1.bf16.msra.mxu0 %v1107
        %1247 = vmatprep.subr.bf16.mxu0 0
        %1248 = vmatpush1.bf16.msra.mxu0 %v1108
        %1249 = vmatprep.subr.bf16.mxu0 0
        %1250 = vmatpush1.bf16.msra.mxu0 %v1109
        %1251 = vmatprep.subr.bf16.mxu0 0
        %1252 = vmatpush1.bf16.msra.mxu0 %v1110
        %1253 = vmatprep.subr.bf16.mxu0 0
        %1254 = vmatpush1.bf16.msra.mxu0 %v1111
        %1255 = vmatprep.subr.bf16.mxu0 0
        %1256 = vmatpush1.bf16.msra.mxu0 %v1112
        %1257 = vmatprep.mubr.bf16.mxu0 %v770
        %1258 = vmatmul.mubr.bf16.gmra.mrb[0].mxu0 %v769
        %v1259 = vpop.f32.mrb[0].mxu0
        %v1260 = vadd.f32 %v1219, %v1259
        %v1261 = vpop.f32.mrb[0].mxu0
        %v1262 = vpop.f32.mrb[0].mxu0
        %v1263 = vadd.f32 %v1222, %v1262
        %v1264 = vpop.f32.mrb[0].mxu0
        %1265 = vdwg.mxu0
        %1266 = vmatprep.subr.bf16.mxu0 0
        %1267 = vmatpush1.bf16.msra.mxu0 %v1113
        %1268 = vmatprep.subr.bf16.mxu0 0
        %1269 = vmatpush1.bf16.msra.mxu0 %v1114
        %1270 = vmatprep.subr.bf16.mxu0 0
        %1271 = vmatpush1.bf16.msra.mxu0 %v1115
        %1272 = vmatprep.subr.bf16.mxu0 0
        %1273 = vmatpush1.bf16.msra.mxu0 %v1116
        %1274 = vmatprep.subr.bf16.mxu0 0
        %1275 = vmatpush1.bf16.msra.mxu0 %v1117
        %1276 = vmatprep.subr.bf16.mxu0 0
        %1277 = vmatpush1.bf16.msra.mxu0 %v1118
        %1278 = vmatprep.subr.bf16.mxu0 0
        %1279 = vmatpush1.bf16.msra.mxu0 %v1119
        %1280 = vmatprep.subr.bf16.mxu0 0
        %1281 = vmatpush1.bf16.msra.mxu0 %v1120
        %1282 = vmatprep.subr.bf16.mxu0 0
        %1283 = vmatpush1.bf16.msra.mxu0 %v1121
        %1284 = vmatprep.subr.bf16.mxu0 0
        %1285 = vmatpush1.bf16.msra.mxu0 %v1122
        %1286 = vmatprep.subr.bf16.mxu0 0
        %1287 = vmatpush1.bf16.msra.mxu0 %v1123
        %1288 = vmatprep.subr.bf16.mxu0 0
        %1289 = vmatpush1.bf16.msra.mxu0 %v1124
        %1290 = vmatprep.subr.bf16.mxu0 0
        %1291 = vmatpush1.bf16.msra.mxu0 %v1125
        %1292 = vmatprep.subr.bf16.mxu0 0
        %1293 = vmatpush1.bf16.msra.mxu0 %v1126
        %1294 = vmatprep.subr.bf16.mxu0 0
        %1295 = vmatpush1.bf16.msra.mxu0 %v1127
        %1296 = vmatprep.subr.bf16.mxu0 0
        %1297 = vmatpush1.bf16.msra.mxu0 %v1128
        %1298 = vmatprep.mubr.bf16.mxu0 %v772
        %1299 = vmatmul.mubr.bf16.gmra.mrb[0].mxu0 %v771
        %v1300 = vpop.f32.mrb[0].mxu0
        %v1301 = vadd.f32 %v1260, %v1300
        %v1302 = vpop.f32.mrb[0].mxu0
        %v1303 = vpop.f32.mrb[0].mxu0
        %v1304 = vadd.f32 %v1263, %v1303
        %v1305 = vpop.f32.mrb[0].mxu0
        %1306 = vdwg.mxu0
        %1307 = vmatprep.subr.bf16.mxu0 0
        %1308 = vmatpush1.bf16.msra.mxu0 %v1129
        %1309 = vmatprep.subr.bf16.mxu0 0
        %1310 = vmatpush1.bf16.msra.mxu0 %v1130
        %1311 = vmatprep.subr.bf16.mxu0 0
        %1312 = vmatpush1.bf16.msra.mxu0 0
        %1313 = vmatprep.subr.bf16.mxu0 0
        %1314 = vmatpush1.bf16.msra.mxu0 0
        %1315 = vmatprep.subr.bf16.mxu0 0
        %1316 = vmatpush1.bf16.msra.mxu0 0
        %1317 = vmatprep.subr.bf16.mxu0 0
        %1318 = vmatpush1.bf16.msra.mxu0 0
        %1319 = vmatprep.subr.bf16.mxu0 0
        %1320 = vmatpush1.bf16.msra.mxu0 0
        %1321 = vmatprep.subr.bf16.mxu0 0
        %1322 = vmatpush1.bf16.msra.mxu0 0
        %1323 = vmatprep.subr.bf16.mxu0 0
        %1324 = vmatpush1.bf16.msra.mxu0 0
        %1325 = vmatprep.subr.bf16.mxu0 0
        %1326 = vmatpush1.bf16.msra.mxu0 0
        %1327 = vmatprep.subr.bf16.mxu0 0
        %1328 = vmatpush1.bf16.msra.mxu0 0
        %1329 = vmatprep.subr.bf16.mxu0 0
        %1330 = vmatpush1.bf16.msra.mxu0 0
        %1331 = vmatprep.subr.bf16.mxu0 0
        %1332 = vmatpush1.bf16.msra.mxu0 0
        %1333 = vmatprep.subr.bf16.mxu0 0
        %1334 = vmatpush1.bf16.msra.mxu0 0
        %1335 = vmatprep.subr.bf16.mxu0 0
        %1336 = vmatpush1.bf16.msra.mxu0 0
        %1337 = vmatprep.subr.bf16.mxu0 0
        %1338 = vmatpush1.bf16.msra.mxu0 0
        %1339 = vmatprep.mubr.bf16.mxu0 0
        %1340 = vmatmul.mubr.bf16.gmra.mrb[0].mxu0 %v1182
        %v1341 = vpop.f32.mrb[0].mxu0
        %v1342 = vadd.f32 %v1301, %v1341
        %v1343 = vpop.f32.mrb[0].mxu0
        %v1344 = vpop.f32.mrb[0].mxu0
        %v1345 = vadd.f32 %v1304, %v1344
        %v1346 = vpop.f32.mrb[0].mxu0
        %1347 = vdwg.mxu0
        %1350 = vrot.lane.b32.xlu0 %v1342, 96
        %v1351 = vpop.permute.xlu0 %1350
        %1352 = vrot.lane.b32.xlu0 %v1345, 96
        %v1353 = vpop.permute.xlu0 %1352
        %v1356 = vmax.f32 %v1342, %v1351
        %v1357 = vmax.f32 %v1345, %v1353
        %1358 = vrot.lane.b32.xlu0 %v1342, 64
        %v1359 = vpop.permute.xlu0 %1358
        %1360 = vrot.lane.b32.xlu0 %v1345, 64
        %v1361 = vpop.permute.xlu0 %1360
        %v1364 = vmax.f32 %v1356, %v1359
        %v1365 = vmax.f32 %v1357, %v1361
        %1366 = vrot.lane.b32.xlu0 %v1342, 32
        %v1367 = vpop.permute.xlu0 %1366
        %1368 = vrot.lane.b32.xlu0 %v1345, 32
        %v1369 = vpop.permute.xlu0 %1368
        %v1372 = vmax.f32 %v1364, %v1367
        %v1373 = vmax.f32 %v1365, %v1369
        %1374 = vst.msk [vmem:[%s520] sm:$0xff] %vm680, %v1372
        %1375 = vst.msk [vmem:[%s520 + $0x8] sm:$0xff] %vm680, %v1373
        %v1376 = vsel %vm680, %v1372, 0.0
        %v1377 = vsel %vm680, %v1373, 0.0
        %v1378 = vadd.f32 %v1376, %v1377
        %v1379 = vrot.slane %v1378, 4
        %v1380 = vadd.f32 %v1378, %v1379
        %v1381 = vrot.slane %v1380, 2
        %v1382 = vadd.f32 %v1380, %v1381
        %v1383 = vrot.slane %v1382, 1
        %v1384 = vadd.f32 %v1382, %v1383
        %v1385 = vmul.f32 %v1372, %v1372
        %v1386 = vmul.f32 %v1373, %v1373
        %v1387 = vsel %vm680, %v1385, 0.0
        %v1388 = vsel %vm680, %v1386, 0.0
        %v1389 = vadd.f32 %v1387, %v1388
        %v1390 = vrot.slane %v1389, 4
        %v1391 = vadd.f32 %v1389, %v1390
        %v1392 = vrot.slane %v1391, 2
        %v1393 = vadd.f32 %v1391, %v1392
        %v1394 = vrot.slane %v1393, 1
        %v1395 = vadd.f32 %v1393, %v1394
        %vm1396 = vcmask 1040384
        %v1397 = vsel %vm1396, %v1384, %v1395
        %vm1398 = vcmask 254976
        %1399 = vst.msk [vmem:[%s527] sm:$0x3] %vm1398, %v1397
        %s1400 = sand.u32 %s224, 1
        %s1401 = scalar_lea.sflag [#allocation4], %s1400
        %s1402 = sand.u32 %s224, 1
        %s1403 = smul.addr %s1402, 16
        %s1404 = scalar_lea.vmem [#allocation14], %s1403
        %s1405 = sand.u32 %s250, 1
        %s1406 = scalar_lea.sflag [#allocation16], %s1405
        %s1407 = sand.u32 %s250, 1
        %s1408 = smul.addr %s1407, 2
        %s1409 = scalar_lea.vmem [#allocation15], %s1408
        // Predicated region
        $region77: #{oracle_forward.36} parent=47 // pred_check
          %p1410 = pneg %p234
        $region78: #{oracle_forward.36} parent=47 // pred_check_branch
          %1412 = sbr.rel (%p1410) target = $region80
        $region79: #{oracle_forward.36} parent=47 // pred_region
          %s1413 = smul.u32 2, %s36
          %s1415 = ssub.s32 256, 256
          %1416 = vsyncadd %s1401, %s1415
          %s1417 = smul.addr %s1413, 128
          %s1418 = scalar_lea.hbm %s7, %s1417
          %s1419 = sshll.u32 %s1404, 4
          %s1420 = int_to_ptr.vmem [resolvable:$true] %s1419
          %1425 = dma.vmem_to_hbm [thread:$0]  %s1420, 256, %s1418, %s1401, 128, 128, 8
        $region80: #{oracle_forward.36} parent=47 // pred_fallthru
          _
        // Predicated region
        $region81: #{oracle_forward.36} parent=47 // pred_check
          %p1426 = pneg %p260
        $region82: #{oracle_forward.36} parent=47 // pred_check_branch
          %1428 = sbr.rel (%p1426) target = $region84
        $region83: #{oracle_forward.36} parent=47 // pred_region
          %s1430 = ssub.s32 32, 32
          %1431 = vsyncadd %s1406, %s1430
          %s1432 = smul.addr %s36, 32
          %s1433 = scalar_lea.hbm %s8, %s1432
          %s1435 = sshll.u32 %s1409, 4
          %s1436 = int_to_ptr.vmem [resolvable:$true] %s1435
          %1438 = dma.vmem_to_hbm [thread:$0]  %s1436, 32, %s1433, %s1406
        $region84: #{oracle_forward.36} parent=47 // pred_fallthru
          _
      $region48: #{oracle_forward.36} parent=5 // pred_fallthru
        _
      %p1439 = scmp.le.s32.totalorder 2, %s31
      // Predicated region
      $region85: #{oracle_forward.36} parent=5 // pred_check
        %p1440 = pneg %p1439
      $region86: #{oracle_forward.36} parent=5 // pred_check_branch
        %1442 = sbr.rel (%p1440) target = $region88
      $region87: #{oracle_forward.36} parent=5 // pred_region
        %s1443 = ssub.s32 %s31, 2
        // Predicated region
        $region89: #{oracle_forward.36} parent=87 // pred_check
          %p1444 = pneg %p240
        $region90: #{oracle_forward.36} parent=87 // pred_check_branch
          %1446 = sbr.rel (%p1444) target = $region92
        $region91: #{oracle_forward.36} parent=87 // pred_region
          %s1447 = sand.u32 %s225, 1
          %s1448 = scalar_lea.sflag [#allocation4], %s1447
          %s1449 = sand.u32 %s225, 1
          %s1450 = smul.addr %s1449, 16
          %s1451 = scalar_lea.vmem [#allocation14], %s1450
          %1452 = dma.done %s1448, 256
        $region92: #{oracle_forward.36} parent=87 // pred_fallthru
          _
        // Predicated region
        $region93: #{oracle_forward.36} parent=87 // pred_check
          %p1453 = pneg %p266
        $region94: #{oracle_forward.36} parent=87 // pred_check_branch
          %1455 = sbr.rel (%p1453) target = $region96
        $region95: #{oracle_forward.36} parent=87 // pred_region
          %s1456 = sand.u32 %s251, 1
          %s1457 = scalar_lea.sflag [#allocation16], %s1456
          %s1458 = sand.u32 %s251, 1
          %s1459 = smul.addr %s1458, 2
          %s1460 = scalar_lea.vmem [#allocation15], %s1459
          %1461 = dma.done %s1457, 32
        $region96: #{oracle_forward.36} parent=87 // pred_fallthru
          _
      $region88: #{oracle_forward.36} parent=5 // pred_fallthru
        _
    $region6: #{oracle_forward.36} parent=1 // loop_footer
      %s35 = sadd.s32 1, %s31
    $region7: #{oracle_forward.36} parent=1 // loop_footer_branch
      %30 = sbr.rel target = $region3
    $region8: #{oracle_forward.36} parent=1 // loop_exit
      _
    %1462 = vsyncpa [#allocation3], 1
    %s1463 = scalar_lea.sflag [#allocation3], 1
    %1464 = vsyncpa %s1463, 1
    %1465 = vsyncpa [#allocation6], 1
    %s1466 = scalar_lea.sflag [#allocation6], 1
    %1467 = vsyncpa %s1466, 1
    %1468 = vsyncpa [#allocation9], 1
    %s1469 = scalar_lea.sflag [#allocation9], 1
    %1470 = vsyncpa %s1469, 1
    %1471 = vsyncpa [#allocation12], 1
    %1472 = vsyncpa [#allocation4], 1
    %s1473 = scalar_lea.sflag [#allocation4], 1
    %1474 = vsyncpa %s1473, 1
    %1475 = vsyncpa [#allocation16], 1
    %s1476 = scalar_lea.sflag [#allocation16], 1
    %1477 = vsyncpa %s1476, 1

// kernel: oracle_forward.37
$region0: #{oracle_forward.37}
  #allocation0 [shape = 'u32[]', space=smem, size = 0x4, offset = 0x4, fixed_abs, tag = 'smem constant byte address 0x4 - core index']
  #allocation1 [shape = 'u32[144,128]{1,0:T(1,128)}', space=vmem, size = 0x12000, scoped, tag = 'internal scratch']
  #allocation2 [shape = 'f32[1,1]{1,0:T(1,128)S(1)}', space=vmem, size = 0x200, scoped, tag = 'scoped memory for oracle_forward.37']
  %s0 = inlined_call_operand.hbm [shape: f32[256,32], index: 0, kind: input, shape index: {}]
  %s1 = inlined_call_operand.hbm [shape: f32[256,32], index: 1, kind: input, shape index: {}]
  %s2 = inlined_call_operand.hbm [shape: f32[2,32], index: 2, kind: input, shape index: {}]
  %s3 = inlined_call_operand.hbm [shape: f32[1,32], index: 3, kind: input, shape index: {}]
  %s4 = inlined_call_operand.hbm [shape: f32[1,32], index: 4, kind: input, shape index: {}]
  %s5 = inlined_call_operand.hbm [shape: f32[1,32], index: 5, kind: input, shape index: {}]
  %s6 = inlined_call_operand.hbm [shape: f32[1,32], index: 6, kind: input, shape index: {}]
  %s7 = inlined_call_operand.<no memory space> [shape: f32[1,1], index: 7, kind: input, shape index: {}]
  %s8 = inlined_call_operand.hbm [shape: f32[256,32], index: 8, kind: output, shape index: {}]
  %s9 = sld [smem:[#allocation0]]
  $region70: #{oracle_forward.37} parent=0
    _
  %s11 = ssub.s32 1, %s9
  %s12 = scalar_select 0, %s11, %s9
  %v13 = vstv %s7
  %14 = vst [vmem:[#allocation2] sm:$0x1] %v13
  $region1: #{oracle_forward.37} parent=0
    #allocation3 [shape = 'u8[131072]{0}', space=vmem, size = 0x20000, scoped, tag = 'input window, operand 0, single buffered']
    #allocation4 [shape = 's32[1]{0}', space=sflag, size = 0x4, scoped, tag = 'scoped memory for oracle_forward.37']
    #allocation5 [shape = 's32[1]{0}', space=sflag, size = 0x4, scoped, tag = 'scoped memory for oracle_forward.37']
    #allocation6 [shape = 'u8[131072]{0}', space=vmem, size = 0x20000, scoped, tag = 'input window, operand 1, single buffered']
    #allocation7 [shape = 's32[1]{0}', space=sflag, size = 0x4, scoped, tag = 'scoped memory for oracle_forward.37']
    #allocation8 [shape = 'u8[1024]{0}', space=vmem, size = 0x400, scoped, tag = 'input window, operand 2, single buffered']
    #allocation9 [shape = 'u8[512]{0}', space=vmem, size = 0x400, scoped, tag = 'input window, operand 3, single buffered']
    #allocation10 [shape = 's32[1]{0}', space=sflag, size = 0x4, scoped, tag = 'scoped memory for oracle_forward.37']
    #allocation11 [shape = 'u8[512]{0}', space=vmem, size = 0x400, scoped, tag = 'input window, operand 4, single buffered']
    #allocation12 [shape = 'u8[512]{0}', space=vmem, size = 0x400, scoped, tag = 'input window, operand 5, single buffered']
    #allocation13 [shape = 's32[1]{0}', space=sflag, size = 0x4, scoped, tag = 'scoped memory for oracle_forward.37']
    #allocation14 [shape = 'u8[512]{0}', space=vmem, size = 0x400, scoped, tag = 'input window, operand 6, single buffered']
    #allocation15 [shape = 'u8[131072]{0}', space=vmem, size = 0x20000, scoped, tag = 'output window, operand 0, single buffered']
    %15 = vsyncpa [#allocation4], 0
    %16 = vsyncpa [#allocation7], 0
    %17 = vsyncpa [#allocation10], 0
    %18 = vsyncpa [#allocation13], 0
    %19 = vsyncpa [#allocation5], 0
    // Predicated region
    $region2: #{oracle_forward.37} parent=1 // pred_check
      _
    $region3: #{oracle_forward.37} parent=1 // pred_check_branch
      %21 = sbr.rel (0) target = $region5
    $region4: #{oracle_forward.37} parent=1 // pred_region
      %s23 = ssub.s32 4096, 4096
      %24 = vsyncadd [#allocation4], %s23
      %s25 = sshll.u32 [#allocation3], 4
      %s26 = int_to_ptr.vmem [resolvable:$true] %s25
      %31 = dma.hbm_to_vmem [thread:$0]  %s0, 4096, %s26, [#allocation4], 128, 128, 8
    $region5: #{oracle_forward.37} parent=1 // pred_fallthru
      _
    // Predicated region
    $region6: #{oracle_forward.37} parent=1 // pred_check
      _
    $region7: #{oracle_forward.37} parent=1 // pred_check_branch
      %33 = sbr.rel (0) target = $region9
    $region8: #{oracle_forward.37} parent=1 // pred_region
      %s35 = ssub.s32 4096, 4096
      %36 = vsyncadd [#allocation7], %s35
      %s37 = sshll.u32 [#allocation6], 4
      %s38 = int_to_ptr.vmem [resolvable:$true] %s37
      %43 = dma.hbm_to_vmem [thread:$0]  %s1, 4096, %s38, [#allocation7], 128, 128, 8
    $region9: #{oracle_forward.37} parent=1 // pred_fallthru
      _
    // Predicated region
    $region10: #{oracle_forward.37} parent=1 // pred_check
      _
    $region11: #{oracle_forward.37} parent=1 // pred_check_branch
      %45 = sbr.rel (0) target = $region13
    $region12: #{oracle_forward.37} parent=1 // pred_region
      %s47 = ssub.s32 32, 32
      %48 = vsyncadd [#allocation7], %s47
      %s50 = sshll.u32 [#allocation8], 4
      %s51 = int_to_ptr.vmem [resolvable:$true] %s50
      %53 = dma.hbm_to_vmem [thread:$0]  %s2, 32, %s51, [#allocation7]
    $region13: #{oracle_forward.37} parent=1 // pred_fallthru
      _
    // Predicated region
    $region14: #{oracle_forward.37} parent=1 // pred_check
      _
    $region15: #{oracle_forward.37} parent=1 // pred_check_branch
      %55 = sbr.rel (0) target = $region17
    $region16: #{oracle_forward.37} parent=1 // pred_region
      %s57 = ssub.s32 16, 16
      %58 = vsyncadd [#allocation10], %s57
      %s60 = sshll.u32 [#allocation9], 4
      %s61 = int_to_ptr.vmem [resolvable:$true] %s60
      %63 = dma.hbm_to_vmem [thread:$0]  %s3, 16, %s61, [#allocation10]
    $region17: #{oracle_forward.37} parent=1 // pred_fallthru
      _
    // Predicated region
    $region18: #{oracle_forward.37} parent=1 // pred_check
      _
    $region19: #{oracle_forward.37} parent=1 // pred_check_branch
      %65 = sbr.rel (0) target = $region21
    $region20: #{oracle_forward.37} parent=1 // pred_region
      %s67 = ssub.s32 16, 16
      %68 = vsyncadd [#allocation10], %s67
      %s70 = sshll.u32 [#allocation11], 4
      %s71 = int_to_ptr.vmem [resolvable:$true] %s70
      %73 = dma.hbm_to_vmem [thread:$0]  %s4, 16, %s71, [#allocation10]
    $region21: #{oracle_forward.37} parent=1 // pred_fallthru
      _
    // Predicated region
    $region22: #{oracle_forward.37} parent=1 // pred_check
      _
    $region23: #{oracle_forward.37} parent=1 // pred_check_branch
      %75 = sbr.rel (0) target = $region25
    $region24: #{oracle_forward.37} parent=1 // pred_region
      %s77 = ssub.s32 16, 16
      %78 = vsyncadd [#allocation13], %s77
      %s80 = sshll.u32 [#allocation12], 4
      %s81 = int_to_ptr.vmem [resolvable:$true] %s80
      %83 = dma.hbm_to_vmem [thread:$0]  %s5, 16, %s81, [#allocation13]
    $region25: #{oracle_forward.37} parent=1 // pred_fallthru
      _
    // Predicated region
    $region26: #{oracle_forward.37} parent=1 // pred_check
      _
    $region27: #{oracle_forward.37} parent=1 // pred_check_branch
      %85 = sbr.rel (0) target = $region29
    $region28: #{oracle_forward.37} parent=1 // pred_region
      %s87 = ssub.s32 16, 16
      %88 = vsyncadd [#allocation13], %s87
      %s90 = sshll.u32 [#allocation14], 4
      %s91 = int_to_ptr.vmem [resolvable:$true] %s90
      %93 = dma.hbm_to_vmem [thread:$0]  %s6, 16, %s91, [#allocation13]
    $region29: #{oracle_forward.37} parent=1 // pred_fallthru
      _
    // Predicated region
    $region30: #{oracle_forward.37} parent=1 // pred_check
      _
    $region31: #{oracle_forward.37} parent=1 // pred_check_branch
      %95 = sbr.rel (0) target = $region33
    $region32: #{oracle_forward.37} parent=1 // pred_region
      _
    $region33: #{oracle_forward.37} parent=1 // pred_fallthru
      _
    // Predicated region
    $region34: #{oracle_forward.37} parent=1 // pred_check
      _
    $region35: #{oracle_forward.37} parent=1 // pred_check_branch
      %97 = sbr.rel (0) target = $region37
    $region36: #{oracle_forward.37} parent=1 // pred_region
      %98 = dma.done [#allocation4], 4096
    $region37: #{oracle_forward.37} parent=1 // pred_fallthru
      _
    // Predicated region
    $region38: #{oracle_forward.37} parent=1 // pred_check
      _
    $region39: #{oracle_forward.37} parent=1 // pred_check_branch
      %100 = sbr.rel (0) target = $region41
    $region40: #{oracle_forward.37} parent=1 // pred_region
      %101 = dma.done [#allocation7], 4096
    $region41: #{oracle_forward.37} parent=1 // pred_fallthru
      _
    // Predicated region
    $region42: #{oracle_forward.37} parent=1 // pred_check
      _
    $region43: #{oracle_forward.37} parent=1 // pred_check_branch
      %103 = sbr.rel (0) target = $region45
    $region44: #{oracle_forward.37} parent=1 // pred_region
      %104 = dma.done [#allocation7], 32
    $region45: #{oracle_forward.37} parent=1 // pred_fallthru
      _
    // Predicated region
    $region46: #{oracle_forward.37} parent=1 // pred_check
      _
    $region47: #{oracle_forward.37} parent=1 // pred_check_branch
      %106 = sbr.rel (0) target = $region49
    $region48: #{oracle_forward.37} parent=1 // pred_region
      %107 = dma.done [#allocation10], 16
    $region49: #{oracle_forward.37} parent=1 // pred_fallthru
      _
    // Predicated region
    $region50: #{oracle_forward.37} parent=1 // pred_check
      _
    $region51: #{oracle_forward.37} parent=1 // pred_check_branch
      %109 = sbr.rel (0) target = $region53
    $region52: #{oracle_forward.37} parent=1 // pred_region
      %110 = dma.done [#allocation10], 16
    $region53: #{oracle_forward.37} parent=1 // pred_fallthru
      _
    // Predicated region
    $region54: #{oracle_forward.37} parent=1 // pred_check
      _
    $region55: #{oracle_forward.37} parent=1 // pred_check_branch
      %112 = sbr.rel (0) target = $region57
    $region56: #{oracle_forward.37} parent=1 // pred_region
      %113 = dma.done [#allocation13], 16
    $region57: #{oracle_forward.37} parent=1 // pred_fallthru
      _
    // Predicated region
    $region58: #{oracle_forward.37} parent=1 // pred_check
      _
    $region59: #{oracle_forward.37} parent=1 // pred_check_branch
      %115 = sbr.rel (0) target = $region61
    $region60: #{oracle_forward.37} parent=1 // pred_region
      %116 = dma.done [#allocation13], 16
    $region61: #{oracle_forward.37} parent=1 // pred_fallthru
      _
    %v117 = vld [vmem:[#allocation3] sm:$0xff]
    %v118 = vld [vmem:[#allocation3 + $0x8] sm:$0xff]
    %v119 = vld [vmem:[#allocation3 + $0x10] sm:$0xff]
    %v120 = vld [vmem:[#allocation3 + $0x18] sm:$0xff]
    %v121 = vld [vmem:[#allocation3 + $0x20] sm:$0xff]
    %v122 = vld [vmem:[#allocation3 + $0x28] sm:$0xff]
    %v123 = vld [vmem:[#allocation3 + $0x30] sm:$0xff]
    %v124 = vld [vmem:[#allocation3 + $0x38] sm:$0xff]
    %v125 = vld [vmem:[#allocation3 + $0x40] sm:$0xff]
    %v126 = vld [vmem:[#allocation3 + $0x48] sm:$0xff]
    %v127 = vld [vmem:[#allocation3 + $0x50] sm:$0xff]
    %v128 = vld [vmem:[#allocation3 + $0x58] sm:$0xff]
    %v129 = vld [vmem:[#allocation3 + $0x60] sm:$0xff]
    %v130 = vld [vmem:[#allocation3 + $0x68] sm:$0xff]
    %v131 = vld [vmem:[#allocation3 + $0x70] sm:$0xff]
    %v132 = vld [vmem:[#allocation3 + $0x78] sm:$0xff]
    %v133 = vld [vmem:[#allocation3 + $0x80] sm:$0xff]
    %v134 = vld [vmem:[#allocation3 + $0x88] sm:$0xff]
    %v135 = vld [vmem:[#allocation3 + $0x90] sm:$0xff]
    %v136 = vld [vmem:[#allocation3 + $0x98] sm:$0xff]
    %v137 = vld [vmem:[#allocation3 + $0xa0] sm:$0xff]
    %v138 = vld [vmem:[#allocation3 + $0xa8] sm:$0xff]
    %v139 = vld [vmem:[#allocation3 + $0xb0] sm:$0xff]
    %v140 = vld [vmem:[#allocation3 + $0xb8] sm:$0xff]
    %v141 = vld [vmem:[#allocation3 + $0xc0] sm:$0xff]
    %v142 = vld [vmem:[#allocation3 + $0xc8] sm:$0xff]
    %v143 = vld [vmem:[#allocation3 + $0xd0] sm:$0xff]
    %v144 = vld [vmem:[#allocation3 + $0xd8] sm:$0xff]
    %v145 = vld [vmem:[#allocation3 + $0xe0] sm:$0xff]
    %v146 = vld [vmem:[#allocation3 + $0xe8] sm:$0xff]
    %v147 = vld [vmem:[#allocation3 + $0xf0] sm:$0xff]
    %v148 = vld [vmem:[#allocation3 + $0xf8] sm:$0xff]
    %v149 = vld [vmem:[#allocation8] sm:$0x1]
    %v150 = vlaneseq
    %v151 = vshrl.u32 %v150, 7
    %v152 = vsub.s32 0, %v151
    %v153 = vrot.slane %v149, %v152
    %v154 = vsub.f32 %v117, %v153
    %v155 = vsub.f32 %v118, %v153
    %v156 = vsub.f32 %v119, %v153
    %v157 = vsub.f32 %v120, %v153
    %v158 = vsub.f32 %v121, %v153
    %v159 = vsub.f32 %v122, %v153
    %v160 = vsub.f32 %v123, %v153
    %v161 = vsub.f32 %v124, %v153
    %v162 = vsub.f32 %v125, %v153
    %v163 = vsub.f32 %v126, %v153
    %v164 = vsub.f32 %v127, %v153
    %v165 = vsub.f32 %v128, %v153
    %v166 = vsub.f32 %v129, %v153
    %v167 = vsub.f32 %v130, %v153
    %v168 = vsub.f32 %v131, %v153
    %v169 = vsub.f32 %v132, %v153
    %v170 = vsub.f32 %v133, %v153
    %v171 = vsub.f32 %v134, %v153
    %v172 = vsub.f32 %v135, %v153
    %v173 = vsub.f32 %v136, %v153
    %v174 = vsub.f32 %v137, %v153
    %v175 = vsub.f32 %v138, %v153
    %v176 = vsub.f32 %v139, %v153
    %v177 = vsub.f32 %v140, %v153
    %v178 = vsub.f32 %v141, %v153
    %v179 = vsub.f32 %v142, %v153
    %v180 = vsub.f32 %v143, %v153
    %v181 = vsub.f32 %v144, %v153
    %v182 = vsub.f32 %v145, %v153
    %v183 = vsub.f32 %v146, %v153
    %v184 = vsub.f32 %v147, %v153
    %v185 = vsub.f32 %v148, %v153
    %v186 = vld [vmem:[#allocation8 + $0x1] sm:$0x1]
    %v187 = vlaneseq
    %v188 = vshrl.u32 %v187, 7
    %v189 = vsub.s32 0, %v188
    %v190 = vrot.slane %v186, %v189
    %v191 = vmul.f32 %v154, %v190
    %v192 = vmul.f32 %v155, %v190
    %v193 = vmul.f32 %v156, %v190
    %v194 = vmul.f32 %v157, %v190
    %v195 = vmul.f32 %v158, %v190
    %v196 = vmul.f32 %v159, %v190
    %v197 = vmul.f32 %v160, %v190
    %v198 = vmul.f32 %v161, %v190
    %v199 = vmul.f32 %v162, %v190
    %v200 = vmul.f32 %v163, %v190
    %v201 = vmul.f32 %v164, %v190
    %v202 = vmul.f32 %v165, %v190
    %v203 = vmul.f32 %v166, %v190
    %v204 = vmul.f32 %v167, %v190
    %v205 = vmul.f32 %v168, %v190
    %v206 = vmul.f32 %v169, %v190
    %v207 = vmul.f32 %v170, %v190
    %v208 = vmul.f32 %v171, %v190
    %v209 = vmul.f32 %v172, %v190
    %v210 = vmul.f32 %v173, %v190
    %v211 = vmul.f32 %v174, %v190
    %v212 = vmul.f32 %v175, %v190
    %v213 = vmul.f32 %v176, %v190
    %v214 = vmul.f32 %v177, %v190
    %v215 = vmul.f32 %v178, %v190
    %v216 = vmul.f32 %v179, %v190
    %v217 = vmul.f32 %v180, %v190
    %v218 = vmul.f32 %v181, %v190
    %v219 = vmul.f32 %v182, %v190
    %v220 = vmul.f32 %v183, %v190
    %v221 = vmul.f32 %v184, %v190
    %v222 = vmul.f32 %v185, %v190
    %v223 = vld [vmem:[#allocation9] sm:$0x1]
    %v225 = vlaneseq
    %v226 = vshrl.u32 %v225, 7
    %v227 = vsub.s32 0, %v226
    %v228 = vrot.slane %v223, %v227
    %v230 = vmul.f32 %v191, %v228
    %v231 = vmul.f32 %v192, %v228
    %v232 = vmul.f32 %v193, %v228
    %v233 = vmul.f32 %v194, %v228
    %v234 = vmul.f32 %v195, %v228
    %v235 = vmul.f32 %v196, %v228
    %v236 = vmul.f32 %v197, %v228
    %v237 = vmul.f32 %v198, %v228
    %v238 = vmul.f32 %v199, %v228
    %v239 = vmul.f32 %v200, %v228
    %v240 = vmul.f32 %v201, %v228
    %v241 = vmul.f32 %v202, %v228
    %v242 = vmul.f32 %v203, %v228
    %v243 = vmul.f32 %v204, %v228
    %v244 = vmul.f32 %v205, %v228
    %v245 = vmul.f32 %v206, %v228
    %v246 = vmul.f32 %v207, %v228
    %v247 = vmul.f32 %v208, %v228
    %v248 = vmul.f32 %v209, %v228
    %v249 = vmul.f32 %v210, %v228
    %v250 = vmul.f32 %v211, %v228
    %v251 = vmul.f32 %v212, %v228
    %v252 = vmul.f32 %v213, %v228
    %v253 = vmul.f32 %v214, %v228
    %v254 = vmul.f32 %v215, %v228
    %v255 = vmul.f32 %v216, %v228
    %v256 = vmul.f32 %v217, %v228
    %v257 = vmul.f32 %v218, %v228
    %v258 = vmul.f32 %v219, %v228
    %v259 = vmul.f32 %v220, %v228
    %v260 = vmul.f32 %v221, %v228
    %v261 = vmul.f32 %v222, %v228
    %v262 = vld [vmem:[#allocation11] sm:$0x1]
    %v264 = vlaneseq
    %v265 = vshrl.u32 %v264, 7
    %v266 = vsub.s32 0, %v265
    %v267 = vrot.slane %v262, %v266
    %v269 = vadd.f32 %v230, %v267
    %v270 = vadd.f32 %v231, %v267
    %v271 = vadd.f32 %v232, %v267
    %v272 = vadd.f32 %v233, %v267
    %v273 = vadd.f32 %v234, %v267
    %v274 = vadd.f32 %v235, %v267
    %v275 = vadd.f32 %v236, %v267
    %v276 = vadd.f32 %v237, %v267
    %v277 = vadd.f32 %v238, %v267
    %v278 = vadd.f32 %v239, %v267
    %v279 = vadd.f32 %v240, %v267
    %v280 = vadd.f32 %v241, %v267
    %v281 = vadd.f32 %v242, %v267
    %v282 = vadd.f32 %v243, %v267
    %v283 = vadd.f32 %v244, %v267
    %v284 = vadd.f32 %v245, %v267
    %v285 = vadd.f32 %v246, %v267
    %v286 = vadd.f32 %v247, %v267
    %v287 = vadd.f32 %v248, %v267
    %v288 = vadd.f32 %v249, %v267
    %v289 = vadd.f32 %v250, %v267
    %v290 = vadd.f32 %v251, %v267
    %v291 = vadd.f32 %v252, %v267
    %v292 = vadd.f32 %v253, %v267
    %v293 = vadd.f32 %v254, %v267
    %v294 = vadd.f32 %v255, %v267
    %v295 = vadd.f32 %v256, %v267
    %v296 = vadd.f32 %v257, %v267
    %v297 = vadd.f32 %v258, %v267
    %v298 = vadd.f32 %v259, %v267
    %v299 = vadd.f32 %v260, %v267
    %v300 = vadd.f32 %v261, %v267
    %v301 = vld [vmem:[#allocation14] sm:$0x1]
    %v303 = vlaneseq
    %v304 = vshrl.u32 %v303, 7
    %v305 = vsub.s32 0, %v304
    %v306 = vrot.slane %v301, %v305
    %v308 = vmul.f32 %v269, %v306
    %v309 = vmul.f32 %v270, %v306
    %v310 = vmul.f32 %v271, %v306
    %v311 = vmul.f32 %v272, %v306
    %v312 = vmul.f32 %v273, %v306
    %v313 = vmul.f32 %v274, %v306
    %v314 = vmul.f32 %v275, %v306
    %v315 = vmul.f32 %v276, %v306
    %v316 = vmul.f32 %v277, %v306
    %v317 = vmul.f32 %v278, %v306
    %v318 = vmul.f32 %v279, %v306
    %v319 = vmul.f32 %v280, %v306
    %v320 = vmul.f32 %v281, %v306
    %v321 = vmul.f32 %v282, %v306
    %v322 = vmul.f32 %v283, %v306
    %v323 = vmul.f32 %v284, %v306
    %v324 = vmul.f32 %v285, %v306
    %v325 = vmul.f32 %v286, %v306
    %v326 = vmul.f32 %v287, %v306
    %v327 = vmul.f32 %v288, %v306
    %v328 = vmul.f32 %v289, %v306
    %v329 = vmul.f32 %v290, %v306
    %v330 = vmul.f32 %v291, %v306
    %v331 = vmul.f32 %v292, %v306
    %v332 = vmul.f32 %v293, %v306
    %v333 = vmul.f32 %v294, %v306
    %v334 = vmul.f32 %v295, %v306
    %v335 = vmul.f32 %v296, %v306
    %v336 = vmul.f32 %v297, %v306
    %v337 = vmul.f32 %v298, %v306
    %v338 = vmul.f32 %v299, %v306
    %v339 = vmul.f32 %v300, %v306
    %vm340 = vcmask 261120
    %v341 = vsel %vm340, %v308, 0.0
    %342 = vadd.xlane.f32.xlu0 %v341
    %v343 = vpop.xlane.xlu0 %342
    %v344 = vsel %vm340, %v309, 0.0
    %345 = vadd.xlane.f32.xlu0 %v344
    %v346 = vpop.xlane.xlu0 %345
    %v347 = vsel %vm340, %v310, 0.0
    %348 = vadd.xlane.f32.xlu0 %v347
    %v349 = vpop.xlane.xlu0 %348
    %v350 = vsel %vm340, %v311, 0.0
    %351 = vadd.xlane.f32.xlu0 %v350
    %v352 = vpop.xlane.xlu0 %351
    %v353 = vsel %vm340, %v312, 0.0
    %354 = vadd.xlane.f32.xlu0 %v353
    %v355 = vpop.xlane.xlu0 %354
    %v356 = vsel %vm340, %v313, 0.0
    %357 = vadd.xlane.f32.xlu0 %v356
    %v358 = vpop.xlane.xlu0 %357
    %v359 = vsel %vm340, %v314, 0.0
    %360 = vadd.xlane.f32.xlu0 %v359
    %v361 = vpop.xlane.xlu0 %360
    %v362 = vsel %vm340, %v315, 0.0
    %363 = vadd.xlane.f32.xlu0 %v362
    %v364 = vpop.xlane.xlu0 %363
    %v365 = vsel %vm340, %v316, 0.0
    %366 = vadd.xlane.f32.xlu0 %v365
    %v367 = vpop.xlane.xlu0 %366
    %v368 = vsel %vm340, %v317, 0.0
    %369 = vadd.xlane.f32.xlu0 %v368
    %v370 = vpop.xlane.xlu0 %369
    %v371 = vsel %vm340, %v318, 0.0
    %372 = vadd.xlane.f32.xlu0 %v371
    %v373 = vpop.xlane.xlu0 %372
    %v374 = vsel %vm340, %v319, 0.0
    %375 = vadd.xlane.f32.xlu0 %v374
    %v376 = vpop.xlane.xlu0 %375
    %v377 = vsel %vm340, %v320, 0.0
    %378 = vadd.xlane.f32.xlu0 %v377
    %v379 = vpop.xlane.xlu0 %378
    %v380 = vsel %vm340, %v321, 0.0
    %381 = vadd.xlane.f32.xlu0 %v380
    %v382 = vpop.xlane.xlu0 %381
    %v383 = vsel %vm340, %v322, 0.0
    %384 = vadd.xlane.f32.xlu0 %v383
    %v385 = vpop.xlane.xlu0 %384
    %v386 = vsel %vm340, %v323, 0.0
    %387 = vadd.xlane.f32.xlu0 %v386
    %v388 = vpop.xlane.xlu0 %387
    %v389 = vsel %vm340, %v324, 0.0
    %390 = vadd.xlane.f32.xlu0 %v389
    %v391 = vpop.xlane.xlu0 %390
    %v392 = vsel %vm340, %v325, 0.0
    %393 = vadd.xlane.f32.xlu0 %v392
    %v394 = vpop.xlane.xlu0 %393
    %v395 = vsel %vm340, %v326, 0.0
    %396 = vadd.xlane.f32.xlu0 %v395
    %v397 = vpop.xlane.xlu0 %396
    %v398 = vsel %vm340, %v327, 0.0
    %399 = vadd.xlane.f32.xlu0 %v398
    %v400 = vpop.xlane.xlu0 %399
    %v401 = vsel %vm340, %v328, 0.0
    %402 = vadd.xlane.f32.xlu0 %v401
    %v403 = vpop.xlane.xlu0 %402
    %v404 = vsel %vm340, %v329, 0.0
    %405 = vadd.xlane.f32.xlu0 %v404
    %v406 = vpop.xlane.xlu0 %405
    %v407 = vsel %vm340, %v330, 0.0
    %408 = vadd.xlane.f32.xlu0 %v407
    %v409 = vpop.xlane.xlu0 %408
    %v410 = vsel %vm340, %v331, 0.0
    %411 = vadd.xlane.f32.xlu0 %v410
    %v412 = vpop.xlane.xlu0 %411
    %v413 = vsel %vm340, %v332, 0.0
    %414 = vadd.xlane.f32.xlu0 %v413
    %v415 = vpop.xlane.xlu0 %414
    %v416 = vsel %vm340, %v333, 0.0
    %417 = vadd.xlane.f32.xlu0 %v416
    %v418 = vpop.xlane.xlu0 %417
    %v419 = vsel %vm340, %v334, 0.0
    %420 = vadd.xlane.f32.xlu0 %v419
    %v421 = vpop.xlane.xlu0 %420
    %v422 = vsel %vm340, %v335, 0.0
    %423 = vadd.xlane.f32.xlu0 %v422
    %v424 = vpop.xlane.xlu0 %423
    %v425 = vsel %vm340, %v336, 0.0
    %426 = vadd.xlane.f32.xlu0 %v425
    %v427 = vpop.xlane.xlu0 %426
    %v428 = vsel %vm340, %v337, 0.0
    %429 = vadd.xlane.f32.xlu0 %v428
    %v430 = vpop.xlane.xlu0 %429
    %v431 = vsel %vm340, %v338, 0.0
    %432 = vadd.xlane.f32.xlu0 %v431
    %v433 = vpop.xlane.xlu0 %432
    %v434 = vsel %vm340, %v339, 0.0
    %435 = vadd.xlane.f32.xlu0 %v434
    %v436 = vpop.xlane.xlu0 %435
    %v437 = vld [vmem:[#allocation2] sm:$0x1]
    %v439 = vlaneseq
    %v440 = vshrl.u32 %v439, 7
    %v441 = vsub.s32 0, %v440
    %v442 = vrot.slane %v437, %v441
    %v444 = vadd.f32 %v343, %v442
    %v445 = vadd.f32 %v346, %v442
    %v446 = vadd.f32 %v349, %v442
    %v447 = vadd.f32 %v352, %v442
    %v448 = vadd.f32 %v355, %v442
    %v449 = vadd.f32 %v358, %v442
    %v450 = vadd.f32 %v361, %v442
    %v451 = vadd.f32 %v364, %v442
    %v452 = vadd.f32 %v367, %v442
    %v453 = vadd.f32 %v370, %v442
    %v454 = vadd.f32 %v373, %v442
    %v455 = vadd.f32 %v376, %v442
    %v456 = vadd.f32 %v379, %v442
    %v457 = vadd.f32 %v382, %v442
    %v458 = vadd.f32 %v385, %v442
    %v459 = vadd.f32 %v388, %v442
    %v460 = vadd.f32 %v391, %v442
    %v461 = vadd.f32 %v394, %v442
    %v462 = vadd.f32 %v397, %v442
    %v463 = vadd.f32 %v400, %v442
    %v464 = vadd.f32 %v403, %v442
    %v465 = vadd.f32 %v406, %v442
    %v466 = vadd.f32 %v409, %v442
    %v467 = vadd.f32 %v412, %v442
    %v468 = vadd.f32 %v415, %v442
    %v469 = vadd.f32 %v418, %v442
    %v470 = vadd.f32 %v421, %v442
    %v471 = vadd.f32 %v424, %v442
    %v472 = vadd.f32 %v427, %v442
    %v473 = vadd.f32 %v430, %v442
    %v474 = vadd.f32 %v433, %v442
    %v475 = vadd.f32 %v436, %v442
    %v476 = vld [vmem:[#allocation12] sm:$0x1]
    %v477 = vxor.u32 %v444, 2147483648
    %v478 = vxor.u32 %v445, 2147483648
    %v479 = vxor.u32 %v446, 2147483648
    %v480 = vxor.u32 %v447, 2147483648
    %v481 = vxor.u32 %v448, 2147483648
    %v482 = vxor.u32 %v449, 2147483648
    %v483 = vxor.u32 %v450, 2147483648
    %v484 = vxor.u32 %v451, 2147483648
    %v485 = vxor.u32 %v452, 2147483648
    %v486 = vxor.u32 %v453, 2147483648
    %v487 = vxor.u32 %v454, 2147483648
    %v488 = vxor.u32 %v455, 2147483648
    %v489 = vxor.u32 %v456, 2147483648
    %v490 = vxor.u32 %v457, 2147483648
    %v491 = vxor.u32 %v458, 2147483648
    %v492 = vxor.u32 %v459, 2147483648
    %v493 = vxor.u32 %v460, 2147483648
    %v494 = vxor.u32 %v461, 2147483648
    %v495 = vxor.u32 %v462, 2147483648
    %v496 = vxor.u32 %v463, 2147483648
    %v497 = vxor.u32 %v464, 2147483648
    %v498 = vxor.u32 %v465, 2147483648
    %v499 = vxor.u32 %v466, 2147483648
    %v500 = vxor.u32 %v467, 2147483648
    %v501 = vxor.u32 %v468, 2147483648
    %v502 = vxor.u32 %v469, 2147483648
    %v503 = vxor.u32 %v470, 2147483648
    %v504 = vxor.u32 %v471, 2147483648
    %v505 = vxor.u32 %v472, 2147483648
    %v506 = vxor.u32 %v473, 2147483648
    %v507 = vxor.u32 %v474, 2147483648
    %v508 = vxor.u32 %v475, 2147483648
    %v509 = vmul.f32 %v477, 1.442695
    %v510 = vpow.pop %v509
    %v511 = vmul.f32 %v478, 1.442695
    %v512 = vpow.pop %v511
    %v513 = vmul.f32 %v479, 1.442695
    %v514 = vpow.pop %v513
    %v515 = vmul.f32 %v480, 1.442695
    %v516 = vpow.pop %v515
    %v517 = vmul.f32 %v481, 1.442695
    %v518 = vpow.pop %v517
    %v519 = vmul.f32 %v482, 1.442695
    %v520 = vpow.pop %v519
    %v521 = vmul.f32 %v483, 1.442695
    %v522 = vpow.pop %v521
    %v523 = vmul.f32 %v484, 1.442695
    %v524 = vpow.pop %v523
    %v525 = vmul.f32 %v485, 1.442695
    %v526 = vpow.pop %v525
    %v527 = vmul.f32 %v486, 1.442695
    %v528 = vpow.pop %v527
    %v529 = vmul.f32 %v487, 1.442695
    %v530 = vpow.pop %v529
    %v531 = vmul.f32 %v488, 1.442695
    %v532 = vpow.pop %v531
    %v533 = vmul.f32 %v489, 1.442695
    %v534 = vpow.pop %v533
    %v535 = vmul.f32 %v490, 1.442695
    %v536 = vpow.pop %v535
    %v537 = vmul.f32 %v491, 1.442695
    %v538 = vpow.pop %v537
    %v539 = vmul.f32 %v492, 1.442695
    %v540 = vpow.pop %v539
    %v541 = vmul.f32 %v493, 1.442695
    %v542 = vpow.pop %v541
    %v543 = vmul.f32 %v494, 1.442695
    %v544 = vpow.pop %v543
    %v545 = vmul.f32 %v495, 1.442695
    %v546 = vpow.pop %v545
    %v547 = vmul.f32 %v496, 1.442695
    %v548 = vpow.pop %v547
    %v549 = vmul.f32 %v497, 1.442695
    %v550 = vpow.pop %v549
    %v551 = vmul.f32 %v498, 1.442695
    %v552 = vpow.pop %v551
    %v553 = vmul.f32 %v499, 1.442695
    %v554 = vpow.pop %v553
    %v555 = vmul.f32 %v500, 1.442695
    %v556 = vpow.pop %v555
    %v557 = vmul.f32 %v501, 1.442695
    %v558 = vpow.pop %v557
    %v559 = vmul.f32 %v502, 1.442695
    %v560 = vpow.pop %v559
    %v561 = vmul.f32 %v503, 1.442695
    %v562 = vpow.pop %v561
    %v563 = vmul.f32 %v504, 1.442695
    %v564 = vpow.pop %v563
    %v565 = vmul.f32 %v505, 1.442695
    %v566 = vpow.pop %v565
    %v567 = vmul.f32 %v506, 1.442695
    %v568 = vpow.pop %v567
    %v569 = vmul.f32 %v507, 1.442695
    %v570 = vpow.pop %v569
    %v571 = vmul.f32 %v508, 1.442695
    %v572 = vpow.pop %v571
    %v573 = vadd.f32 %v510, 1.0
    %v574 = vadd.f32 %v512, 1.0
    %v575 = vadd.f32 %v514, 1.0
    %v576 = vadd.f32 %v516, 1.0
    %v577 = vadd.f32 %v518, 1.0
    %v578 = vadd.f32 %v520, 1.0
    %v579 = vadd.f32 %v522, 1.0
    %v580 = vadd.f32 %v524, 1.0
    %v581 = vadd.f32 %v526, 1.0
    %v582 = vadd.f32 %v528, 1.0
    %v583 = vadd.f32 %v530, 1.0
    %v584 = vadd.f32 %v532, 1.0
    %v585 = vadd.f32 %v534, 1.0
    %v586 = vadd.f32 %v536, 1.0
    %v587 = vadd.f32 %v538, 1.0
    %v588 = vadd.f32 %v540, 1.0
    %v589 = vadd.f32 %v542, 1.0
    %v590 = vadd.f32 %v544, 1.0
    %v591 = vadd.f32 %v546, 1.0
    %v592 = vadd.f32 %v548, 1.0
    %v593 = vadd.f32 %v550, 1.0
    %v594 = vadd.f32 %v552, 1.0
    %v595 = vadd.f32 %v554, 1.0
    %v596 = vadd.f32 %v556, 1.0
    %v597 = vadd.f32 %v558, 1.0
    %v598 = vadd.f32 %v560, 1.0
    %v599 = vadd.f32 %v562, 1.0
    %v600 = vadd.f32 %v564, 1.0
    %v601 = vadd.f32 %v566, 1.0
    %v602 = vadd.f32 %v568, 1.0
    %v603 = vadd.f32 %v570, 1.0
    %v604 = vadd.f32 %v572, 1.0
    %v605 = vrcp.pop %v573
    %v606 = vmul.f32 1.0, %v605
    %v607 = vrcp.pop %v574
    %v608 = vmul.f32 1.0, %v607
    %v609 = vrcp.pop %v575
    %v610 = vmul.f32 1.0, %v609
    %v611 = vrcp.pop %v576
    %v612 = vmul.f32 1.0, %v611
    %v613 = vrcp.pop %v577
    %v614 = vmul.f32 1.0, %v613
    %v615 = vrcp.pop %v578
    %v616 = vmul.f32 1.0, %v615
    %v617 = vrcp.pop %v579
    %v618 = vmul.f32 1.0, %v617
    %v619 = vrcp.pop %v580
    %v620 = vmul.f32 1.0, %v619
    %v621 = vrcp.pop %v581
    %v622 = vmul.f32 1.0, %v621
    %v623 = vrcp.pop %v582
    %v624 = vmul.f32 1.0, %v623
    %v625 = vrcp.pop %v583
    %v626 = vmul.f32 1.0, %v625
    %v627 = vrcp.pop %v584
    %v628 = vmul.f32 1.0, %v627
    %v629 = vrcp.pop %v585
    %v630 = vmul.f32 1.0, %v629
    %v631 = vrcp.pop %v586
    %v632 = vmul.f32 1.0, %v631
    %v633 = vrcp.pop %v587
    %v634 = vmul.f32 1.0, %v633
    %v635 = vrcp.pop %v588
    %v636 = vmul.f32 1.0, %v635
    %v637 = vrcp.pop %v589
    %v638 = vmul.f32 1.0, %v637
    %v639 = vrcp.pop %v590
    %v640 = vmul.f32 1.0, %v639
    %v641 = vrcp.pop %v591
    %v642 = vmul.f32 1.0, %v641
    %v643 = vrcp.pop %v592
    %v644 = vmul.f32 1.0, %v643
    %v645 = vrcp.pop %v593
    %v646 = vmul.f32 1.0, %v645
    %v647 = vrcp.pop %v594
    %v648 = vmul.f32 1.0, %v647
    %v649 = vrcp.pop %v595
    %v650 = vmul.f32 1.0, %v649
    %v651 = vrcp.pop %v596
    %v652 = vmul.f32 1.0, %v651
    %v653 = vrcp.pop %v597
    %v654 = vmul.f32 1.0, %v653
    %v655 = vrcp.pop %v598
    %v656 = vmul.f32 1.0, %v655
    %v657 = vrcp.pop %v599
    %v658 = vmul.f32 1.0, %v657
    %v659 = vrcp.pop %v600
    %v660 = vmul.f32 1.0, %v659
    %v661 = vrcp.pop %v601
    %v662 = vmul.f32 1.0, %v661
    %v663 = vrcp.pop %v602
    %v664 = vmul.f32 1.0, %v663
    %v665 = vrcp.pop %v603
    %v666 = vmul.f32 1.0, %v665
    %v667 = vrcp.pop %v604
    %v668 = vmul.f32 1.0, %v667
    %v670 = vlaneseq
    %v671 = vshrl.u32 %v670, 7
    %v672 = vsub.s32 0, %v671
    %v673 = vrot.slane %v476, %v672
    %676 = vset.pattern.permute.xlu0 0
    %677 = vperm.xlu0 %676, %v606
    %v678 = vpop.permute.xlu0 %677
    %681 = vset.pattern.permute.xlu0 0
    %682 = vperm.xlu0 %681, %v608
    %v683 = vpop.permute.xlu0 %682
    %686 = vset.pattern.permute.xlu0 0
    %687 = vperm.xlu0 %686, %v610
    %v688 = vpop.permute.xlu0 %687
    %691 = vset.pattern.permute.xlu0 0
    %692 = vperm.xlu0 %691, %v612
    %v693 = vpop.permute.xlu0 %692
    %696 = vset.pattern.permute.xlu0 0
    %697 = vperm.xlu0 %696, %v614
    %v698 = vpop.permute.xlu0 %697
    %701 = vset.pattern.permute.xlu0 0
    %702 = vperm.xlu0 %701, %v616
    %v703 = vpop.permute.xlu0 %702
    %706 = vset.pattern.permute.xlu0 0
    %707 = vperm.xlu0 %706, %v618
    %v708 = vpop.permute.xlu0 %707
    %711 = vset.pattern.permute.xlu0 0
    %712 = vperm.xlu0 %711, %v620
    %v713 = vpop.permute.xlu0 %712
    %716 = vset.pattern.permute.xlu0 0
    %717 = vperm.xlu0 %716, %v622
    %v718 = vpop.permute.xlu0 %717
    %721 = vset.pattern.permute.xlu0 0
    %722 = vperm.xlu0 %721, %v624
    %v723 = vpop.permute.xlu0 %722
    %726 = vset.pattern.permute.xlu0 0
    %727 = vperm.xlu0 %726, %v626
    %v728 = vpop.permute.xlu0 %727
    %731 = vset.pattern.permute.xlu0 0
    %732 = vperm.xlu0 %731, %v628
    %v733 = vpop.permute.xlu0 %732
    %736 = vset.pattern.permute.xlu0 0
    %737 = vperm.xlu0 %736, %v630
    %v738 = vpop.permute.xlu0 %737
    %741 = vset.pattern.permute.xlu0 0
    %742 = vperm.xlu0 %741, %v632
    %v743 = vpop.permute.xlu0 %742
    %746 = vset.pattern.permute.xlu0 0
    %747 = vperm.xlu0 %746, %v634
    %v748 = vpop.permute.xlu0 %747
    %751 = vset.pattern.permute.xlu0 0
    %752 = vperm.xlu0 %751, %v636
    %v753 = vpop.permute.xlu0 %752
    %756 = vset.pattern.permute.xlu0 0
    %757 = vperm.xlu0 %756, %v638
    %v758 = vpop.permute.xlu0 %757
    %761 = vset.pattern.permute.xlu0 0
    %762 = vperm.xlu0 %761, %v640
    %v763 = vpop.permute.xlu0 %762
    %766 = vset.pattern.permute.xlu0 0
    %767 = vperm.xlu0 %766, %v642
    %v768 = vpop.permute.xlu0 %767
    %771 = vset.pattern.permute.xlu0 0
    %772 = vperm.xlu0 %771, %v644
    %v773 = vpop.permute.xlu0 %772
    %776 = vset.pattern.permute.xlu0 0
    %777 = vperm.xlu0 %776, %v646
    %v778 = vpop.permute.xlu0 %777
    %781 = vset.pattern.permute.xlu0 0
    %782 = vperm.xlu0 %781, %v648
    %v783 = vpop.permute.xlu0 %782
    %786 = vset.pattern.permute.xlu0 0
    %787 = vperm.xlu0 %786, %v650
    %v788 = vpop.permute.xlu0 %787
    %791 = vset.pattern.permute.xlu0 0
    %792 = vperm.xlu0 %791, %v652
    %v793 = vpop.permute.xlu0 %792
    %796 = vset.pattern.permute.xlu0 0
    %797 = vperm.xlu0 %796, %v654
    %v798 = vpop.permute.xlu0 %797
    %801 = vset.pattern.permute.xlu0 0
    %802 = vperm.xlu0 %801, %v656
    %v803 = vpop.permute.xlu0 %802
    %806 = vset.pattern.permute.xlu0 0
    %807 = vperm.xlu0 %806, %v658
    %v808 = vpop.permute.xlu0 %807
    %811 = vset.pattern.permute.xlu0 0
    %812 = vperm.xlu0 %811, %v660
    %v813 = vpop.permute.xlu0 %812
    %816 = vset.pattern.permute.xlu0 0
    %817 = vperm.xlu0 %816, %v662
    %v818 = vpop.permute.xlu0 %817
    %821 = vset.pattern.permute.xlu0 0
    %822 = vperm.xlu0 %821, %v664
    %v823 = vpop.permute.xlu0 %822
    %826 = vset.pattern.permute.xlu0 0
    %827 = vperm.xlu0 %826, %v666
    %v828 = vpop.permute.xlu0 %827
    %831 = vset.pattern.permute.xlu0 0
    %832 = vperm.xlu0 %831, %v668
    %v833 = vpop.permute.xlu0 %832
    %v835 = vadd.f32 %v673, %v678
    %v836 = vadd.f32 %v673, %v683
    %v837 = vadd.f32 %v673, %v688
    %v838 = vadd.f32 %v673, %v693
    %v839 = vadd.f32 %v673, %v698
    %v840 = vadd.f32 %v673, %v703
    %v841 = vadd.f32 %v673, %v708
    %v842 = vadd.f32 %v673, %v713
    %v843 = vadd.f32 %v673, %v718
    %v844 = vadd.f32 %v673, %v723
    %v845 = vadd.f32 %v673, %v728
    %v846 = vadd.f32 %v673, %v733
    %v847 = vadd.f32 %v673, %v738
    %v848 = vadd.f32 %v673, %v743
    %v849 = vadd.f32 %v673, %v748
    %v850 = vadd.f32 %v673, %v753
    %v851 = vadd.f32 %v673, %v758
    %v852 = vadd.f32 %v673, %v763
    %v853 = vadd.f32 %v673, %v768
    %v854 = vadd.f32 %v673, %v773
    %v855 = vadd.f32 %v673, %v778
    %v856 = vadd.f32 %v673, %v783
    %v857 = vadd.f32 %v673, %v788
    %v858 = vadd.f32 %v673, %v793
    %v859 = vadd.f32 %v673, %v798
    %v860 = vadd.f32 %v673, %v803
    %v861 = vadd.f32 %v673, %v808
    %v862 = vadd.f32 %v673, %v813
    %v863 = vadd.f32 %v673, %v818
    %v864 = vadd.f32 %v673, %v823
    %v865 = vadd.f32 %v673, %v828
    %v866 = vadd.f32 %v673, %v833
    %v867 = vmul.f32 %v269, %v835
    %v868 = vmul.f32 %v270, %v836
    %v869 = vmul.f32 %v271, %v837
    %v870 = vmul.f32 %v272, %v838
    %v871 = vmul.f32 %v273, %v839
    %v872 = vmul.f32 %v274, %v840
    %v873 = vmul.f32 %v275, %v841
    %v874 = vmul.f32 %v276, %v842
    %v875 = vmul.f32 %v277, %v843
    %v876 = vmul.f32 %v278, %v844
    %v877 = vmul.f32 %v279, %v845
    %v878 = vmul.f32 %v280, %v846
    %v879 = vmul.f32 %v281, %v847
    %v880 = vmul.f32 %v282, %v848
    %v881 = vmul.f32 %v283, %v849
    %v882 = vmul.f32 %v284, %v850
    %v883 = vmul.f32 %v285, %v851
    %v884 = vmul.f32 %v286, %v852
    %v885 = vmul.f32 %v287, %v853
    %v886 = vmul.f32 %v288, %v854
    %v887 = vmul.f32 %v289, %v855
    %v888 = vmul.f32 %v290, %v856
    %v889 = vmul.f32 %v291, %v857
    %v890 = vmul.f32 %v292, %v858
    %v891 = vmul.f32 %v293, %v859
    %v892 = vmul.f32 %v294, %v860
    %v893 = vmul.f32 %v295, %v861
    %v894 = vmul.f32 %v296, %v862
    %v895 = vmul.f32 %v297, %v863
    %v896 = vmul.f32 %v298, %v864
    %v897 = vmul.f32 %v299, %v865
    %v898 = vmul.f32 %v300, %v866
    %v899 = vld [vmem:[#allocation6] sm:$0xff]
    %v900 = vld [vmem:[#allocation6 + $0x8] sm:$0xff]
    %v901 = vld [vmem:[#allocation6 + $0x10] sm:$0xff]
    %v902 = vld [vmem:[#allocation6 + $0x18] sm:$0xff]
    %v903 = vld [vmem:[#allocation6 + $0x20] sm:$0xff]
    %v904 = vld [vmem:[#allocation6 + $0x28] sm:$0xff]
    %v905 = vld [vmem:[#allocation6 + $0x30] sm:$0xff]
    %v906 = vld [vmem:[#allocation6 + $0x38] sm:$0xff]
    %v907 = vld [vmem:[#allocation6 + $0x40] sm:$0xff]
    %v908 = vld [vmem:[#allocation6 + $0x48] sm:$0xff]
    %v909 = vld [vmem:[#allocation6 + $0x50] sm:$0xff]
    %v910 = vld [vmem:[#allocation6 + $0x58] sm:$0xff]
    %v911 = vld [vmem:[#allocation6 + $0x60] sm:$0xff]
    %v912 = vld [vmem:[#allocation6 + $0x68] sm:$0xff]
    %v913 = vld [vmem:[#allocation6 + $0x70] sm:$0xff]
    %v914 = vld [vmem:[#allocation6 + $0x78] sm:$0xff]
    %v915 = vld [vmem:[#allocation6 + $0x80] sm:$0xff]
    %v916 = vld [vmem:[#allocation6 + $0x88] sm:$0xff]
    %v917 = vld [vmem:[#allocation6 + $0x90] sm:$0xff]
    %v918 = vld [vmem:[#allocation6 + $0x98] sm:$0xff]
    %v919 = vld [vmem:[#allocation6 + $0xa0] sm:$0xff]
    %v920 = vld [vmem:[#allocation6 + $0xa8] sm:$0xff]
    %v921 = vld [vmem:[#allocation6 + $0xb0] sm:$0xff]
    %v922 = vld [vmem:[#allocation6 + $0xb8] sm:$0xff]
    %v923 = vld [vmem:[#allocation6 + $0xc0] sm:$0xff]
    %v924 = vld [vmem:[#allocation6 + $0xc8] sm:$0xff]
    %v925 = vld [vmem:[#allocation6 + $0xd0] sm:$0xff]
    %v926 = vld [vmem:[#allocation6 + $0xd8] sm:$0xff]
    %v927 = vld [vmem:[#allocation6 + $0xe0] sm:$0xff]
    %v928 = vld [vmem:[#allocation6 + $0xe8] sm:$0xff]
    %v929 = vld [vmem:[#allocation6 + $0xf0] sm:$0xff]
    %v930 = vld [vmem:[#allocation6 + $0xf8] sm:$0xff]
    %v931 = vadd.f32 %v867, %v899
    %v932 = vadd.f32 %v868, %v900
    %v933 = vadd.f32 %v869, %v901
    %v934 = vadd.f32 %v870, %v902
    %v935 = vadd.f32 %v871, %v903
    %v936 = vadd.f32 %v872, %v904
    %v937 = vadd.f32 %v873, %v905
    %v938 = vadd.f32 %v874, %v906
    %v939 = vadd.f32 %v875, %v907
    %v940 = vadd.f32 %v876, %v908
    %v941 = vadd.f32 %v877, %v909
    %v942 = vadd.f32 %v878, %v910
    %v943 = vadd.f32 %v879, %v911
    %v944 = vadd.f32 %v880, %v912
    %v945 = vadd.f32 %v881, %v913
    %v946 = vadd.f32 %v882, %v914
    %v947 = vadd.f32 %v883, %v915
    %v948 = vadd.f32 %v884, %v916
    %v949 = vadd.f32 %v885, %v917
    %v950 = vadd.f32 %v886, %v918
    %v951 = vadd.f32 %v887, %v919
    %v952 = vadd.f32 %v888, %v920
    %v953 = vadd.f32 %v889, %v921
    %v954 = vadd.f32 %v890, %v922
    %v955 = vadd.f32 %v891, %v923
    %v956 = vadd.f32 %v892, %v924
    %v957 = vadd.f32 %v893, %v925
    %v958 = vadd.f32 %v894, %v926
    %v959 = vadd.f32 %v895, %v927
    %v960 = vadd.f32 %v896, %v928
    %v961 = vadd.f32 %v897, %v929
    %v962 = vadd.f32 %v898, %v930
    %963 = vst.msk [vmem:[#allocation15] sm:$0xff] %vm340, %v931
    %964 = vst.msk [vmem:[#allocation15 + $0x8] sm:$0xff] %vm340, %v932
    %965 = vst.msk [vmem:[#allocation15 + $0x10] sm:$0xff] %vm340, %v933
    %966 = vst.msk [vmem:[#allocation15 + $0x18] sm:$0xff] %vm340, %v934
    %967 = vst.msk [vmem:[#allocation15 + $0x20] sm:$0xff] %vm340, %v935
    %968 = vst.msk [vmem:[#allocation15 + $0x28] sm:$0xff] %vm340, %v936
    %969 = vst.msk [vmem:[#allocation15 + $0x30] sm:$0xff] %vm340, %v937
    %970 = vst.msk [vmem:[#allocation15 + $0x38] sm:$0xff] %vm340, %v938
    %971 = vst.msk [vmem:[#allocation15 + $0x40] sm:$0xff] %vm340, %v939
    %972 = vst.msk [vmem:[#allocation15 + $0x48] sm:$0xff] %vm340, %v940
    %973 = vst.msk [vmem:[#allocation15 + $0x50] sm:$0xff] %vm340, %v941
    %974 = vst.msk [vmem:[#allocation15 + $0x58] sm:$0xff] %vm340, %v942
    %975 = vst.msk [vmem:[#allocation15 + $0x60] sm:$0xff] %vm340, %v943
    %976 = vst.msk [vmem:[#allocation15 + $0x68] sm:$0xff] %vm340, %v944
    %977 = vst.msk [vmem:[#allocation15 + $0x70] sm:$0xff] %vm340, %v945
    %978 = vst.msk [vmem:[#allocation15 + $0x78] sm:$0xff] %vm340, %v946
    %979 = vst.msk [vmem:[#allocation15 + $0x80] sm:$0xff] %vm340, %v947
    %980 = vst.msk [vmem:[#allocation15 + $0x88] sm:$0xff] %vm340, %v948
    %981 = vst.msk [vmem:[#allocation15 + $0x90] sm:$0xff] %vm340, %v949
    %982 = vst.msk [vmem:[#allocation15 + $0x98] sm:$0xff] %vm340, %v950
    %983 = vst.msk [vmem:[#allocation15 + $0xa0] sm:$0xff] %vm340, %v951
    %984 = vst.msk [vmem:[#allocation15 + $0xa8] sm:$0xff] %vm340, %v952
    %985 = vst.msk [vmem:[#allocation15 + $0xb0] sm:$0xff] %vm340, %v953
    %986 = vst.msk [vmem:[#allocation15 + $0xb8] sm:$0xff] %vm340, %v954
    %987 = vst.msk [vmem:[#allocation15 + $0xc0] sm:$0xff] %vm340, %v955
    %988 = vst.msk [vmem:[#allocation15 + $0xc8] sm:$0xff] %vm340, %v956
    %989 = vst.msk [vmem:[#allocation15 + $0xd0] sm:$0xff] %vm340, %v957
    %990 = vst.msk [vmem:[#allocation15 + $0xd8] sm:$0xff] %vm340, %v958
    %991 = vst.msk [vmem:[#allocation15 + $0xe0] sm:$0xff] %vm340, %v959
    %992 = vst.msk [vmem:[#allocation15 + $0xe8] sm:$0xff] %vm340, %v960
    %993 = vst.msk [vmem:[#allocation15 + $0xf0] sm:$0xff] %vm340, %v961
    %994 = vst.msk [vmem:[#allocation15 + $0xf8] sm:$0xff] %vm340, %v962
    // Predicated region
    $region62: #{oracle_forward.37} parent=1 // pred_check
      _
    $region63: #{oracle_forward.37} parent=1 // pred_check_branch
      %996 = sbr.rel (0) target = $region65
    $region64: #{oracle_forward.37} parent=1 // pred_region
      %s998 = ssub.s32 4096, 4096
      %999 = vsyncadd [#allocation5], %s998
      %s1000 = sshll.u32 [#allocation15], 4
      %s1001 = int_to_ptr.vmem [resolvable:$true] %s1000
      %1006 = dma.vmem_to_hbm [thread:$0]  %s1001, 4096, %s8, [#allocation5], 128, 128, 8
    $region65: #{oracle_forward.37} parent=1 // pred_fallthru
      _
    // Predicated region
    $region66: #{oracle_forward.37} parent=1 // pred_check
      _
    $region67: #{oracle_forward.37} parent=1 // pred_check_branch
      %1008 = sbr.rel (0) target = $region69
    $region68: #{oracle_forward.37} parent=1 // pred_region
      %1009 = dma.done [#allocation5], 4096
    $region69: #{oracle_forward.37} parent=1 // pred_fallthru
      _
    %1010 = vsyncpa [#allocation4], 1
    %1011 = vsyncpa [#allocation7], 1
    %1012 = vsyncpa [#allocation10], 1
    %1013 = vsyncpa [#allocation13], 1
    %1014 = vsyncpa [#allocation5], 1

// kernel: oracle_forward.67
$region0: #{oracle_forward.67}
  #allocation0 [shape = 'u32[]', space=smem, size = 0x4, offset = 0x4, fixed_abs, tag = 'smem constant byte address 0x4 - core index']
  #allocation1 [shape = 'u32[144,128]{1,0:T(1,128)}', space=vmem, size = 0x12000, scoped, tag = 'internal scratch']
  #allocation2 [shape = 'f32[1,1]{1,0:T(1,128)S(1)}', space=vmem, size = 0x200, scoped, tag = 'scoped memory for oracle_forward.67']
  %s0 = inlined_call_operand.hbm [shape: f32[256,32], index: 0, kind: input, shape index: {}]
  %s1 = inlined_call_operand.hbm [shape: f32[256,32], index: 1, kind: input, shape index: {}]
  %s2 = inlined_call_operand.hbm [shape: f32[2,32], index: 2, kind: input, shape index: {}]
  %s3 = inlined_call_operand.hbm [shape: f32[1,32], index: 3, kind: input, shape index: {}]
  %s4 = inlined_call_operand.hbm [shape: f32[1,32], index: 4, kind: input, shape index: {}]
  %s5 = inlined_call_operand.hbm [shape: f32[1,32], index: 5, kind: input, shape index: {}]
  %s6 = inlined_call_operand.hbm [shape: f32[1,32], index: 6, kind: input, shape index: {}]
  %s7 = inlined_call_operand.<no memory space> [shape: f32[1,1], index: 7, kind: input, shape index: {}]
  %s8 = inlined_call_operand.hbm [shape: f32[32,104], index: 8, kind: input, shape index: {}]
  %s9 = inlined_call_operand.hbm [shape: f32[1,104], index: 9, kind: input, shape index: {}]
  %s10 = inlined_call_operand.hbm [shape: f32[256,104], index: 10, kind: output, shape index: {}]
  %s11 = sld [smem:[#allocation0]]
  $region86: #{oracle_forward.67} parent=0
    _
  %s13 = ssub.s32 1, %s11
  %s14 = scalar_select 0, %s13, %s11
  %v15 = vstv %s7
  %16 = vst [vmem:[#allocation2] sm:$0x1] %v15
  $region1: #{oracle_forward.67} parent=0
    #allocation3 [shape = 'u8[131072]{0}', space=vmem, size = 0x20000, scoped, tag = 'input window, operand 0, single buffered']
    #allocation4 [shape = 's32[1]{0}', space=sflag, size = 0x4, scoped, tag = 'scoped memory for oracle_forward.67']
    #allocation5 [shape = 's32[1]{0}', space=sflag, size = 0x4, scoped, tag = 'scoped memory for oracle_forward.67']
    #allocation6 [shape = 'u8[131072]{0}', space=vmem, size = 0x20000, scoped, tag = 'input window, operand 1, single buffered']
    #allocation7 [shape = 's32[1]{0}', space=sflag, size = 0x4, scoped, tag = 'scoped memory for oracle_forward.67']
    #allocation8 [shape = 'u8[1024]{0}', space=vmem, size = 0x400, scoped, tag = 'input window, operand 2, single buffered']
    #allocation9 [shape = 'u8[512]{0}', space=vmem, size = 0x400, scoped, tag = 'input window, operand 3, single buffered']
    #allocation10 [shape = 's32[1]{0}', space=sflag, size = 0x4, scoped, tag = 'scoped memory for oracle_forward.67']
    #allocation11 [shape = 'u8[512]{0}', space=vmem, size = 0x400, scoped, tag = 'input window, operand 4, single buffered']
    #allocation12 [shape = 'u8[512]{0}', space=vmem, size = 0x400, scoped, tag = 'input window, operand 5, single buffered']
    #allocation13 [shape = 's32[1]{0}', space=sflag, size = 0x4, scoped, tag = 'scoped memory for oracle_forward.67']
    #allocation14 [shape = 'u8[512]{0}', space=vmem, size = 0x400, scoped, tag = 'input window, operand 6, single buffered']
    #allocation15 [shape = 'u8[16384]{0}', space=vmem, size = 0x4000, scoped, tag = 'input window, operand 8, single buffered']
    #allocation16 [shape = 's32[1]{0}', space=sflag, size = 0x4, scoped, tag = 'scoped memory for oracle_forward.67']
    #allocation17 [shape = 'u8[512]{0}', space=vmem, size = 0x400, scoped, tag = 'input window, operand 9, single buffered']
    #allocation18 [shape = 'u8[131072]{0}', space=vmem, size = 0x20000, scoped, tag = 'output window, operand 0, single buffered']
    %17 = vsyncpa [#allocation4], 0
    %18 = vsyncpa [#allocation7], 0
    %19 = vsyncpa [#allocation10], 0
    %20 = vsyncpa [#allocation13], 0
    %21 = vsyncpa [#allocation16], 0
    %22 = vsyncpa [#allocation5], 0
    // Predicated region
    $region2: #{oracle_forward.67} parent=1 // pred_check
      _
    $region3: #{oracle_forward.67} parent=1 // pred_check_branch
      %24 = sbr.rel (0) target = $region5
    $region4: #{oracle_forward.67} parent=1 // pred_region
      %s26 = ssub.s32 4096, 4096
      %27 = vsyncadd [#allocation4], %s26
      %s28 = sshll.u32 [#allocation3], 4
      %s29 = int_to_ptr.vmem [resolvable:$true] %s28
      %34 = dma.hbm_to_vmem [thread:$0]  %s0, 4096, %s29, [#allocation4], 128, 128, 8
    $region5: #{oracle_forward.67} parent=1 // pred_fallthru
      _
    // Predicated region
    $region6: #{oracle_forward.67} parent=1 // pred_check
      _
    $region7: #{oracle_forward.67} parent=1 // pred_check_branch
      %36 = sbr.rel (0) target = $region9
    $region8: #{oracle_forward.67} parent=1 // pred_region
      %s38 = ssub.s32 4096, 4096
      %39 = vsyncadd [#allocation7], %s38
      %s40 = sshll.u32 [#allocation6], 4
      %s41 = int_to_ptr.vmem [resolvable:$true] %s40
      %46 = dma.hbm_to_vmem [thread:$0]  %s1, 4096, %s41, [#allocation7], 128, 128, 8
    $region9: #{oracle_forward.67} parent=1 // pred_fallthru
      _
    // Predicated region
    $region10: #{oracle_forward.67} parent=1 // pred_check
      _
    $region11: #{oracle_forward.67} parent=1 // pred_check_branch
      %48 = sbr.rel (0) target = $region13
    $region12: #{oracle_forward.67} parent=1 // pred_region
      %s50 = ssub.s32 32, 32
      %51 = vsyncadd [#allocation7], %s50
      %s53 = sshll.u32 [#allocation8], 4
      %s54 = int_to_ptr.vmem [resolvable:$true] %s53
      %56 = dma.hbm_to_vmem [thread:$0]  %s2, 32, %s54, [#allocation7]
    $region13: #{oracle_forward.67} parent=1 // pred_fallthru
      _
    // Predicated region
    $region14: #{oracle_forward.67} parent=1 // pred_check
      _
    $region15: #{oracle_forward.67} parent=1 // pred_check_branch
      %58 = sbr.rel (0) target = $region17
    $region16: #{oracle_forward.67} parent=1 // pred_region
      %s60 = ssub.s32 16, 16
      %61 = vsyncadd [#allocation10], %s60
      %s63 = sshll.u32 [#allocation9], 4
      %s64 = int_to_ptr.vmem [resolvable:$true] %s63
      %66 = dma.hbm_to_vmem [thread:$0]  %s3, 16, %s64, [#allocation10]
    $region17: #{oracle_forward.67} parent=1 // pred_fallthru
      _
    // Predicated region
    $region18: #{oracle_forward.67} parent=1 // pred_check
      _
    $region19: #{oracle_forward.67} parent=1 // pred_check_branch
      %68 = sbr.rel (0) target = $region21
    $region20: #{oracle_forward.67} parent=1 // pred_region
      %s70 = ssub.s32 16, 16
      %71 = vsyncadd [#allocation10], %s70
      %s73 = sshll.u32 [#allocation11], 4
      %s74 = int_to_ptr.vmem [resolvable:$true] %s73
      %76 = dma.hbm_to_vmem [thread:$0]  %s4, 16, %s74, [#allocation10]
    $region21: #{oracle_forward.67} parent=1 // pred_fallthru
      _
    // Predicated region
    $region22: #{oracle_forward.67} parent=1 // pred_check
      _
    $region23: #{oracle_forward.67} parent=1 // pred_check_branch
      %78 = sbr.rel (0) target = $region25
    $region24: #{oracle_forward.67} parent=1 // pred_region
      %s80 = ssub.s32 16, 16
      %81 = vsyncadd [#allocation13], %s80
      %s83 = sshll.u32 [#allocation12], 4
      %s84 = int_to_ptr.vmem [resolvable:$true] %s83
      %86 = dma.hbm_to_vmem [thread:$0]  %s5, 16, %s84, [#allocation13]
    $region25: #{oracle_forward.67} parent=1 // pred_fallthru
      _
    // Predicated region
    $region26: #{oracle_forward.67} parent=1 // pred_check
      _
    $region27: #{oracle_forward.67} parent=1 // pred_check_branch
      %88 = sbr.rel (0) target = $region29
    $region28: #{oracle_forward.67} parent=1 // pred_region
      %s90 = ssub.s32 16, 16
      %91 = vsyncadd [#allocation13], %s90
      %s93 = sshll.u32 [#allocation14], 4
      %s94 = int_to_ptr.vmem [resolvable:$true] %s93
      %96 = dma.hbm_to_vmem [thread:$0]  %s6, 16, %s94, [#allocation13]
    $region29: #{oracle_forward.67} parent=1 // pred_fallthru
      _
    // Predicated region
    $region30: #{oracle_forward.67} parent=1 // pred_check
      _
    $region31: #{oracle_forward.67} parent=1 // pred_check_branch
      %98 = sbr.rel (0) target = $region33
    $region32: #{oracle_forward.67} parent=1 // pred_region
      _
    $region33: #{oracle_forward.67} parent=1 // pred_fallthru
      _
    // Predicated region
    $region34: #{oracle_forward.67} parent=1 // pred_check
      _
    $region35: #{oracle_forward.67} parent=1 // pred_check_branch
      %100 = sbr.rel (0) target = $region37
    $region36: #{oracle_forward.67} parent=1 // pred_region
      %s102 = ssub.s32 512, 512
      %103 = vsyncadd [#allocation16], %s102
      %s104 = sshll.u32 [#allocation15], 4
      %s105 = int_to_ptr.vmem [resolvable:$true] %s104
      %110 = dma.hbm_to_vmem [thread:$0]  %s8, 512, %s105, [#allocation16], 128, 128, 8
    $region37: #{oracle_forward.67} parent=1 // pred_fallthru
      _
    // Predicated region
    $region38: #{oracle_forward.67} parent=1 // pred_check
      _
    $region39: #{oracle_forward.67} parent=1 // pred_check_branch
      %112 = sbr.rel (0) target = $region41
    $region40: #{oracle_forward.67} parent=1 // pred_region
      %s114 = ssub.s32 16, 16
      %115 = vsyncadd [#allocation16], %s114
      %s117 = sshll.u32 [#allocation17], 4
      %s118 = int_to_ptr.vmem [resolvable:$true] %s117
      %120 = dma.hbm_to_vmem [thread:$0]  %s9, 16, %s118, [#allocation16]
    $region41: #{oracle_forward.67} parent=1 // pred_fallthru
      _
    // Predicated region
    $region42: #{oracle_forward.67} parent=1 // pred_check
      _
    $region43: #{oracle_forward.67} parent=1 // pred_check_branch
      %122 = sbr.rel (0) target = $region45
    $region44: #{oracle_forward.67} parent=1 // pred_region
      %123 = dma.done [#allocation4], 4096
    $region45: #{oracle_forward.67} parent=1 // pred_fallthru
      _
    // Predicated region
    $region46: #{oracle_forward.67} parent=1 // pred_check
      _
    $region47: #{oracle_forward.67} parent=1 // pred_check_branch
      %125 = sbr.rel (0) target = $region49
    $region48: #{oracle_forward.67} parent=1 // pred_region
      %126 = dma.done [#allocation7], 4096
    $region49: #{oracle_forward.67} parent=1 // pred_fallthru
      _
    // Predicated region
    $region50: #{oracle_forward.67} parent=1 // pred_check
      _
    $region51: #{oracle_forward.67} parent=1 // pred_check_branch
      %128 = sbr.rel (0) target = $region53
    $region52: #{oracle_forward.67} parent=1 // pred_region
      %129 = dma.done [#allocation7], 32
    $region53: #{oracle_forward.67} parent=1 // pred_fallthru
      _
    // Predicated region
    $region54: #{oracle_forward.67} parent=1 // pred_check
      _
    $region55: #{oracle_forward.67} parent=1 // pred_check_branch
      %131 = sbr.rel (0) target = $region57
    $region56: #{oracle_forward.67} parent=1 // pred_region
      %132 = dma.done [#allocation10], 16
    $region57: #{oracle_forward.67} parent=1 // pred_fallthru
      _
    // Predicated region
    $region58: #{oracle_forward.67} parent=1 // pred_check
      _
    $region59: #{oracle_forward.67} parent=1 // pred_check_branch
      %134 = sbr.rel (0) target = $region61
    $region60: #{oracle_forward.67} parent=1 // pred_region
      %135 = dma.done [#allocation10], 16
    $region61: #{oracle_forward.67} parent=1 // pred_fallthru
      _
    // Predicated region
    $region62: #{oracle_forward.67} parent=1 // pred_check
      _
    $region63: #{oracle_forward.67} parent=1 // pred_check_branch
      %137 = sbr.rel (0) target = $region65
    $region64: #{oracle_forward.67} parent=1 // pred_region
      %138 = dma.done [#allocation13], 16
    $region65: #{oracle_forward.67} parent=1 // pred_fallthru
      _
    // Predicated region
    $region66: #{oracle_forward.67} parent=1 // pred_check
      _
    $region67: #{oracle_forward.67} parent=1 // pred_check_branch
      %140 = sbr.rel (0) target = $region69
    $region68: #{oracle_forward.67} parent=1 // pred_region
      %141 = dma.done [#allocation13], 16
    $region69: #{oracle_forward.67} parent=1 // pred_fallthru
      _
    // Predicated region
    $region70: #{oracle_forward.67} parent=1 // pred_check
      _
    $region71: #{oracle_forward.67} parent=1 // pred_check_branch
      %143 = sbr.rel (0) target = $region73
    $region72: #{oracle_forward.67} parent=1 // pred_region
      %144 = dma.done [#allocation16], 512
    $region73: #{oracle_forward.67} parent=1 // pred_fallthru
      _
    // Predicated region
    $region74: #{oracle_forward.67} parent=1 // pred_check
      _
    $region75: #{oracle_forward.67} parent=1 // pred_check_branch
      %146 = sbr.rel (0) target = $region77
    $region76: #{oracle_forward.67} parent=1 // pred_region
      %147 = dma.done [#allocation16], 16
    $region77: #{oracle_forward.67} parent=1 // pred_fallthru
      _
    %v148 = vld [vmem:[#allocation3] sm:$0xff]
    %v149 = vld [vmem:[#allocation3 + $0x8] sm:$0xff]
    %v150 = vld [vmem:[#allocation3 + $0x10] sm:$0xff]
    %v151 = vld [vmem:[#allocation3 + $0x18] sm:$0xff]
    %v152 = vld [vmem:[#allocation3 + $0x20] sm:$0xff]
    %v153 = vld [vmem:[#allocation3 + $0x28] sm:$0xff]
    %v154 = vld [vmem:[#allocation3 + $0x30] sm:$0xff]
    %v155 = vld [vmem:[#allocation3 + $0x38] sm:$0xff]
    %v156 = vld [vmem:[#allocation3 + $0x40] sm:$0xff]
    %v157 = vld [vmem:[#allocation3 + $0x48] sm:$0xff]
    %v158 = vld [vmem:[#allocation3 + $0x50] sm:$0xff]
    %v159 = vld [vmem:[#allocation3 + $0x58] sm:$0xff]
    %v160 = vld [vmem:[#allocation3 + $0x60] sm:$0xff]
    %v161 = vld [vmem:[#allocation3 + $0x68] sm:$0xff]
    %v162 = vld [vmem:[#allocation3 + $0x70] sm:$0xff]
    %v163 = vld [vmem:[#allocation3 + $0x78] sm:$0xff]
    %v164 = vld [vmem:[#allocation3 + $0x80] sm:$0xff]
    %v165 = vld [vmem:[#allocation3 + $0x88] sm:$0xff]
    %v166 = vld [vmem:[#allocation3 + $0x90] sm:$0xff]
    %v167 = vld [vmem:[#allocation3 + $0x98] sm:$0xff]
    %v168 = vld [vmem:[#allocation3 + $0xa0] sm:$0xff]
    %v169 = vld [vmem:[#allocation3 + $0xa8] sm:$0xff]
    %v170 = vld [vmem:[#allocation3 + $0xb0] sm:$0xff]
    %v171 = vld [vmem:[#allocation3 + $0xb8] sm:$0xff]
    %v172 = vld [vmem:[#allocation3 + $0xc0] sm:$0xff]
    %v173 = vld [vmem:[#allocation3 + $0xc8] sm:$0xff]
    %v174 = vld [vmem:[#allocation3 + $0xd0] sm:$0xff]
    %v175 = vld [vmem:[#allocation3 + $0xd8] sm:$0xff]
    %v176 = vld [vmem:[#allocation3 + $0xe0] sm:$0xff]
    %v177 = vld [vmem:[#allocation3 + $0xe8] sm:$0xff]
    %v178 = vld [vmem:[#allocation3 + $0xf0] sm:$0xff]
    %v179 = vld [vmem:[#allocation3 + $0xf8] sm:$0xff]
    %v180 = vld [vmem:[#allocation8] sm:$0x1]
    %v181 = vlaneseq
    %v182 = vshrl.u32 %v181, 7
    %v183 = vsub.s32 0, %v182
    %v184 = vrot.slane %v180, %v183
    %v185 = vsub.f32 %v148, %v184
    %v186 = vsub.f32 %v149, %v184
    %v187 = vsub.f32 %v150, %v184
    %v188 = vsub.f32 %v151, %v184
    %v189 = vsub.f32 %v152, %v184
    %v190 = vsub.f32 %v153, %v184
    %v191 = vsub.f32 %v154, %v184
    %v192 = vsub.f32 %v155, %v184
    %v193 = vsub.f32 %v156, %v184
    %v194 = vsub.f32 %v157, %v184
    %v195 = vsub.f32 %v158, %v184
    %v196 = vsub.f32 %v159, %v184
    %v197 = vsub.f32 %v160, %v184
    %v198 = vsub.f32 %v161, %v184
    %v199 = vsub.f32 %v162, %v184
    %v200 = vsub.f32 %v163, %v184
    %v201 = vsub.f32 %v164, %v184
    %v202 = vsub.f32 %v165, %v184
    %v203 = vsub.f32 %v166, %v184
    %v204 = vsub.f32 %v167, %v184
    %v205 = vsub.f32 %v168, %v184
    %v206 = vsub.f32 %v169, %v184
    %v207 = vsub.f32 %v170, %v184
    %v208 = vsub.f32 %v171, %v184
    %v209 = vsub.f32 %v172, %v184
    %v210 = vsub.f32 %v173, %v184
    %v211 = vsub.f32 %v174, %v184
    %v212 = vsub.f32 %v175, %v184
    %v213 = vsub.f32 %v176, %v184
    %v214 = vsub.f32 %v177, %v184
    %v215 = vsub.f32 %v178, %v184
    %v216 = vsub.f32 %v179, %v184
    %v217 = vld [vmem:[#allocation8 + $0x1] sm:$0x1]
    %v218 = vlaneseq
    %v219 = vshrl.u32 %v218, 7
    %v220 = vsub.s32 0, %v219
    %v221 = vrot.slane %v217, %v220
    %v222 = vmul.f32 %v185, %v221
    %v223 = vmul.f32 %v186, %v221
    %v224 = vmul.f32 %v187, %v221
    %v225 = vmul.f32 %v188, %v221
    %v226 = vmul.f32 %v189, %v221
    %v227 = vmul.f32 %v190, %v221
    %v228 = vmul.f32 %v191, %v221
    %v229 = vmul.f32 %v192, %v221
    %v230 = vmul.f32 %v193, %v221
    %v231 = vmul.f32 %v194, %v221
    %v232 = vmul.f32 %v195, %v221
    %v233 = vmul.f32 %v196, %v221
    %v234 = vmul.f32 %v197, %v221
    %v235 = vmul.f32 %v198, %v221
    %v236 = vmul.f32 %v199, %v221
    %v237 = vmul.f32 %v200, %v221
    %v238 = vmul.f32 %v201, %v221
    %v239 = vmul.f32 %v202, %v221
    %v240 = vmul.f32 %v203, %v221
    %v241 = vmul.f32 %v204, %v221
    %v242 = vmul.f32 %v205, %v221
    %v243 = vmul.f32 %v206, %v221
    %v244 = vmul.f32 %v207, %v221
    %v245 = vmul.f32 %v208, %v221
    %v246 = vmul.f32 %v209, %v221
    %v247 = vmul.f32 %v210, %v221
    %v248 = vmul.f32 %v211, %v221
    %v249 = vmul.f32 %v212, %v221
    %v250 = vmul.f32 %v213, %v221
    %v251 = vmul.f32 %v214, %v221
    %v252 = vmul.f32 %v215, %v221
    %v253 = vmul.f32 %v216, %v221
    %v254 = vld [vmem:[#allocation9] sm:$0x1]
    %v256 = vlaneseq
    %v257 = vshrl.u32 %v256, 7
    %v258 = vsub.s32 0, %v257
    %v259 = vrot.slane %v254, %v258
    %v261 = vmul.f32 %v222, %v259
    %v262 = vmul.f32 %v223, %v259
    %v263 = vmul.f32 %v224, %v259
    %v264 = vmul.f32 %v225, %v259
    %v265 = vmul.f32 %v226, %v259
    %v266 = vmul.f32 %v227, %v259
    %v267 = vmul.f32 %v228, %v259
    %v268 = vmul.f32 %v229, %v259
    %v269 = vmul.f32 %v230, %v259
    %v270 = vmul.f32 %v231, %v259
    %v271 = vmul.f32 %v232, %v259
    %v272 = vmul.f32 %v233, %v259
    %v273 = vmul.f32 %v234, %v259
    %v274 = vmul.f32 %v235, %v259
    %v275 = vmul.f32 %v236, %v259
    %v276 = vmul.f32 %v237, %v259
    %v277 = vmul.f32 %v238, %v259
    %v278 = vmul.f32 %v239, %v259
    %v279 = vmul.f32 %v240, %v259
    %v280 = vmul.f32 %v241, %v259
    %v281 = vmul.f32 %v242, %v259
    %v282 = vmul.f32 %v243, %v259
    %v283 = vmul.f32 %v244, %v259
    %v284 = vmul.f32 %v245, %v259
    %v285 = vmul.f32 %v246, %v259
    %v286 = vmul.f32 %v247, %v259
    %v287 = vmul.f32 %v248, %v259
    %v288 = vmul.f32 %v249, %v259
    %v289 = vmul.f32 %v250, %v259
    %v290 = vmul.f32 %v251, %v259
    %v291 = vmul.f32 %v252, %v259
    %v292 = vmul.f32 %v253, %v259
    %v293 = vld [vmem:[#allocation11] sm:$0x1]
    %v295 = vlaneseq
    %v296 = vshrl.u32 %v295, 7
    %v297 = vsub.s32 0, %v296
    %v298 = vrot.slane %v293, %v297
    %v300 = vadd.f32 %v261, %v298
    %v301 = vadd.f32 %v262, %v298
    %v302 = vadd.f32 %v263, %v298
    %v303 = vadd.f32 %v264, %v298
    %v304 = vadd.f32 %v265, %v298
    %v305 = vadd.f32 %v266, %v298
    %v306 = vadd.f32 %v267, %v298
    %v307 = vadd.f32 %v268, %v298
    %v308 = vadd.f32 %v269, %v298
    %v309 = vadd.f32 %v270, %v298
    %v310 = vadd.f32 %v271, %v298
    %v311 = vadd.f32 %v272, %v298
    %v312 = vadd.f32 %v273, %v298
    %v313 = vadd.f32 %v274, %v298
    %v314 = vadd.f32 %v275, %v298
    %v315 = vadd.f32 %v276, %v298
    %v316 = vadd.f32 %v277, %v298
    %v317 = vadd.f32 %v278, %v298
    %v318 = vadd.f32 %v279, %v298
    %v319 = vadd.f32 %v280, %v298
    %v320 = vadd.f32 %v281, %v298
    %v321 = vadd.f32 %v282, %v298
    %v322 = vadd.f32 %v283, %v298
    %v323 = vadd.f32 %v284, %v298
    %v324 = vadd.f32 %v285, %v298
    %v325 = vadd.f32 %v286, %v298
    %v326 = vadd.f32 %v287, %v298
    %v327 = vadd.f32 %v288, %v298
    %v328 = vadd.f32 %v289, %v298
    %v329 = vadd.f32 %v290, %v298
    %v330 = vadd.f32 %v291, %v298
    %v331 = vadd.f32 %v292, %v298
    %v332 = vld [vmem:[#allocation14] sm:$0x1]
    %v334 = vlaneseq
    %v335 = vshrl.u32 %v334, 7
    %v336 = vsub.s32 0, %v335
    %v337 = vrot.slane %v332, %v336
    %v339 = vmul.f32 %v300, %v337
    %v340 = vmul.f32 %v301, %v337
    %v341 = vmul.f32 %v302, %v337
    %v342 = vmul.f32 %v303, %v337
    %v343 = vmul.f32 %v304, %v337
    %v344 = vmul.f32 %v305, %v337
    %v345 = vmul.f32 %v306, %v337
    %v346 = vmul.f32 %v307, %v337
    %v347 = vmul.f32 %v308, %v337
    %v348 = vmul.f32 %v309, %v337
    %v349 = vmul.f32 %v310, %v337
    %v350 = vmul.f32 %v311, %v337
    %v351 = vmul.f32 %v312, %v337
    %v352 = vmul.f32 %v313, %v337
    %v353 = vmul.f32 %v314, %v337
    %v354 = vmul.f32 %v315, %v337
    %v355 = vmul.f32 %v316, %v337
    %v356 = vmul.f32 %v317, %v337
    %v357 = vmul.f32 %v318, %v337
    %v358 = vmul.f32 %v319, %v337
    %v359 = vmul.f32 %v320, %v337
    %v360 = vmul.f32 %v321, %v337
    %v361 = vmul.f32 %v322, %v337
    %v362 = vmul.f32 %v323, %v337
    %v363 = vmul.f32 %v324, %v337
    %v364 = vmul.f32 %v325, %v337
    %v365 = vmul.f32 %v326, %v337
    %v366 = vmul.f32 %v327, %v337
    %v367 = vmul.f32 %v328, %v337
    %v368 = vmul.f32 %v329, %v337
    %v369 = vmul.f32 %v330, %v337
    %v370 = vmul.f32 %v331, %v337
    %vm371 = vcmask 261120
    %v372 = vsel %vm371, %v339, 0.0
    %373 = vadd.xlane.f32.xlu0 %v372
    %v374 = vpop.xlane.xlu0 %373
    %v375 = vsel %vm371, %v340, 0.0
    %376 = vadd.xlane.f32.xlu0 %v375
    %v377 = vpop.xlane.xlu0 %376
    %v378 = vsel %vm371, %v341, 0.0
    %379 = vadd.xlane.f32.xlu0 %v378
    %v380 = vpop.xlane.xlu0 %379
    %v381 = vsel %vm371, %v342, 0.0
    %382 = vadd.xlane.f32.xlu0 %v381
    %v383 = vpop.xlane.xlu0 %382
    %v384 = vsel %vm371, %v343, 0.0
    %385 = vadd.xlane.f32.xlu0 %v384
    %v386 = vpop.xlane.xlu0 %385
    %v387 = vsel %vm371, %v344, 0.0
    %388 = vadd.xlane.f32.xlu0 %v387
    %v389 = vpop.xlane.xlu0 %388
    %v390 = vsel %vm371, %v345, 0.0
    %391 = vadd.xlane.f32.xlu0 %v390
    %v392 = vpop.xlane.xlu0 %391
    %v393 = vsel %vm371, %v346, 0.0
    %394 = vadd.xlane.f32.xlu0 %v393
    %v395 = vpop.xlane.xlu0 %394
    %v396 = vsel %vm371, %v347, 0.0
    %397 = vadd.xlane.f32.xlu0 %v396
    %v398 = vpop.xlane.xlu0 %397
    %v399 = vsel %vm371, %v348, 0.0
    %400 = vadd.xlane.f32.xlu0 %v399
    %v401 = vpop.xlane.xlu0 %400
    %v402 = vsel %vm371, %v349, 0.0
    %403 = vadd.xlane.f32.xlu0 %v402
    %v404 = vpop.xlane.xlu0 %403
    %v405 = vsel %vm371, %v350, 0.0
    %406 = vadd.xlane.f32.xlu0 %v405
    %v407 = vpop.xlane.xlu0 %406
    %v408 = vsel %vm371, %v351, 0.0
    %409 = vadd.xlane.f32.xlu0 %v408
    %v410 = vpop.xlane.xlu0 %409
    %v411 = vsel %vm371, %v352, 0.0
    %412 = vadd.xlane.f32.xlu0 %v411
    %v413 = vpop.xlane.xlu0 %412
    %v414 = vsel %vm371, %v353, 0.0
    %415 = vadd.xlane.f32.xlu0 %v414
    %v416 = vpop.xlane.xlu0 %415
    %v417 = vsel %vm371, %v354, 0.0
    %418 = vadd.xlane.f32.xlu0 %v417
    %v419 = vpop.xlane.xlu0 %418
    %v420 = vsel %vm371, %v355, 0.0
    %421 = vadd.xlane.f32.xlu0 %v420
    %v422 = vpop.xlane.xlu0 %421
    %v423 = vsel %vm371, %v356, 0.0
    %424 = vadd.xlane.f32.xlu0 %v423
    %v425 = vpop.xlane.xlu0 %424
    %v426 = vsel %vm371, %v357, 0.0
    %427 = vadd.xlane.f32.xlu0 %v426
    %v428 = vpop.xlane.xlu0 %427
    %v429 = vsel %vm371, %v358, 0.0
    %430 = vadd.xlane.f32.xlu0 %v429
    %v431 = vpop.xlane.xlu0 %430
    %v432 = vsel %vm371, %v359, 0.0
    %433 = vadd.xlane.f32.xlu0 %v432
    %v434 = vpop.xlane.xlu0 %433
    %v435 = vsel %vm371, %v360, 0.0
    %436 = vadd.xlane.f32.xlu0 %v435
    %v437 = vpop.xlane.xlu0 %436
    %v438 = vsel %vm371, %v361, 0.0
    %439 = vadd.xlane.f32.xlu0 %v438
    %v440 = vpop.xlane.xlu0 %439
    %v441 = vsel %vm371, %v362, 0.0
    %442 = vadd.xlane.f32.xlu0 %v441
    %v443 = vpop.xlane.xlu0 %442
    %v444 = vsel %vm371, %v363, 0.0
    %445 = vadd.xlane.f32.xlu0 %v444
    %v446 = vpop.xlane.xlu0 %445
    %v447 = vsel %vm371, %v364, 0.0
    %448 = vadd.xlane.f32.xlu0 %v447
    %v449 = vpop.xlane.xlu0 %448
    %v450 = vsel %vm371, %v365, 0.0
    %451 = vadd.xlane.f32.xlu0 %v450
    %v452 = vpop.xlane.xlu0 %451
    %v453 = vsel %vm371, %v366, 0.0
    %454 = vadd.xlane.f32.xlu0 %v453
    %v455 = vpop.xlane.xlu0 %454
    %v456 = vsel %vm371, %v367, 0.0
    %457 = vadd.xlane.f32.xlu0 %v456
    %v458 = vpop.xlane.xlu0 %457
    %v459 = vsel %vm371, %v368, 0.0
    %460 = vadd.xlane.f32.xlu0 %v459
    %v461 = vpop.xlane.xlu0 %460
    %v462 = vsel %vm371, %v369, 0.0
    %463 = vadd.xlane.f32.xlu0 %v462
    %v464 = vpop.xlane.xlu0 %463
    %v465 = vsel %vm371, %v370, 0.0
    %466 = vadd.xlane.f32.xlu0 %v465
    %v467 = vpop.xlane.xlu0 %466
    %v468 = vld [vmem:[#allocation2] sm:$0x1]
    %v470 = vlaneseq
    %v471 = vshrl.u32 %v470, 7
    %v472 = vsub.s32 0, %v471
    %v473 = vrot.slane %v468, %v472
    %v475 = vadd.f32 %v374, %v473
    %v476 = vadd.f32 %v377, %v473
    %v477 = vadd.f32 %v380, %v473
    %v478 = vadd.f32 %v383, %v473
    %v479 = vadd.f32 %v386, %v473
    %v480 = vadd.f32 %v389, %v473
    %v481 = vadd.f32 %v392, %v473
    %v482 = vadd.f32 %v395, %v473
    %v483 = vadd.f32 %v398, %v473
    %v484 = vadd.f32 %v401, %v473
    %v485 = vadd.f32 %v404, %v473
    %v486 = vadd.f32 %v407, %v473
    %v487 = vadd.f32 %v410, %v473
    %v488 = vadd.f32 %v413, %v473
    %v489 = vadd.f32 %v416, %v473
    %v490 = vadd.f32 %v419, %v473
    %v491 = vadd.f32 %v422, %v473
    %v492 = vadd.f32 %v425, %v473
    %v493 = vadd.f32 %v428, %v473
    %v494 = vadd.f32 %v431, %v473
    %v495 = vadd.f32 %v434, %v473
    %v496 = vadd.f32 %v437, %v473
    %v497 = vadd.f32 %v440, %v473
    %v498 = vadd.f32 %v443, %v473
    %v499 = vadd.f32 %v446, %v473
    %v500 = vadd.f32 %v449, %v473
    %v501 = vadd.f32 %v452, %v473
    %v502 = vadd.f32 %v455, %v473
    %v503 = vadd.f32 %v458, %v473
    %v504 = vadd.f32 %v461, %v473
    %v505 = vadd.f32 %v464, %v473
    %v506 = vadd.f32 %v467, %v473
    %v507 = vld [vmem:[#allocation12] sm:$0x1]
    %v508 = vxor.u32 %v475, 2147483648
    %v509 = vxor.u32 %v476, 2147483648
    %v510 = vxor.u32 %v477, 2147483648
    %v511 = vxor.u32 %v478, 2147483648
    %v512 = vxor.u32 %v479, 2147483648
    %v513 = vxor.u32 %v480, 2147483648
    %v514 = vxor.u32 %v481, 2147483648
    %v515 = vxor.u32 %v482, 2147483648
    %v516 = vxor.u32 %v483, 2147483648
    %v517 = vxor.u32 %v484, 2147483648
    %v518 = vxor.u32 %v485, 2147483648
    %v519 = vxor.u32 %v486, 2147483648
    %v520 = vxor.u32 %v487, 2147483648
    %v521 = vxor.u32 %v488, 2147483648
    %v522 = vxor.u32 %v489, 2147483648
    %v523 = vxor.u32 %v490, 2147483648
    %v524 = vxor.u32 %v491, 2147483648
    %v525 = vxor.u32 %v492, 2147483648
    %v526 = vxor.u32 %v493, 2147483648
    %v527 = vxor.u32 %v494, 2147483648
    %v528 = vxor.u32 %v495, 2147483648
    %v529 = vxor.u32 %v496, 2147483648
    %v530 = vxor.u32 %v497, 2147483648
    %v531 = vxor.u32 %v498, 2147483648
    %v532 = vxor.u32 %v499, 2147483648
    %v533 = vxor.u32 %v500, 2147483648
    %v534 = vxor.u32 %v501, 2147483648
    %v535 = vxor.u32 %v502, 2147483648
    %v536 = vxor.u32 %v503, 2147483648
    %v537 = vxor.u32 %v504, 2147483648
    %v538 = vxor.u32 %v505, 2147483648
    %v539 = vxor.u32 %v506, 2147483648
    %v540 = vmul.f32 %v508, 1.442695
    %v541 = vpow.pop %v540
    %v542 = vmul.f32 %v509, 1.442695
    %v543 = vpow.pop %v542
    %v544 = vmul.f32 %v510, 1.442695
    %v545 = vpow.pop %v544
    %v546 = vmul.f32 %v511, 1.442695
    %v547 = vpow.pop %v546
    %v548 = vmul.f32 %v512, 1.442695
    %v549 = vpow.pop %v548
    %v550 = vmul.f32 %v513, 1.442695
    %v551 = vpow.pop %v550
    %v552 = vmul.f32 %v514, 1.442695
    %v553 = vpow.pop %v552
    %v554 = vmul.f32 %v515, 1.442695
    %v555 = vpow.pop %v554
    %v556 = vmul.f32 %v516, 1.442695
    %v557 = vpow.pop %v556
    %v558 = vmul.f32 %v517, 1.442695
    %v559 = vpow.pop %v558
    %v560 = vmul.f32 %v518, 1.442695
    %v561 = vpow.pop %v560
    %v562 = vmul.f32 %v519, 1.442695
    %v563 = vpow.pop %v562
    %v564 = vmul.f32 %v520, 1.442695
    %v565 = vpow.pop %v564
    %v566 = vmul.f32 %v521, 1.442695
    %v567 = vpow.pop %v566
    %v568 = vmul.f32 %v522, 1.442695
    %v569 = vpow.pop %v568
    %v570 = vmul.f32 %v523, 1.442695
    %v571 = vpow.pop %v570
    %v572 = vmul.f32 %v524, 1.442695
    %v573 = vpow.pop %v572
    %v574 = vmul.f32 %v525, 1.442695
    %v575 = vpow.pop %v574
    %v576 = vmul.f32 %v526, 1.442695
    %v577 = vpow.pop %v576
    %v578 = vmul.f32 %v527, 1.442695
    %v579 = vpow.pop %v578
    %v580 = vmul.f32 %v528, 1.442695
    %v581 = vpow.pop %v580
    %v582 = vmul.f32 %v529, 1.442695
    %v583 = vpow.pop %v582
    %v584 = vmul.f32 %v530, 1.442695
    %v585 = vpow.pop %v584
    %v586 = vmul.f32 %v531, 1.442695
    %v587 = vpow.pop %v586
    %v588 = vmul.f32 %v532, 1.442695
    %v589 = vpow.pop %v588
    %v590 = vmul.f32 %v533, 1.442695
    %v591 = vpow.pop %v590
    %v592 = vmul.f32 %v534, 1.442695
    %v593 = vpow.pop %v592
    %v594 = vmul.f32 %v535, 1.442695
    %v595 = vpow.pop %v594
    %v596 = vmul.f32 %v536, 1.442695
    %v597 = vpow.pop %v596
    %v598 = vmul.f32 %v537, 1.442695
    %v599 = vpow.pop %v598
    %v600 = vmul.f32 %v538, 1.442695
    %v601 = vpow.pop %v600
    %v602 = vmul.f32 %v539, 1.442695
    %v603 = vpow.pop %v602
    %v604 = vadd.f32 %v541, 1.0
    %v605 = vadd.f32 %v543, 1.0
    %v606 = vadd.f32 %v545, 1.0
    %v607 = vadd.f32 %v547, 1.0
    %v608 = vadd.f32 %v549, 1.0
    %v609 = vadd.f32 %v551, 1.0
    %v610 = vadd.f32 %v553, 1.0
    %v611 = vadd.f32 %v555, 1.0
    %v612 = vadd.f32 %v557, 1.0
    %v613 = vadd.f32 %v559, 1.0
    %v614 = vadd.f32 %v561, 1.0
    %v615 = vadd.f32 %v563, 1.0
    %v616 = vadd.f32 %v565, 1.0
    %v617 = vadd.f32 %v567, 1.0
    %v618 = vadd.f32 %v569, 1.0
    %v619 = vadd.f32 %v571, 1.0
    %v620 = vadd.f32 %v573, 1.0
    %v621 = vadd.f32 %v575, 1.0
    %v622 = vadd.f32 %v577, 1.0
    %v623 = vadd.f32 %v579, 1.0
    %v624 = vadd.f32 %v581, 1.0
    %v625 = vadd.f32 %v583, 1.0
    %v626 = vadd.f32 %v585, 1.0
    %v627 = vadd.f32 %v587, 1.0
    %v628 = vadd.f32 %v589, 1.0
    %v629 = vadd.f32 %v591, 1.0
    %v630 = vadd.f32 %v593, 1.0
    %v631 = vadd.f32 %v595, 1.0
    %v632 = vadd.f32 %v597, 1.0
    %v633 = vadd.f32 %v599, 1.0
    %v634 = vadd.f32 %v601, 1.0
    %v635 = vadd.f32 %v603, 1.0
    %v636 = vrcp.pop %v604
    %v637 = vmul.f32 1.0, %v636
    %v638 = vrcp.pop %v605
    %v639 = vmul.f32 1.0, %v638
    %v640 = vrcp.pop %v606
    %v641 = vmul.f32 1.0, %v640
    %v642 = vrcp.pop %v607
    %v643 = vmul.f32 1.0, %v642
    %v644 = vrcp.pop %v608
    %v645 = vmul.f32 1.0, %v644
    %v646 = vrcp.pop %v609
    %v647 = vmul.f32 1.0, %v646
    %v648 = vrcp.pop %v610
    %v649 = vmul.f32 1.0, %v648
    %v650 = vrcp.pop %v611
    %v651 = vmul.f32 1.0, %v650
    %v652 = vrcp.pop %v612
    %v653 = vmul.f32 1.0, %v652
    %v654 = vrcp.pop %v613
    %v655 = vmul.f32 1.0, %v654
    %v656 = vrcp.pop %v614
    %v657 = vmul.f32 1.0, %v656
    %v658 = vrcp.pop %v615
    %v659 = vmul.f32 1.0, %v658
    %v660 = vrcp.pop %v616
    %v661 = vmul.f32 1.0, %v660
    %v662 = vrcp.pop %v617
    %v663 = vmul.f32 1.0, %v662
    %v664 = vrcp.pop %v618
    %v665 = vmul.f32 1.0, %v664
    %v666 = vrcp.pop %v619
    %v667 = vmul.f32 1.0, %v666
    %v668 = vrcp.pop %v620
    %v669 = vmul.f32 1.0, %v668
    %v670 = vrcp.pop %v621
    %v671 = vmul.f32 1.0, %v670
    %v672 = vrcp.pop %v622
    %v673 = vmul.f32 1.0, %v672
    %v674 = vrcp.pop %v623
    %v675 = vmul.f32 1.0, %v674
    %v676 = vrcp.pop %v624
    %v677 = vmul.f32 1.0, %v676
    %v678 = vrcp.pop %v625
    %v679 = vmul.f32 1.0, %v678
    %v680 = vrcp.pop %v626
    %v681 = vmul.f32 1.0, %v680
    %v682 = vrcp.pop %v627
    %v683 = vmul.f32 1.0, %v682
    %v684 = vrcp.pop %v628
    %v685 = vmul.f32 1.0, %v684
    %v686 = vrcp.pop %v629
    %v687 = vmul.f32 1.0, %v686
    %v688 = vrcp.pop %v630
    %v689 = vmul.f32 1.0, %v688
    %v690 = vrcp.pop %v631
    %v691 = vmul.f32 1.0, %v690
    %v692 = vrcp.pop %v632
    %v693 = vmul.f32 1.0, %v692
    %v694 = vrcp.pop %v633
    %v695 = vmul.f32 1.0, %v694
    %v696 = vrcp.pop %v634
    %v697 = vmul.f32 1.0, %v696
    %v698 = vrcp.pop %v635
    %v699 = vmul.f32 1.0, %v698
    %v701 = vlaneseq
    %v702 = vshrl.u32 %v701, 7
    %v703 = vsub.s32 0, %v702
    %v704 = vrot.slane %v507, %v703
    %707 = vset.pattern.permute.xlu0 0
    %708 = vperm.xlu0 %707, %v637
    %v709 = vpop.permute.xlu0 %708
    %712 = vset.pattern.permute.xlu0 0
    %713 = vperm.xlu0 %712, %v639
    %v714 = vpop.permute.xlu0 %713
    %717 = vset.pattern.permute.xlu0 0
    %718 = vperm.xlu0 %717, %v641
    %v719 = vpop.permute.xlu0 %718
    %722 = vset.pattern.permute.xlu0 0
    %723 = vperm.xlu0 %722, %v643
    %v724 = vpop.permute.xlu0 %723
    %727 = vset.pattern.permute.xlu0 0
    %728 = vperm.xlu0 %727, %v645
    %v729 = vpop.permute.xlu0 %728
    %732 = vset.pattern.permute.xlu0 0
    %733 = vperm.xlu0 %732, %v647
    %v734 = vpop.permute.xlu0 %733
    %737 = vset.pattern.permute.xlu0 0
    %738 = vperm.xlu0 %737, %v649
    %v739 = vpop.permute.xlu0 %738
    %742 = vset.pattern.permute.xlu0 0
    %743 = vperm.xlu0 %742, %v651
    %v744 = vpop.permute.xlu0 %743
    %747 = vset.pattern.permute.xlu0 0
    %748 = vperm.xlu0 %747, %v653
    %v749 = vpop.permute.xlu0 %748
    %752 = vset.pattern.permute.xlu0 0
    %753 = vperm.xlu0 %752, %v655
    %v754 = vpop.permute.xlu0 %753
    %757 = vset.pattern.permute.xlu0 0
    %758 = vperm.xlu0 %757, %v657
    %v759 = vpop.permute.xlu0 %758
    %762 = vset.pattern.permute.xlu0 0
    %763 = vperm.xlu0 %762, %v659
    %v764 = vpop.permute.xlu0 %763
    %767 = vset.pattern.permute.xlu0 0
    %768 = vperm.xlu0 %767, %v661
    %v769 = vpop.permute.xlu0 %768
    %772 = vset.pattern.permute.xlu0 0
    %773 = vperm.xlu0 %772, %v663
    %v774 = vpop.permute.xlu0 %773
    %777 = vset.pattern.permute.xlu0 0
    %778 = vperm.xlu0 %777, %v665
    %v779 = vpop.permute.xlu0 %778
    %782 = vset.pattern.permute.xlu0 0
    %783 = vperm.xlu0 %782, %v667
    %v784 = vpop.permute.xlu0 %783
    %787 = vset.pattern.permute.xlu0 0
    %788 = vperm.xlu0 %787, %v669
    %v789 = vpop.permute.xlu0 %788
    %792 = vset.pattern.permute.xlu0 0
    %793 = vperm.xlu0 %792, %v671
    %v794 = vpop.permute.xlu0 %793
    %797 = vset.pattern.permute.xlu0 0
    %798 = vperm.xlu0 %797, %v673
    %v799 = vpop.permute.xlu0 %798
    %802 = vset.pattern.permute.xlu0 0
    %803 = vperm.xlu0 %802, %v675
    %v804 = vpop.permute.xlu0 %803
    %807 = vset.pattern.permute.xlu0 0
    %808 = vperm.xlu0 %807, %v677
    %v809 = vpop.permute.xlu0 %808
    %812 = vset.pattern.permute.xlu0 0
    %813 = vperm.xlu0 %812, %v679
    %v814 = vpop.permute.xlu0 %813
    %817 = vset.pattern.permute.xlu0 0
    %818 = vperm.xlu0 %817, %v681
    %v819 = vpop.permute.xlu0 %818
    %822 = vset.pattern.permute.xlu0 0
    %823 = vperm.xlu0 %822, %v683
    %v824 = vpop.permute.xlu0 %823
    %827 = vset.pattern.permute.xlu0 0
    %828 = vperm.xlu0 %827, %v685
    %v829 = vpop.permute.xlu0 %828
    %832 = vset.pattern.permute.xlu0 0
    %833 = vperm.xlu0 %832, %v687
    %v834 = vpop.permute.xlu0 %833
    %837 = vset.pattern.permute.xlu0 0
    %838 = vperm.xlu0 %837, %v689
    %v839 = vpop.permute.xlu0 %838
    %842 = vset.pattern.permute.xlu0 0
    %843 = vperm.xlu0 %842, %v691
    %v844 = vpop.permute.xlu0 %843
    %847 = vset.pattern.permute.xlu0 0
    %848 = vperm.xlu0 %847, %v693
    %v849 = vpop.permute.xlu0 %848
    %852 = vset.pattern.permute.xlu0 0
    %853 = vperm.xlu0 %852, %v695
    %v854 = vpop.permute.xlu0 %853
    %857 = vset.pattern.permute.xlu0 0
    %858 = vperm.xlu0 %857, %v697
    %v859 = vpop.permute.xlu0 %858
    %862 = vset.pattern.permute.xlu0 0
    %863 = vperm.xlu0 %862, %v699
    %v864 = vpop.permute.xlu0 %863
    %v866 = vadd.f32 %v704, %v709
    %v867 = vadd.f32 %v704, %v714
    %v868 = vadd.f32 %v704, %v719
    %v869 = vadd.f32 %v704, %v724
    %v870 = vadd.f32 %v704, %v729
    %v871 = vadd.f32 %v704, %v734
    %v872 = vadd.f32 %v704, %v739
    %v873 = vadd.f32 %v704, %v744
    %v874 = vadd.f32 %v704, %v749
    %v875 = vadd.f32 %v704, %v754
    %v876 = vadd.f32 %v704, %v759
    %v877 = vadd.f32 %v704, %v764
    %v878 = vadd.f32 %v704, %v769
    %v879 = vadd.f32 %v704, %v774
    %v880 = vadd.f32 %v704, %v779
    %v881 = vadd.f32 %v704, %v784
    %v882 = vadd.f32 %v704, %v789
    %v883 = vadd.f32 %v704, %v794
    %v884 = vadd.f32 %v704, %v799
    %v885 = vadd.f32 %v704, %v804
    %v886 = vadd.f32 %v704, %v809
    %v887 = vadd.f32 %v704, %v814
    %v888 = vadd.f32 %v704, %v819
    %v889 = vadd.f32 %v704, %v824
    %v890 = vadd.f32 %v704, %v829
    %v891 = vadd.f32 %v704, %v834
    %v892 = vadd.f32 %v704, %v839
    %v893 = vadd.f32 %v704, %v844
    %v894 = vadd.f32 %v704, %v849
    %v895 = vadd.f32 %v704, %v854
    %v896 = vadd.f32 %v704, %v859
    %v897 = vadd.f32 %v704, %v864
    %v898 = vmul.f32 %v300, %v866
    %v899 = vmul.f32 %v301, %v867
    %v900 = vmul.f32 %v302, %v868
    %v901 = vmul.f32 %v303, %v869
    %v902 = vmul.f32 %v304, %v870
    %v903 = vmul.f32 %v305, %v871
    %v904 = vmul.f32 %v306, %v872
    %v905 = vmul.f32 %v307, %v873
    %v906 = vmul.f32 %v308, %v874
    %v907 = vmul.f32 %v309, %v875
    %v908 = vmul.f32 %v310, %v876
    %v909 = vmul.f32 %v311, %v877
    %v910 = vmul.f32 %v312, %v878
    %v911 = vmul.f32 %v313, %v879
    %v912 = vmul.f32 %v314, %v880
    %v913 = vmul.f32 %v315, %v881
    %v914 = vmul.f32 %v316, %v882
    %v915 = vmul.f32 %v317, %v883
    %v916 = vmul.f32 %v318, %v884
    %v917 = vmul.f32 %v319, %v885
    %v918 = vmul.f32 %v320, %v886
    %v919 = vmul.f32 %v321, %v887
    %v920 = vmul.f32 %v322, %v888
    %v921 = vmul.f32 %v323, %v889
    %v922 = vmul.f32 %v324, %v890
    %v923 = vmul.f32 %v325, %v891
    %v924 = vmul.f32 %v326, %v892
    %v925 = vmul.f32 %v327, %v893
    %v926 = vmul.f32 %v328, %v894
    %v927 = vmul.f32 %v329, %v895
    %v928 = vmul.f32 %v330, %v896
    %v929 = vmul.f32 %v331, %v897
    %v930 = vld [vmem:[#allocation6] sm:$0xff]
    %v931 = vld [vmem:[#allocation6 + $0x8] sm:$0xff]
    %v932 = vld [vmem:[#allocation6 + $0x10] sm:$0xff]
    %v933 = vld [vmem:[#allocation6 + $0x18] sm:$0xff]
    %v934 = vld [vmem:[#allocation6 + $0x20] sm:$0xff]
    %v935 = vld [vmem:[#allocation6 + $0x28] sm:$0xff]
    %v936 = vld [vmem:[#allocation6 + $0x30] sm:$0xff]
    %v937 = vld [vmem:[#allocation6 + $0x38] sm:$0xff]
    %v938 = vld [vmem:[#allocation6 + $0x40] sm:$0xff]
    %v939 = vld [vmem:[#allocation6 + $0x48] sm:$0xff]
    %v940 = vld [vmem:[#allocation6 + $0x50] sm:$0xff]
    %v941 = vld [vmem:[#allocation6 + $0x58] sm:$0xff]
    %v942 = vld [vmem:[#allocation6 + $0x60] sm:$0xff]
    %v943 = vld [vmem:[#allocation6 + $0x68] sm:$0xff]
    %v944 = vld [vmem:[#allocation6 + $0x70] sm:$0xff]
    %v945 = vld [vmem:[#allocation6 + $0x78] sm:$0xff]
    %v946 = vld [vmem:[#allocation6 + $0x80] sm:$0xff]
    %v947 = vld [vmem:[#allocation6 + $0x88] sm:$0xff]
    %v948 = vld [vmem:[#allocation6 + $0x90] sm:$0xff]
    %v949 = vld [vmem:[#allocation6 + $0x98] sm:$0xff]
    %v950 = vld [vmem:[#allocation6 + $0xa0] sm:$0xff]
    %v951 = vld [vmem:[#allocation6 + $0xa8] sm:$0xff]
    %v952 = vld [vmem:[#allocation6 + $0xb0] sm:$0xff]
    %v953 = vld [vmem:[#allocation6 + $0xb8] sm:$0xff]
    %v954 = vld [vmem:[#allocation6 + $0xc0] sm:$0xff]
    %v955 = vld [vmem:[#allocation6 + $0xc8] sm:$0xff]
    %v956 = vld [vmem:[#allocation6 + $0xd0] sm:$0xff]
    %v957 = vld [vmem:[#allocation6 + $0xd8] sm:$0xff]
    %v958 = vld [vmem:[#allocation6 + $0xe0] sm:$0xff]
    %v959 = vld [vmem:[#allocation6 + $0xe8] sm:$0xff]
    %v960 = vld [vmem:[#allocation6 + $0xf0] sm:$0xff]
    %v961 = vld [vmem:[#allocation6 + $0xf8] sm:$0xff]
    %v962 = vadd.f32 %v898, %v930
    %v963 = vadd.f32 %v899, %v931
    %v964 = vadd.f32 %v900, %v932
    %v965 = vadd.f32 %v901, %v933
    %v966 = vadd.f32 %v902, %v934
    %v967 = vadd.f32 %v903, %v935
    %v968 = vadd.f32 %v904, %v936
    %v969 = vadd.f32 %v905, %v937
    %v970 = vadd.f32 %v906, %v938
    %v971 = vadd.f32 %v907, %v939
    %v972 = vadd.f32 %v908, %v940
    %v973 = vadd.f32 %v909, %v941
    %v974 = vadd.f32 %v910, %v942
    %v975 = vadd.f32 %v911, %v943
    %v976 = vadd.f32 %v912, %v944
    %v977 = vadd.f32 %v913, %v945
    %v978 = vadd.f32 %v914, %v946
    %v979 = vadd.f32 %v915, %v947
    %v980 = vadd.f32 %v916, %v948
    %v981 = vadd.f32 %v917, %v949
    %v982 = vadd.f32 %v918, %v950
    %v983 = vadd.f32 %v919, %v951
    %v984 = vadd.f32 %v920, %v952
    %v985 = vadd.f32 %v921, %v953
    %v986 = vadd.f32 %v922, %v954
    %v987 = vadd.f32 %v923, %v955
    %v988 = vadd.f32 %v924, %v956
    %v989 = vadd.f32 %v925, %v957
    %v990 = vadd.f32 %v926, %v958
    %v991 = vadd.f32 %v927, %v959
    %v992 = vadd.f32 %v928, %v960
    %v993 = vadd.f32 %v929, %v961
    %v994 = vld [vmem:[#allocation15] sm:$0xff]
    %v995 = vld [vmem:[#allocation15 + $0x8] sm:$0xff]
    %v996 = vld [vmem:[#allocation15 + $0x10] sm:$0xff]
    %v997 = vld [vmem:[#allocation15 + $0x18] sm:$0xff]
    %v998 = vld [vmem:[#allocation17] sm:$0x1]
    %v1000 = vlaneseq
    %v1001 = vshrl.u32 %v1000, 7
    %v1002 = vsub.s32 0, %v1001
    %v1003 = vrot.slane %v998, %v1002
    %v1006 = vsel %vm371, %v962, 0
    %v1009 = vsel %vm371, %v963, 0
    %v1012 = vsel %vm371, %v964, 0
    %v1015 = vsel %vm371, %v965, 0
    %v1018 = vsel %vm371, %v966, 0
    %v1021 = vsel %vm371, %v967, 0
    %v1024 = vsel %vm371, %v968, 0
    %v1027 = vsel %vm371, %v969, 0
    %v1030 = vsel %vm371, %v970, 0
    %v1033 = vsel %vm371, %v971, 0
    %v1036 = vsel %vm371, %v972, 0
    %v1039 = vsel %vm371, %v973, 0
    %v1042 = vsel %vm371, %v974, 0
    %v1045 = vsel %vm371, %v975, 0
    %v1048 = vsel %vm371, %v976, 0
    %v1051 = vsel %vm371, %v977, 0
    %v1054 = vsel %vm371, %v978, 0
    %v1057 = vsel %vm371, %v979, 0
    %v1060 = vsel %vm371, %v980, 0
    %v1063 = vsel %vm371, %v981, 0
    %v1066 = vsel %vm371, %v982, 0
    %v1069 = vsel %vm371, %v983, 0
    %v1072 = vsel %vm371, %v984, 0
    %v1075 = vsel %vm371, %v985, 0
    %v1078 = vsel %vm371, %v986, 0
    %v1081 = vsel %vm371, %v987, 0
    %v1084 = vsel %vm371, %v988, 0
    %v1087 = vsel %vm371, %v989, 0
    %v1090 = vsel %vm371, %v990, 0
    %v1093 = vsel %vm371, %v991, 0
    %v1096 = vsel %vm371, %v992, 0
    %v1099 = vsel %vm371, %v993, 0
    %1101 = vmatprep.subr.mxu0 0.0
    %1102 = vmatpush1.msra.mxu0 %v994
    %1103 = vmatprep.subr.mxu0 0.0
    %1104 = vmatpush1.msra.mxu0 %v995
    %1105 = vmatprep.subr.mxu0 0.0
    %1106 = vmatpush1.msra.mxu0 %v996
    %1107 = vmatprep.subr.mxu0 0.0
    %1108 = vmatpush1.msra.mxu0 %v997
    %1109 = vmatprep.subr.mxu0 0.0
    %1110 = vmatpush1.msra.mxu0 0.0
    %1111 = vmatprep.subr.mxu0 0.0
    %1112 = vmatpush1.msra.mxu0 0.0
    %1113 = vmatprep.subr.mxu0 0.0
    %1114 = vmatpush1.msra.mxu0 0.0
    %1115 = vmatprep.subr.mxu0 0.0
    %1116 = vmatpush1.msra.mxu0 0.0
    %1117 = vmatprep.subr.mxu0 0.0
    %1118 = vmatpush1.msra.mxu0 0.0
    %1119 = vmatprep.subr.mxu0 0.0
    %1120 = vmatpush1.msra.mxu0 0.0
    %1121 = vmatprep.subr.mxu0 0.0
    %1122 = vmatpush1.msra.mxu0 0.0
    %1123 = vmatprep.subr.mxu0 0.0
    %1124 = vmatpush1.msra.mxu0 0.0
    %1125 = vmatprep.subr.mxu0 0.0
    %1126 = vmatpush1.msra.mxu0 0.0
    %1127 = vmatprep.subr.mxu0 0.0
    %1128 = vmatpush1.msra.mxu0 0.0
    %1129 = vmatprep.subr.mxu0 0.0
    %1130 = vmatpush1.msra.mxu0 0.0
    %1131 = vmatprep.subr.mxu0 0.0
    %1132 = vmatpush1.msra.mxu0 0.0
    %1133 = vmatprep.subr.mxu0 0.0
    %1134 = vmatpush1.msra.mxu0 0.0
    %1135 = vmatprep.subr.mxu0 0.0
    %1136 = vmatpush1.msra.mxu0 0.0
    %1137 = vmatprep.subr.mxu0 0.0
    %1138 = vmatpush1.msra.mxu0 0.0
    %1139 = vmatprep.subr.mxu0 0.0
    %1140 = vmatpush1.msra.mxu0 0.0
    %1141 = vmatprep.subr.mxu0 0.0
    %1142 = vmatpush1.msra.mxu0 0.0
    %1143 = vmatprep.subr.mxu0 0.0
    %1144 = vmatpush1.msra.mxu0 0.0
    %1145 = vmatprep.subr.mxu0 0.0
    %1146 = vmatpush1.msra.mxu0 0.0
    %1147 = vmatprep.subr.mxu0 0.0
    %1148 = vmatpush1.msra.mxu0 0.0
    %1149 = vmatprep.subr.mxu0 0.0
    %1150 = vmatpush1.msra.mxu0 0.0
    %1151 = vmatprep.subr.mxu0 0.0
    %1152 = vmatpush1.msra.mxu0 0.0
    %1153 = vmatprep.subr.mxu0 0.0
    %1154 = vmatpush1.msra.mxu0 0.0
    %1155 = vmatprep.subr.mxu0 0.0
    %1156 = vmatpush1.msra.mxu0 0.0
    %1157 = vmatprep.subr.mxu0 0.0
    %1158 = vmatpush1.msra.mxu0 0.0
    %1159 = vmatprep.subr.mxu0 0.0
    %1160 = vmatpush1.msra.mxu0 0.0
    %1161 = vmatprep.subr.mxu0 0.0
    %1162 = vmatpush1.msra.mxu0 0.0
    %1163 = vmatprep.subr.mxu0 0.0
    %1164 = vmatpush1.msra.mxu0 0.0
    %1165 = vmatprep.mubr.f32.mxu0 0.0
    %1166 = vmatmul.mubr.f32.gmra.mrb[0].mxu0 %v1006
    %v1167 = vpop.f32.mrb[0].mxu0
    %v1168 = vadd.f32 %v1003, %v1167
    %v1169 = vpop.f32.mrb[0].mxu0
    %1170 = vmatprep.mubr.f32.mxu0 0.0
    %1171 = vmatmul.mubr.f32.gmra.mrb[0].mxu0 %v1009
    %v1172 = vpop.f32.mrb[0].mxu0
    %v1173 = vadd.f32 %v1003, %v1172
    %v1174 = vpop.f32.mrb[0].mxu0
    %1175 = vmatprep.mubr.f32.mxu0 0.0
    %1176 = vmatmul.mubr.f32.gmra.mrb[0].mxu0 %v1012
    %v1177 = vpop.f32.mrb[0].mxu0
    %v1178 = vadd.f32 %v1003, %v1177
    %v1179 = vpop.f32.mrb[0].mxu0
    %1180 = vmatprep.mubr.f32.mxu0 0.0
    %1181 = vmatmul.mubr.f32.gmra.mrb[0].mxu0 %v1015
    %v1182 = vpop.f32.mrb[0].mxu0
    %v1183 = vadd.f32 %v1003, %v1182
    %v1184 = vpop.f32.mrb[0].mxu0
    %1185 = vmatprep.mubr.f32.mxu0 0.0
    %1186 = vmatmul.mubr.f32.gmra.mrb[0].mxu0 %v1018
    %v1187 = vpop.f32.mrb[0].mxu0
    %v1188 = vadd.f32 %v1003, %v1187
    %v1189 = vpop.f32.mrb[0].mxu0
    %1190 = vmatprep.mubr.f32.mxu0 0.0
    %1191 = vmatmul.mubr.f32.gmra.mrb[0].mxu0 %v1021
    %v1192 = vpop.f32.mrb[0].mxu0
    %v1193 = vadd.f32 %v1003, %v1192
    %v1194 = vpop.f32.mrb[0].mxu0
    %1195 = vmatprep.mubr.f32.mxu0 0.0
    %1196 = vmatmul.mubr.f32.gmra.mrb[0].mxu0 %v1024
    %v1197 = vpop.f32.mrb[0].mxu0
    %v1198 = vadd.f32 %v1003, %v1197
    %v1199 = vpop.f32.mrb[0].mxu0
    %1200 = vmatprep.mubr.f32.mxu0 0.0
    %1201 = vmatmul.mubr.f32.gmra.mrb[0].mxu0 %v1027
    %v1202 = vpop.f32.mrb[0].mxu0
    %v1203 = vadd.f32 %v1003, %v1202
    %v1204 = vpop.f32.mrb[0].mxu0
    %1205 = vmatprep.mubr.f32.mxu0 0.0
    %1206 = vmatmul.mubr.f32.gmra.mrb[0].mxu0 %v1030
    %v1207 = vpop.f32.mrb[0].mxu0
    %v1208 = vadd.f32 %v1003, %v1207
    %v1209 = vpop.f32.mrb[0].mxu0
    %1210 = vmatprep.mubr.f32.mxu0 0.0
    %1211 = vmatmul.mubr.f32.gmra.mrb[0].mxu0 %v1033
    %v1212 = vpop.f32.mrb[0].mxu0
    %v1213 = vadd.f32 %v1003, %v1212
    %v1214 = vpop.f32.mrb[0].mxu0
    %1215 = vmatprep.mubr.f32.mxu0 0.0
    %1216 = vmatmul.mubr.f32.gmra.mrb[0].mxu0 %v1036
    %v1217 = vpop.f32.mrb[0].mxu0
    %v1218 = vadd.f32 %v1003, %v1217
    %v1219 = vpop.f32.mrb[0].mxu0
    %1220 = vmatprep.mubr.f32.mxu0 0.0
    %1221 = vmatmul.mubr.f32.gmra.mrb[0].mxu0 %v1039
    %v1222 = vpop.f32.mrb[0].mxu0
    %v1223 = vadd.f32 %v1003, %v1222
    %v1224 = vpop.f32.mrb[0].mxu0
    %1225 = vmatprep.mubr.f32.mxu0 0.0
    %1226 = vmatmul.mubr.f32.gmra.mrb[0].mxu0 %v1042
    %v1227 = vpop.f32.mrb[0].mxu0
    %v1228 = vadd.f32 %v1003, %v1227
    %v1229 = vpop.f32.mrb[0].mxu0
    %1230 = vmatprep.mubr.f32.mxu0 0.0
    %1231 = vmatmul.mubr.f32.gmra.mrb[0].mxu0 %v1045
    %v1232 = vpop.f32.mrb[0].mxu0
    %v1233 = vadd.f32 %v1003, %v1232
    %v1234 = vpop.f32.mrb[0].mxu0
    %1235 = vmatprep.mubr.f32.mxu0 0.0
    %1236 = vmatmul.mubr.f32.gmra.mrb[0].mxu0 %v1048
    %v1237 = vpop.f32.mrb[0].mxu0
    %v1238 = vadd.f32 %v1003, %v1237
    %v1239 = vpop.f32.mrb[0].mxu0
    %1240 = vmatprep.mubr.f32.mxu0 0.0
    %1241 = vmatmul.mubr.f32.gmra.mrb[0].mxu0 %v1051
    %v1242 = vpop.f32.mrb[0].mxu0
    %v1243 = vadd.f32 %v1003, %v1242
    %v1244 = vpop.f32.mrb[0].mxu0
    %1245 = vmatprep.mubr.f32.mxu0 0.0
    %1246 = vmatmul.mubr.f32.gmra.mrb[0].mxu0 %v1054
    %v1247 = vpop.f32.mrb[0].mxu0
    %v1248 = vadd.f32 %v1003, %v1247
    %v1249 = vpop.f32.mrb[0].mxu0
    %1250 = vmatprep.mubr.f32.mxu0 0.0
    %1251 = vmatmul.mubr.f32.gmra.mrb[0].mxu0 %v1057
    %v1252 = vpop.f32.mrb[0].mxu0
    %v1253 = vadd.f32 %v1003, %v1252
    %v1254 = vpop.f32.mrb[0].mxu0
    %1255 = vmatprep.mubr.f32.mxu0 0.0
    %1256 = vmatmul.mubr.f32.gmra.mrb[0].mxu0 %v1060
    %v1257 = vpop.f32.mrb[0].mxu0
    %v1258 = vadd.f32 %v1003, %v1257
    %v1259 = vpop.f32.mrb[0].mxu0
    %1260 = vmatprep.mubr.f32.mxu0 0.0
    %1261 = vmatmul.mubr.f32.gmra.mrb[0].mxu0 %v1063
    %v1262 = vpop.f32.mrb[0].mxu0
    %v1263 = vadd.f32 %v1003, %v1262
    %v1264 = vpop.f32.mrb[0].mxu0
    %1265 = vmatprep.mubr.f32.mxu0 0.0
    %1266 = vmatmul.mubr.f32.gmra.mrb[0].mxu0 %v1066
    %v1267 = vpop.f32.mrb[0].mxu0
    %v1268 = vadd.f32 %v1003, %v1267
    %v1269 = vpop.f32.mrb[0].mxu0
    %1270 = vmatprep.mubr.f32.mxu0 0.0
    %1271 = vmatmul.mubr.f32.gmra.mrb[0].mxu0 %v1069
    %v1272 = vpop.f32.mrb[0].mxu0
    %v1273 = vadd.f32 %v1003, %v1272
    %v1274 = vpop.f32.mrb[0].mxu0
    %1275 = vmatprep.mubr.f32.mxu0 0.0
    %1276 = vmatmul.mubr.f32.gmra.mrb[0].mxu0 %v1072
    %v1277 = vpop.f32.mrb[0].mxu0
    %v1278 = vadd.f32 %v1003, %v1277
    %v1279 = vpop.f32.mrb[0].mxu0
    %1280 = vmatprep.mubr.f32.mxu0 0.0
    %1281 = vmatmul.mubr.f32.gmra.mrb[0].mxu0 %v1075
    %v1282 = vpop.f32.mrb[0].mxu0
    %v1283 = vadd.f32 %v1003, %v1282
    %v1284 = vpop.f32.mrb[0].mxu0
    %1285 = vmatprep.mubr.f32.mxu0 0.0
    %1286 = vmatmul.mubr.f32.gmra.mrb[0].mxu0 %v1078
    %v1287 = vpop.f32.mrb[0].mxu0
    %v1288 = vadd.f32 %v1003, %v1287
    %v1289 = vpop.f32.mrb[0].mxu0
    %1290 = vmatprep.mubr.f32.mxu0 0.0
    %1291 = vmatmul.mubr.f32.gmra.mrb[0].mxu0 %v1081
    %v1292 = vpop.f32.mrb[0].mxu0
    %v1293 = vadd.f32 %v1003, %v1292
    %v1294 = vpop.f32.mrb[0].mxu0
    %1295 = vmatprep.mubr.f32.mxu0 0.0
    %1296 = vmatmul.mubr.f32.gmra.mrb[0].mxu0 %v1084
    %v1297 = vpop.f32.mrb[0].mxu0
    %v1298 = vadd.f32 %v1003, %v1297
    %v1299 = vpop.f32.mrb[0].mxu0
    %1300 = vmatprep.mubr.f32.mxu0 0.0
    %1301 = vmatmul.mubr.f32.gmra.mrb[0].mxu0 %v1087
    %v1302 = vpop.f32.mrb[0].mxu0
    %v1303 = vadd.f32 %v1003, %v1302
    %v1304 = vpop.f32.mrb[0].mxu0
    %1305 = vmatprep.mubr.f32.mxu0 0.0
    %1306 = vmatmul.mubr.f32.gmra.mrb[0].mxu0 %v1090
    %v1307 = vpop.f32.mrb[0].mxu0
    %v1308 = vadd.f32 %v1003, %v1307
    %v1309 = vpop.f32.mrb[0].mxu0
    %1310 = vmatprep.mubr.f32.mxu0 0.0
    %1311 = vmatmul.mubr.f32.gmra.mrb[0].mxu0 %v1093
    %v1312 = vpop.f32.mrb[0].mxu0
    %v1313 = vadd.f32 %v1003, %v1312
    %v1314 = vpop.f32.mrb[0].mxu0
    %1315 = vmatprep.mubr.f32.mxu0 0.0
    %1316 = vmatmul.mubr.f32.gmra.mrb[0].mxu0 %v1096
    %v1317 = vpop.f32.mrb[0].mxu0
    %v1318 = vadd.f32 %v1003, %v1317
    %v1319 = vpop.f32.mrb[0].mxu0
    %1320 = vmatprep.mubr.f32.mxu0 0.0
    %1321 = vmatmul.mubr.f32.gmra.mrb[0].mxu0 %v1099
    %v1322 = vpop.f32.mrb[0].mxu0
    %v1323 = vadd.f32 %v1003, %v1322
    %v1324 = vpop.f32.mrb[0].mxu0
    %1325 = vdwg.mxu0
    %vm1326 = vcmask 850944
    %1327 = vst.msk [vmem:[#allocation18] sm:$0xff] %vm1326, %v1168
    %1328 = vst.msk [vmem:[#allocation18 + $0x8] sm:$0xff] %vm1326, %v1173
    %1329 = vst.msk [vmem:[#allocation18 + $0x10] sm:$0xff] %vm1326, %v1178
    %1330 = vst.msk [vmem:[#allocation18 + $0x18] sm:$0xff] %vm1326, %v1183
    %1331 = vst.msk [vmem:[#allocation18 + $0x20] sm:$0xff] %vm1326, %v1188
    %1332 = vst.msk [vmem:[#allocation18 + $0x28] sm:$0xff] %vm1326, %v1193
    %1333 = vst.msk [vmem:[#allocation18 + $0x30] sm:$0xff] %vm1326, %v1198
    %1334 = vst.msk [vmem:[#allocation18 + $0x38] sm:$0xff] %vm1326, %v1203
    %1335 = vst.msk [vmem:[#allocation18 + $0x40] sm:$0xff] %vm1326, %v1208
    %1336 = vst.msk [vmem:[#allocation18 + $0x48] sm:$0xff] %vm1326, %v1213
    %1337 = vst.msk [vmem:[#allocation18 + $0x50] sm:$0xff] %vm1326, %v1218
    %1338 = vst.msk [vmem:[#allocation18 + $0x58] sm:$0xff] %vm1326, %v1223
    %1339 = vst.msk [vmem:[#allocation18 + $0x60] sm:$0xff] %vm1326, %v1228
    %1340 = vst.msk [vmem:[#allocation18 + $0x68] sm:$0xff] %vm1326, %v1233
    %1341 = vst.msk [vmem:[#allocation18 + $0x70] sm:$0xff] %vm1326, %v1238
    %1342 = vst.msk [vmem:[#allocation18 + $0x78] sm:$0xff] %vm1326, %v1243
    %1343 = vst.msk [vmem:[#allocation18 + $0x80] sm:$0xff] %vm1326, %v1248
    %1344 = vst.msk [vmem:[#allocation18 + $0x88] sm:$0xff] %vm1326, %v1253
    %1345 = vst.msk [vmem:[#allocation18 + $0x90] sm:$0xff] %vm1326, %v1258
    %1346 = vst.msk [vmem:[#allocation18 + $0x98] sm:$0xff] %vm1326, %v1263
    %1347 = vst.msk [vmem:[#allocation18 + $0xa0] sm:$0xff] %vm1326, %v1268
    %1348 = vst.msk [vmem:[#allocation18 + $0xa8] sm:$0xff] %vm1326, %v1273
    %1349 = vst.msk [vmem:[#allocation18 + $0xb0] sm:$0xff] %vm1326, %v1278
    %1350 = vst.msk [vmem:[#allocation18 + $0xb8] sm:$0xff] %vm1326, %v1283
    %1351 = vst.msk [vmem:[#allocation18 + $0xc0] sm:$0xff] %vm1326, %v1288
    %1352 = vst.msk [vmem:[#allocation18 + $0xc8] sm:$0xff] %vm1326, %v1293
    %1353 = vst.msk [vmem:[#allocation18 + $0xd0] sm:$0xff] %vm1326, %v1298
    %1354 = vst.msk [vmem:[#allocation18 + $0xd8] sm:$0xff] %vm1326, %v1303
    %1355 = vst.msk [vmem:[#allocation18 + $0xe0] sm:$0xff] %vm1326, %v1308
    %1356 = vst.msk [vmem:[#allocation18 + $0xe8] sm:$0xff] %vm1326, %v1313
    %1357 = vst.msk [vmem:[#allocation18 + $0xf0] sm:$0xff] %vm1326, %v1318
    %1358 = vst.msk [vmem:[#allocation18 + $0xf8] sm:$0xff] %vm1326, %v1323
    // Predicated region
    $region78: #{oracle_forward.67} parent=1 // pred_check
      _
    $region79: #{oracle_forward.67} parent=1 // pred_check_branch
      %1360 = sbr.rel (0) target = $region81
    $region80: #{oracle_forward.67} parent=1 // pred_region
      %s1362 = ssub.s32 4096, 4096
      %1363 = vsyncadd [#allocation5], %s1362
      %s1364 = sshll.u32 [#allocation18], 4
      %s1365 = int_to_ptr.vmem [resolvable:$true] %s1364
      %1370 = dma.vmem_to_hbm [thread:$0]  %s1365, 4096, %s10, [#allocation5], 128, 128, 8
    $region81: #{oracle_forward.67} parent=1 // pred_fallthru
      _
    // Predicated region
    $region82: #{oracle_forward.67} parent=1 // pred_check
      _
    $region83: #{oracle_forward.67} parent=1 // pred_check_branch
      %1372 = sbr.rel (0) target = $region85
    $region84: #{oracle_forward.67} parent=1 // pred_region
      %1373 = dma.done [#allocation5], 4096
    $region85: #{oracle_forward.67} parent=1 // pred_fallthru
      _
    %1374 = vsyncpa [#allocation4], 1
    %1375 = vsyncpa [#allocation7], 1
    %1376 = vsyncpa [#allocation10], 1
    %1377 = vsyncpa [#allocation13], 1
    %1378 = vsyncpa [#allocation16], 1
    %1379 = vsyncpa [#allocation5], 1

</llo_original>
